<compile_context>
chip_gen: v7x
topology: tpu7x:2x2x1
jax: 0.10.0
libtpu: 0.0.40
codegen_flags: <defaults>
</compile_context>

<pallas_src>
import functools

import jax
import jax.numpy as jnp
from jax import lax
from jax.experimental import pallas as pl
from jax.experimental.pallas import tpu as pltpu


# ----------------------------------------------------------------------------------
# Trace-time weight preparation (tiny tensors; pure folding / re-indexing).
# ----------------------------------------------------------------------------------

def _round8(n):
    return ((n + 7) // 8) * 8


def _fold_bn(w, b, bn, eps):
    """Fold an eval-mode BatchNorm2d into the preceding conv's weight / bias."""
    scale = (bn["g"] / jnp.sqrt(bn["v"] + eps)).astype(jnp.float32)
    w_f = w.astype(jnp.float32) * scale[:, None, None, None]
    b0 = jnp.zeros_like(bn["m"]) if b is None else b.astype(jnp.float32)
    b_f = (b0 - bn["m"]) * scale + bn["b"]
    return w_f, b_f.astype(jnp.float32)


def _im2col_w(w):
    """(Co, Ci, 3, 3) -> (Co, 9*Ci); tap-major / channel-minor, matching the kernel's im2col."""
    co, ci = w.shape[0], w.shape[1]
    return jnp.transpose(w.astype(jnp.float32), (0, 2, 3, 1)).reshape(co, 9 * ci)


def _poly_conv3x3_w(w, r):
    """Lift a 3x3 conv on the r-upscaled grid to an equivalent 3x3 conv on the polyphase
    (sub-pixel) planes of the low-res grid: (Co, Ci, 3, 3) -> (Co*r*r, Ci*r*r, 3, 3).
    Polyphase channel order is c*r*r + i*r + j, identical to torch.nn.PixelShuffle."""
    co, ci = w.shape[0], w.shape[1]
    rr = r * r
    w = w.astype(jnp.float32)
    weff = jnp.zeros((co * rr, ci * rr, 3, 3), jnp.float32)
    for io in range(r):
        for jo in range(r):
            for a in (-1, 0, 1):
                for b in (-1, 0, 1):
                    ii = (io + a) % r
                    da = (io + a - ii) // r
                    jj = (jo + b) % r
                    db = (jo + b - jj) // r
                    weff = weff.at[io * r + jo::rr, ii * r + jj::rr,
                                   da + 1, db + 1].add(w[:, :, a + 1, b + 1])
    return weff


def _poly_conv1x1_w(w, r):
    """(Co, Ci, 1, 1) 1x1 conv on the upscaled grid -> (Co*r*r, Ci*r*r) polyphase matrix."""
    co, ci = w.shape[0], w.shape[1]
    rr = r * r
    m = jnp.zeros((co * rr, ci * rr), jnp.float32)
    for q in range(rr):
        m = m.at[q::rr, q::rr].set(w[:, :, 0, 0].astype(jnp.float32))
    return m


def _poly_bias(b, r):
    return jnp.repeat(b.astype(jnp.float32), r * r)


def _pad_oi(w, co_p, ci_p):
    """Zero-pad the out/in channel dims (first two axes) of a conv weight."""
    pad = [(0, co_p - w.shape[0]), (0, ci_p - w.shape[1])] + [(0, 0)] * (w.ndim - 2)
    return jnp.pad(w.astype(jnp.float32), pad)


def _pad_rows(b, co_p):
    return jnp.pad(b.astype(jnp.float32), ((0, co_p - b.shape[0]),))


def _center_tap_3x3(m):
    """(Co, Ci) matrix -> (Co, Ci, 3, 3) conv weight with the matrix on the center tap."""
    co, ci = m.shape
    w = jnp.zeros((co, ci, 3, 3), jnp.float32)
    return w.at[:, :, 1, 1].set(m.astype(jnp.float32))


def _fused_resblock_head(w1, b1, ws, bs, co_p, ci_p):
    """Stack conv1 (3x3, BN-folded) and the 1x1 shortcut (+BN, placed on the center tap)
    into one (2*co_p, 9*ci_p) matmul sharing the same im2col patches."""
    wf = jnp.concatenate([_im2col_w(_pad_oi(w1, co_p, ci_p)),
                          _im2col_w(_pad_oi(_center_tap_3x3(ws), co_p, ci_p))], axis=0)
    bf = jnp.concatenate([_pad_rows(b1, co_p), _pad_rows(bs, co_p)]).reshape(-1, 1)
    return wf, bf


def _build_masks(H, W, n_img):
    """(8, n_img*H*W) f32 tap-validity masks for the 8 non-center 3x3 taps, tiled per
    image, in the kernel's tap-iteration order (hoisted out of the kernel)."""
    pos = jnp.arange(H * W, dtype=jnp.int32)
    row, col = pos // W, pos % W
    rows = []
    for oy in (-1, 0, 1):
        for ox in (-1, 0, 1):
            if (oy, ox) == (0, 0):
                continue
            ok = ((row + oy >= 0) & (row + oy < H) &
                  (col + ox >= 0) & (col + ox < W))
            rows.append(ok.astype(jnp.float32))
    return jnp.tile(jnp.stack(rows, axis=0), (1, n_img))


# ----------------------------------------------------------------------------------
# The fused kernel: whole SPResNet forward for `images_per_step` images, (C, lanes) layout.
# ----------------------------------------------------------------------------------

def _spresnet_kernel(x_ref, mask_ref,
                     rb1_w1, rb1_b1, rb1_w2, rb1_b2,
                     up_w1, up_b1, up_w2, up_b2,
                     rb2_w1, rb2_b1, rb2_w2, rb2_b2,
                     o_ref, *, W, compute_dtype):
    f32 = jnp.float32
    masks = mask_ref[...]                                   # (8, lanes) f32, loaded once
    mask_rows = [masks[k:k + 1, :] for k in range(8)]       # shared by every conv

    def patches(v):
        # v: (C, lanes) f32.  im2col of the 9 taps of a 3x3 "same" conv: XLU lane
        # rotations + boundary masks (halo handled here; cross-image wrap of the batched
        # lane axis only lands on positions the masks already zero).  Mask multiplies stay
        # f32 (v5e has no bf16 VPU); each tap is cast once, right before the concat, so
        # the (9*C, lanes) buffer lives in the compute dtype.
        lanes = v.shape[1]
        taps, k = [], 0
        for oy in (-1, 0, 1):
            for ox in (-1, 0, 1):
                d = oy * W + ox
                if d == 0:
                    t = v
                else:
                    t = pltpu.roll(v, (-d) % lanes, axis=1) * mask_rows[k]
                    k += 1
                taps.append(t.astype(compute_dtype))
        return jnp.concatenate(taps, axis=0)                # (9*C, lanes), compute dtype

    def conv3x3(v, w_ref, b_ref, relu):
        y = jnp.dot(w_ref[...], patches(v), preferred_element_type=f32) + b_ref[...]
        return jnp.maximum(y, 0.0) if relu else y

    def resblock(v, w1_ref, b1_ref, w2_ref, b2_ref):
        # conv1(+BN) and the 1x1 shortcut(+BN) are fused into ONE (2*Co, 9*Ci) matmul.
        co = w1_ref.shape[0] // 2
        yz = jnp.dot(w1_ref[...], patches(v), preferred_element_type=f32) + b1_ref[...]
        y = jnp.maximum(yz[:co], 0.0)                        # conv1 + BN + ReLU
        sc = yz[co:]                                         # shortcut + BN
        return jnp.maximum(conv3x3(y, w2_ref, b2_ref, relu=False) + sc, 0.0)

    x = x_ref[0]                                             # (Cin_p, lanes) f32

    h = resblock(x, rb1_w1, rb1_b1, rb1_w2, rb1_b2)          # ResBlock 1 (low-res grid)
    v = conv3x3(h, up_w1, up_b1, relu=False)                 # UpSample conv1 -> polyphase planes
    u = conv3x3(v, up_w2, up_b2, relu=True)                  # UpSample conv2 + BN + ReLU (polyphase)
    out = resblock(u, rb2_w1, rb2_b1, rb2_w2, rb2_b2)        # ResBlock 2 (polyphase domain)

    o_ref[...] = out[None]


# ----------------------------------------------------------------------------------
# Public wrapper (NCHW in / NCHW out, like the PyTorch module).
# ----------------------------------------------------------------------------------

def _pick_images_per_step(n, hw, lane_budget=2048):
    b = max(1, min(n, lane_budget // max(hw, 1)))
    if n >= 2:
        b = min(b, n // 2)        # keep >= 2 grid steps so both v7x TensorCores get work
    b = max(b, 1)
    while n % b:
        b -= 1
    return b


def spresnet_forward(x_nchw, params, *, r, eps=1e-5, compute_dtype=jnp.bfloat16,
                     images_per_step=None):
    """Fused Pallas forward of SPResNet (BatchNorm in eval mode).  x: (N, Cin, H, W).
    compute_dtype is the MXU-operand dtype (f32 accumulation either way)."""
    N, cin, H, W = x_nchw.shape
    HW = H * W
    rr = r * r
    rb1, up, rb2 = params["rb1"], params["up"], params["rb2"]
    feat = rb1["w1"].shape[0]
    cout = rb2["w1"].shape[0]
    cout_rr = cout * rr

    cin_p, f_p = _round8(cin), _round8(feat)
    frr_p, cout_p = _round8(feat * rr), _round8(cout_rr)

    # ---- ResBlock1: fold BN; fuse the 1x1 shortcut into conv1's matmul rows ----
    w1, b1 = _fold_bn(rb1["w1"], None, rb1["bn1"], eps)
    ws, bs = _fold_bn(rb1["ws"], None, rb1["bns"], eps)
    rb1_w1, rb1_b1 = _fused_resblock_head(w1, b1, ws[:, :, 0, 0], bs, f_p, cin_p)
    w2, b2 = _fold_bn(rb1["w2"], None, rb1["bn2"], eps)
    rb1_w2, rb1_b2 = _im2col_w(_pad_oi(w2, f_p, f_p)), _pad_rows(b2, f_p).reshape(-1, 1)

    # ---- UpSample (conv2 + BN lifted to the polyphase / sub-pixel domain) ----
    up_w1 = _im2col_w(_pad_oi(up["w1"], frr_p, f_p))
    up_b1 = _pad_rows(up["b1"], frr_p).reshape(-1, 1)
    w2, b2 = _fold_bn(up["w2"], up["b2"], up["bn"], eps)
    up_w2 = _im2col_w(_pad_oi(_poly_conv3x3_w(w2, r), frr_p, frr_p))
    up_b2 = _pad_rows(_poly_bias(b2, r), frr_p).reshape(-1, 1)

    # ---- ResBlock2 (polyphase domain), shortcut fused as above ----
    w1, b1 = _fold_bn(rb2["w1"], None, rb2["bn1"], eps)
    ws, bs = _fold_bn(rb2["ws"], None, rb2["bns"], eps)
    rb2_w1, rb2_b1 = _fused_resblock_head(
        _poly_conv3x3_w(w1, r), _poly_bias(b1, r),
        _poly_conv1x1_w(ws, r), _poly_bias(bs, r), cout_p, frr_p)
    w2, b2 = _fold_bn(rb2["w2"], None, rb2["bn2"], eps)
    rb2_w2 = _im2col_w(_pad_oi(_poly_conv3x3_w(w2, r), cout_p, cout_p))
    rb2_b2 = _pad_rows(_poly_bias(b2, r), cout_p).reshape(-1, 1)

    # Matmul operands (weights) are pre-cast to the compute dtype at trace time; biases
    # stay f32 (added to the f32 accumulator).  No in-kernel weight casts remain.
    rb1_w1, rb1_w2, up_w1, up_w2, rb2_w1, rb2_w2 = (
        w.astype(compute_dtype) for w in (rb1_w1, rb1_w2, up_w1, up_w2, rb2_w1, rb2_w2))
    consts = [rb1_w1, rb1_b1, rb1_w2, rb1_b2,
              up_w1, up_b1, up_w2, up_b2,
              rb2_w1, rb2_b1, rb2_w2, rb2_b2]

    # ---- lane-batched input: fold `b_img` images into the lane axis per grid step ----
    b_img = images_per_step or _pick_images_per_step(N, HW)
    assert N % b_img == 0
    steps = N // b_img
    lanes = b_img * HW

    x = jnp.pad(x_nchw.astype(jnp.float32),
                ((0, 0), (0, cin_p - cin), (0, 0), (0, 0))).reshape(N, cin_p, HW)
    x = x.reshape(steps, b_img, cin_p, HW).transpose(0, 2, 1, 3).reshape(steps, cin_p, lanes)

    masks = _build_masks(H, W, b_img)                        # (8, lanes) f32, constant

    kernel = functools.partial(_spresnet_kernel, W=W, compute_dtype=compute_dtype)

    in_specs = [pl.BlockSpec((1, cin_p, lanes), lambda n: (n, 0, 0)),
                pl.BlockSpec(masks.shape, lambda n: (0, 0))]
    in_specs += [pl.BlockSpec(c.shape, lambda n: (0, 0)) for c in consts]

    out_poly = pl.pallas_call(
        kernel,
        out_shape=jax.ShapeDtypeStruct((steps, cout_p, lanes), jnp.float32),
        grid=(steps,),
        in_specs=in_specs,
        out_specs=pl.BlockSpec((1, cout_p, lanes), lambda n: (n, 0, 0)),
        compiler_params=pltpu.CompilerParams(
            dimension_semantics=("parallel",),
            vmem_limit_bytes=32 * 1024 * 1024),
    )(x, masks, *consts)

    # Un-batch lanes, drop channel padding, de-polyphase the tiny final output
    # (== the one remaining PixelShuffle), back to NCHW.
    out = out_poly.reshape(steps, cout_p, b_img, HW).transpose(0, 2, 1, 3).reshape(N, cout_p, HW)
    out = out[:, :cout_rr, :].reshape(N, cout, r, r, H, W)
    out = jnp.transpose(out, (0, 1, 4, 2, 5, 3)).reshape(N, cout, H * r, W * r)
    return out


# ----------------------------------------------------------------------------------
# Pure-JAX reference (mirrors the PyTorch module, BatchNorm in eval mode).
# ----------------------------------------------------------------------------------

def _ref_conv(x, w, b=None, pad=1):
    y = lax.conv_general_dilated(
        x.astype(jnp.float32), w.astype(jnp.float32), (1, 1), ((pad, pad), (pad, pad)),
        dimension_numbers=("NCHW", "OIHW", "NCHW"), precision=lax.Precision.HIGHEST)
    return y if b is None else y + b[None, :, None, None]


def _ref_bn(x, bn, eps):
    inv = bn["g"] / jnp.sqrt(bn["v"] + eps)
    return (x - bn["m"][None, :, None, None]) * inv[None, :, None, None] \
        + bn["b"][None, :, None, None]


def _ref_resblock(x, p, eps):
    y = jnp.maximum(_ref_bn(_ref_conv(x, p["w1"]), p["bn1"], eps), 0.0)
    y = _ref_bn(_ref_conv(y, p["w2"]), p["bn2"], eps)
    idn = _ref_bn(_ref_conv(x, p["ws"], pad=0), p["bns"], eps) if "ws" in p else x
    return jnp.maximum(y + idn, 0.0)


def _ref_pixel_shuffle(x, r):
    N, crr, H, W = x.shape
    c = crr // (r * r)
    x = x.reshape(N, c, r, r, H, W)
    return jnp.transpose(x, (0, 1, 4, 2, 5, 3)).reshape(N, c, H * r, W * r)


def spresnet_reference(x, params, *, r, eps=1e-5):
    x = _ref_resblock(x, params["rb1"], eps)
    up = params["up"]
    y = _ref_conv(x, up["w1"], up["b1"])
    y = _ref_pixel_shuffle(y, r)
    y = _ref_conv(y, up["w2"], up["b2"])
    y = jnp.maximum(_ref_bn(y, up["bn"], eps), 0.0)
    return _ref_resblock(y, params["rb2"], eps)


# ----------------------------------------------------------------------------------
# Deterministic example inputs / parameters.
# ----------------------------------------------------------------------------------

def _init_bn(key, c):
    k1, k2, k3, k4 = jax.random.split(key, 4)
    return {"g": 1.0 + 0.1 * jax.random.normal(k1, (c,), jnp.float32),
            "b": 0.1 * jax.random.normal(k2, (c,), jnp.float32),
            "m": 0.1 * jax.random.normal(k3, (c,), jnp.float32),
            "v": 0.5 + jax.random.uniform(k4, (c,), jnp.float32)}


def init_params(key, cin, feat, cout, r):
    ks = iter(jax.random.split(key, 24))

    def nrm(shape, s=0.2):
        return s * jax.random.normal(next(ks), shape, jnp.float32)

    rb1 = {"w1": nrm((feat, cin, 3, 3)), "bn1": _init_bn(next(ks), feat),
           "w2": nrm((feat, feat, 3, 3)), "bn2": _init_bn(next(ks), feat),
           "ws": nrm((feat, cin, 1, 1)), "bns": _init_bn(next(ks), feat)}
    up = {"w1": nrm((feat * r * r, feat, 3, 3)), "b1": nrm((feat * r * r,)),
          "w2": nrm((feat, feat, 3, 3)), "b2": nrm((feat,)),
          "bn": _init_bn(next(ks), feat)}
    rb2 = {"w1": nrm((cout, feat, 3, 3)), "bn1": _init_bn(next(ks), cout),
           "w2": nrm((cout, cout, 3, 3)), "bn2": _init_bn(next(ks), cout),
           "ws": nrm((cout, feat, 1, 1)), "bns": _init_bn(next(ks), cout)}
    return {"rb1": rb1, "up": up, "rb2": rb2}


if __name__ == "__main__":
    # SPResNet defaults: in_channels=3, out_channels=1, feature_size=5, num_ResBlock=1.
    # N=4 exercises both lane-batching (2 images/step) and >=2 grid steps (v7x megacore).
    N, CIN, FEAT, COUT, R, H, W = 4, 3, 5, 1, 2, 16, 16

    key = jax.random.PRNGKey(0)
    kx, kp = jax.random.split(key)
    x = jax.random.normal(kx, (N, CIN, H, W), dtype=jnp.float32)
    params = init_params(kp, CIN, FEAT, COUT, R)

    ref = jax.block_until_ready(spresnet_reference(x, params, r=R))

    # Structural correctness check: f32 compute path vs the pure-JAX reference.
    fwd_f32 = jax.jit(functools.partial(spresnet_forward, r=R, compute_dtype=jnp.float32))
    out_f32 = jax.block_until_ready(fwd_f32(x, params))
    assert out_f32.shape == (N, COUT, H * R, W * R), out_f32.shape
    err32 = float(jnp.max(jnp.abs(out_f32 - ref)))
    assert jnp.allclose(out_f32, ref, atol=2e-3, rtol=2e-3), err32

    # Fast path (default): bf16 matmul operands, f32 accumulation.  Looser tolerance only
    # accounts for bf16 operand quantization.
    fwd_bf16 = jax.jit(functools.partial(spresnet_forward, r=R, compute_dtype=jnp.bfloat16))
    out_bf16 = jax.block_until_ready(fwd_bf16(x, params))
    err16 = float(jnp.max(jnp.abs(out_bf16 - ref)))
    assert jnp.allclose(out_bf16, ref, atol=1.5e-1, rtol=1e-1), err16

    print("KERNEL_OK")
</pallas_src>

<mosaic_0001>
module attributes {stable_mosaic.version = 11 : i64} {
  func.func @_spresnet_kernel(%arg0: i32, %arg1: memref<1x8x512xf32, #tpu.memory_space<vmem>>, %arg2: memref<8x512xf32, #tpu.memory_space<vmem>>, %arg3: memref<16x72xf32, #tpu.memory_space<vmem>>, %arg4: memref<16x1xf32, #tpu.memory_space<vmem>>, %arg5: memref<8x72xf32, #tpu.memory_space<vmem>>, %arg6: memref<8x1xf32, #tpu.memory_space<vmem>>, %arg7: memref<24x72xf32, #tpu.memory_space<vmem>>, %arg8: memref<24x1xf32, #tpu.memory_space<vmem>>, %arg9: memref<24x216xf32, #tpu.memory_space<vmem>>, %arg10: memref<24x1xf32, #tpu.memory_space<vmem>>, %arg11: memref<16x216xf32, #tpu.memory_space<vmem>>, %arg12: memref<16x1xf32, #tpu.memory_space<vmem>>, %arg13: memref<8x72xf32, #tpu.memory_space<vmem>>, %arg14: memref<8x1xf32, #tpu.memory_space<vmem>>, %arg15: memref<1x8x512xf32, #tpu.memory_space<vmem>>) attributes {dimension_semantics = [#tpu.dimension_semantics<parallel>], iteration_bounds = array<i64: 2>, scalar_prefetch = 0 : i64, scratch_operands = 0 : i64, tpu.core_type = #tpu.core_type<tc>, window_params = [{transform_indices = @transform_0, window_bounds = array<i64: 1, 8, 512>}, {pipeline_mode = #tpu.pipeline_mode<synchronous>, transform_indices = @transform_1, window_bounds = array<i64: 8, 512>}, {pipeline_mode = #tpu.pipeline_mode<synchronous>, transform_indices = @transform_2, window_bounds = array<i64: 16, 72>}, {pipeline_mode = #tpu.pipeline_mode<synchronous>, transform_indices = @transform_3, window_bounds = array<i64: 16, 1>}, {pipeline_mode = #tpu.pipeline_mode<synchronous>, transform_indices = @transform_4, window_bounds = array<i64: 8, 72>}, {pipeline_mode = #tpu.pipeline_mode<synchronous>, transform_indices = @transform_5, window_bounds = array<i64: 8, 1>}, {pipeline_mode = #tpu.pipeline_mode<synchronous>, transform_indices = @transform_6, window_bounds = array<i64: 24, 72>}, {pipeline_mode = #tpu.pipeline_mode<synchronous>, transform_indices = @transform_7, window_bounds = array<i64: 24, 1>}, {pipeline_mode = #tpu.pipeline_mode<synchronous>, transform_indices = @transform_8, window_bounds = array<i64: 24, 216>}, {pipeline_mode = #tpu.pipeline_mode<synchronous>, transform_indices = @transform_9, window_bounds = array<i64: 24, 1>}, {pipeline_mode = #tpu.pipeline_mode<synchronous>, transform_indices = @transform_10, window_bounds = array<i64: 16, 216>}, {pipeline_mode = #tpu.pipeline_mode<synchronous>, transform_indices = @transform_11, window_bounds = array<i64: 16, 1>}, {pipeline_mode = #tpu.pipeline_mode<synchronous>, transform_indices = @transform_12, window_bounds = array<i64: 8, 72>}, {pipeline_mode = #tpu.pipeline_mode<synchronous>, transform_indices = @transform_13, window_bounds = array<i64: 8, 1>}, {transform_indices = @transform_14, window_bounds = array<i64: 1, 8, 512>}]} {
    %c0 = arith.constant 0 : index
    %c0_0 = arith.constant 0 : index
    %0 = vector.load %arg2[%c0, %c0_0] : memref<8x512xf32, #tpu.memory_space<vmem>>, vector<8x512xf32>
    %1 = vector.extract_strided_slice %0 {offsets = [0, 0], sizes = [1, 512], strides = [1, 1]} : vector<8x512xf32> to vector<1x512xf32>
    %2 = vector.extract_strided_slice %0 {offsets = [1, 0], sizes = [1, 512], strides = [1, 1]} : vector<8x512xf32> to vector<1x512xf32>
    %3 = vector.extract_strided_slice %0 {offsets = [2, 0], sizes = [1, 512], strides = [1, 1]} : vector<8x512xf32> to vector<1x512xf32>
    %4 = vector.extract_strided_slice %0 {offsets = [3, 0], sizes = [1, 512], strides = [1, 1]} : vector<8x512xf32> to vector<1x512xf32>
    %5 = vector.extract_strided_slice %0 {offsets = [4, 0], sizes = [1, 512], strides = [1, 1]} : vector<8x512xf32> to vector<1x512xf32>
    %6 = vector.extract_strided_slice %0 {offsets = [5, 0], sizes = [1, 512], strides = [1, 1]} : vector<8x512xf32> to vector<1x512xf32>
    %7 = vector.extract_strided_slice %0 {offsets = [6, 0], sizes = [1, 512], strides = [1, 1]} : vector<8x512xf32> to vector<1x512xf32>
    %8 = vector.extract_strided_slice %0 {offsets = [7, 0], sizes = [1, 512], strides = [1, 1]} : vector<8x512xf32> to vector<1x512xf32>
    %c0_1 = arith.constant 0 : index
    %c0_2 = arith.constant 0 : index
    %c0_3 = arith.constant 0 : index
    %9 = vector.load %arg1[%c0_1, %c0_2, %c0_3] : memref<1x8x512xf32, #tpu.memory_space<vmem>>, vector<1x8x512xf32>
    %10 = vector.shape_cast %9 : vector<1x8x512xf32> to vector<8x512xf32>
    %c0_4 = arith.constant 0 : index
    %c0_5 = arith.constant 0 : index
    %11 = vector.load %arg3[%c0_4, %c0_5] : memref<16x72xf32, #tpu.memory_space<vmem>>, vector<16x72xf32>
    %c17_i32 = arith.constant 17 : i32
    %12 = tpu.dynamic_rotate %10 by %c17_i32 dim 1 : vector<8x512xf32>, i32 -> vector<8x512xf32>
    %13 = vector.broadcast %1 : vector<1x512xf32> to vector<8x512xf32>
    %14 = arith.mulf %12, %13 : vector<8x512xf32>
    %c16_i32 = arith.constant 16 : i32
    %15 = tpu.dynamic_rotate %10 by %c16_i32 dim 1 : vector<8x512xf32>, i32 -> vector<8x512xf32>
    %16 = vector.broadcast %2 : vector<1x512xf32> to vector<8x512xf32>
    %17 = arith.mulf %15, %16 : vector<8x512xf32>
    %c15_i32 = arith.constant 15 : i32
    %18 = tpu.dynamic_rotate %10 by %c15_i32 dim 1 : vector<8x512xf32>, i32 -> vector<8x512xf32>
    %19 = vector.broadcast %3 : vector<1x512xf32> to vector<8x512xf32>
    %20 = arith.mulf %18, %19 : vector<8x512xf32>
    %c1_i32 = arith.constant 1 : i32
    %21 = tpu.dynamic_rotate %10 by %c1_i32 dim 1 : vector<8x512xf32>, i32 -> vector<8x512xf32>
    %22 = vector.broadcast %4 : vector<1x512xf32> to vector<8x512xf32>
    %23 = arith.mulf %21, %22 : vector<8x512xf32>
    %c511_i32 = arith.constant 511 : i32
    %24 = tpu.dynamic_rotate %10 by %c511_i32 dim 1 : vector<8x512xf32>, i32 -> vector<8x512xf32>
    %25 = vector.broadcast %5 : vector<1x512xf32> to vector<8x512xf32>
    %26 = arith.mulf %24, %25 : vector<8x512xf32>
    %c497_i32 = arith.constant 497 : i32
    %27 = tpu.dynamic_rotate %10 by %c497_i32 dim 1 : vector<8x512xf32>, i32 -> vector<8x512xf32>
    %28 = vector.broadcast %6 : vector<1x512xf32> to vector<8x512xf32>
    %29 = arith.mulf %27, %28 : vector<8x512xf32>
    %c496_i32 = arith.constant 496 : i32
    %30 = tpu.dynamic_rotate %10 by %c496_i32 dim 1 : vector<8x512xf32>, i32 -> vector<8x512xf32>
    %31 = vector.broadcast %7 : vector<1x512xf32> to vector<8x512xf32>
    %32 = arith.mulf %30, %31 : vector<8x512xf32>
    %c495_i32 = arith.constant 495 : i32
    %33 = tpu.dynamic_rotate %10 by %c495_i32 dim 1 : vector<8x512xf32>, i32 -> vector<8x512xf32>
    %34 = vector.broadcast %8 : vector<1x512xf32> to vector<8x512xf32>
    %35 = arith.mulf %33, %34 : vector<8x512xf32>
    %36 = tpu.concatenate %14, %17, %20, %23, %10, %26, %29, %32, %35 in 0 : vector<8x512xf32>, vector<8x512xf32>, vector<8x512xf32>, vector<8x512xf32>, vector<8x512xf32>, vector<8x512xf32>, vector<8x512xf32>, vector<8x512xf32>, vector<8x512xf32> -> vector<72x512xf32>
    %cst = arith.constant dense<0.000000e+00> : vector<16x512xf32>
    %37 = tpu.matmul %11, %36, %cst {dimension_numbers = #tpu.dot_dimension_numbers<[1], [0], [0], [1], [0, 0, 1, 1], [], []>} : vector<16x72xf32>, vector<72x512xf32>, vector<16x512xf32> -> vector<16x512xf32>
    %c0_6 = arith.constant 0 : index
    %c0_7 = arith.constant 0 : index
    %38 = vector.load %arg4[%c0_6, %c0_7] : memref<16x1xf32, #tpu.memory_space<vmem>>, vector<16x1xf32>
    %39 = vector.broadcast %38 : vector<16x1xf32> to vector<16x512xf32>
    %40 = arith.addf %37, %39 : vector<16x512xf32>
    %41 = vector.extract_strided_slice %40 {offsets = [0, 0], sizes = [8, 512], strides = [1, 1]} : vector<16x512xf32> to vector<8x512xf32>
    %cst_8 = arith.constant 0.000000e+00 : f32
    %42 = vector.broadcast %cst_8 : f32 to vector<8x512xf32>
    %43 = arith.maximumf %41, %42 : vector<8x512xf32>
    %44 = vector.extract_strided_slice %40 {offsets = [8, 0], sizes = [8, 512], strides = [1, 1]} : vector<16x512xf32> to vector<8x512xf32>
    %c0_9 = arith.constant 0 : index
    %c0_10 = arith.constant 0 : index
    %45 = vector.load %arg5[%c0_9, %c0_10] : memref<8x72xf32, #tpu.memory_space<vmem>>, vector<8x72xf32>
    %c17_i32_11 = arith.constant 17 : i32
    %46 = tpu.dynamic_rotate %43 by %c17_i32_11 dim 1 : vector<8x512xf32>, i32 -> vector<8x512xf32>
    %47 = vector.broadcast %1 : vector<1x512xf32> to vector<8x512xf32>
    %48 = arith.mulf %46, %47 : vector<8x512xf32>
    %c16_i32_12 = arith.constant 16 : i32
    %49 = tpu.dynamic_rotate %43 by %c16_i32_12 dim 1 : vector<8x512xf32>, i32 -> vector<8x512xf32>
    %50 = vector.broadcast %2 : vector<1x512xf32> to vector<8x512xf32>
    %51 = arith.mulf %49, %50 : vector<8x512xf32>
    %c15_i32_13 = arith.constant 15 : i32
    %52 = tpu.dynamic_rotate %43 by %c15_i32_13 dim 1 : vector<8x512xf32>, i32 -> vector<8x512xf32>
    %53 = vector.broadcast %3 : vector<1x512xf32> to vector<8x512xf32>
    %54 = arith.mulf %52, %53 : vector<8x512xf32>
    %c1_i32_14 = arith.constant 1 : i32
    %55 = tpu.dynamic_rotate %43 by %c1_i32_14 dim 1 : vector<8x512xf32>, i32 -> vector<8x512xf32>
    %56 = vector.broadcast %4 : vector<1x512xf32> to vector<8x512xf32>
    %57 = arith.mulf %55, %56 : vector<8x512xf32>
    %c511_i32_15 = arith.constant 511 : i32
    %58 = tpu.dynamic_rotate %43 by %c511_i32_15 dim 1 : vector<8x512xf32>, i32 -> vector<8x512xf32>
    %59 = vector.broadcast %5 : vector<1x512xf32> to vector<8x512xf32>
    %60 = arith.mulf %58, %59 : vector<8x512xf32>
    %c497_i32_16 = arith.constant 497 : i32
    %61 = tpu.dynamic_rotate %43 by %c497_i32_16 dim 1 : vector<8x512xf32>, i32 -> vector<8x512xf32>
    %62 = vector.broadcast %6 : vector<1x512xf32> to vector<8x512xf32>
    %63 = arith.mulf %61, %62 : vector<8x512xf32>
    %c496_i32_17 = arith.constant 496 : i32
    %64 = tpu.dynamic_rotate %43 by %c496_i32_17 dim 1 : vector<8x512xf32>, i32 -> vector<8x512xf32>
    %65 = vector.broadcast %7 : vector<1x512xf32> to vector<8x512xf32>
    %66 = arith.mulf %64, %65 : vector<8x512xf32>
    %c495_i32_18 = arith.constant 495 : i32
    %67 = tpu.dynamic_rotate %43 by %c495_i32_18 dim 1 : vector<8x512xf32>, i32 -> vector<8x512xf32>
    %68 = vector.broadcast %8 : vector<1x512xf32> to vector<8x512xf32>
    %69 = arith.mulf %67, %68 : vector<8x512xf32>
    %70 = tpu.concatenate %48, %51, %54, %57, %43, %60, %63, %66, %69 in 0 : vector<8x512xf32>, vector<8x512xf32>, vector<8x512xf32>, vector<8x512xf32>, vector<8x512xf32>, vector<8x512xf32>, vector<8x512xf32>, vector<8x512xf32>, vector<8x512xf32> -> vector<72x512xf32>
    %cst_19 = arith.constant dense<0.000000e+00> : vector<8x512xf32>
    %71 = tpu.matmul %45, %70, %cst_19 {dimension_numbers = #tpu.dot_dimension_numbers<[1], [0], [0], [1], [0, 0, 1, 1], [], []>} : vector<8x72xf32>, vector<72x512xf32>, vector<8x512xf32> -> vector<8x512xf32>
    %c0_20 = arith.constant 0 : index
    %c0_21 = arith.constant 0 : index
    %72 = vector.load %arg6[%c0_20, %c0_21] : memref<8x1xf32, #tpu.memory_space<vmem>>, vector<8x1xf32>
    %73 = vector.broadcast %72 : vector<8x1xf32> to vector<8x512xf32>
    %74 = arith.addf %71, %73 : vector<8x512xf32>
    %75 = arith.addf %74, %44 : vector<8x512xf32>
    %cst_22 = arith.constant 0.000000e+00 : f32
    %76 = vector.broadcast %cst_22 : f32 to vector<8x512xf32>
    %77 = arith.maximumf %75, %76 : vector<8x512xf32>
    %c0_23 = arith.constant 0 : index
    %c0_24 = arith.constant 0 : index
    %78 = vector.load %arg7[%c0_23, %c0_24] : memref<24x72xf32, #tpu.memory_space<vmem>>, vector<24x72xf32>
    %c17_i32_25 = arith.constant 17 : i32
    %79 = tpu.dynamic_rotate %77 by %c17_i32_25 dim 1 : vector<8x512xf32>, i32 -> vector<8x512xf32>
    %80 = vector.broadcast %1 : vector<1x512xf32> to vector<8x512xf32>
    %81 = arith.mulf %79, %80 : vector<8x512xf32>
    %c16_i32_26 = arith.constant 16 : i32
    %82 = tpu.dynamic_rotate %77 by %c16_i32_26 dim 1 : vector<8x512xf32>, i32 -> vector<8x512xf32>
    %83 = vector.broadcast %2 : vector<1x512xf32> to vector<8x512xf32>
    %84 = arith.mulf %82, %83 : vector<8x512xf32>
    %c15_i32_27 = arith.constant 15 : i32
    %85 = tpu.dynamic_rotate %77 by %c15_i32_27 dim 1 : vector<8x512xf32>, i32 -> vector<8x512xf32>
    %86 = vector.broadcast %3 : vector<1x512xf32> to vector<8x512xf32>
    %87 = arith.mulf %85, %86 : vector<8x512xf32>
    %c1_i32_28 = arith.constant 1 : i32
    %88 = tpu.dynamic_rotate %77 by %c1_i32_28 dim 1 : vector<8x512xf32>, i32 -> vector<8x512xf32>
    %89 = vector.broadcast %4 : vector<1x512xf32> to vector<8x512xf32>
    %90 = arith.mulf %88, %89 : vector<8x512xf32>
    %c511_i32_29 = arith.constant 511 : i32
    %91 = tpu.dynamic_rotate %77 by %c511_i32_29 dim 1 : vector<8x512xf32>, i32 -> vector<8x512xf32>
    %92 = vector.broadcast %5 : vector<1x512xf32> to vector<8x512xf32>
    %93 = arith.mulf %91, %92 : vector<8x512xf32>
    %c497_i32_30 = arith.constant 497 : i32
    %94 = tpu.dynamic_rotate %77 by %c497_i32_30 dim 1 : vector<8x512xf32>, i32 -> vector<8x512xf32>
    %95 = vector.broadcast %6 : vector<1x512xf32> to vector<8x512xf32>
    %96 = arith.mulf %94, %95 : vector<8x512xf32>
    %c496_i32_31 = arith.constant 496 : i32
    %97 = tpu.dynamic_rotate %77 by %c496_i32_31 dim 1 : vector<8x512xf32>, i32 -> vector<8x512xf32>
    %98 = vector.broadcast %7 : vector<1x512xf32> to vector<8x512xf32>
    %99 = arith.mulf %97, %98 : vector<8x512xf32>
    %c495_i32_32 = arith.constant 495 : i32
    %100 = tpu.dynamic_rotate %77 by %c495_i32_32 dim 1 : vector<8x512xf32>, i32 -> vector<8x512xf32>
    %101 = vector.broadcast %8 : vector<1x512xf32> to vector<8x512xf32>
    %102 = arith.mulf %100, %101 : vector<8x512xf32>
    %103 = tpu.concatenate %81, %84, %87, %90, %77, %93, %96, %99, %102 in 0 : vector<8x512xf32>, vector<8x512xf32>, vector<8x512xf32>, vector<8x512xf32>, vector<8x512xf32>, vector<8x512xf32>, vector<8x512xf32>, vector<8x512xf32>, vector<8x512xf32> -> vector<72x512xf32>
    %cst_33 = arith.constant dense<0.000000e+00> : vector<24x512xf32>
    %104 = tpu.matmul %78, %103, %cst_33 {dimension_numbers = #tpu.dot_dimension_numbers<[1], [0], [0], [1], [0, 0, 1, 1], [], []>} : vector<24x72xf32>, vector<72x512xf32>, vector<24x512xf32> -> vector<24x512xf32>
    %c0_34 = arith.constant 0 : index
    %c0_35 = arith.constant 0 : index
    %105 = vector.load %arg8[%c0_34, %c0_35] : memref<24x1xf32, #tpu.memory_space<vmem>>, vector<24x1xf32>
    %106 = vector.broadcast %105 : vector<24x1xf32> to vector<24x512xf32>
    %107 = arith.addf %104, %106 : vector<24x512xf32>
    %c0_36 = arith.constant 0 : index
    %c0_37 = arith.constant 0 : index
    %108 = vector.load %arg9[%c0_36, %c0_37] : memref<24x216xf32, #tpu.memory_space<vmem>>, vector<24x216xf32>
    %c17_i32_38 = arith.constant 17 : i32
    %109 = tpu.dynamic_rotate %107 by %c17_i32_38 dim 1 : vector<24x512xf32>, i32 -> vector<24x512xf32>
    %110 = vector.broadcast %1 : vector<1x512xf32> to vector<24x512xf32>
    %111 = arith.mulf %109, %110 : vector<24x512xf32>
    %c16_i32_39 = arith.constant 16 : i32
    %112 = tpu.dynamic_rotate %107 by %c16_i32_39 dim 1 : vector<24x512xf32>, i32 -> vector<24x512xf32>
    %113 = vector.broadcast %2 : vector<1x512xf32> to vector<24x512xf32>
    %114 = arith.mulf %112, %113 : vector<24x512xf32>
    %c15_i32_40 = arith.constant 15 : i32
    %115 = tpu.dynamic_rotate %107 by %c15_i32_40 dim 1 : vector<24x512xf32>, i32 -> vector<24x512xf32>
    %116 = vector.broadcast %3 : vector<1x512xf32> to vector<24x512xf32>
    %117 = arith.mulf %115, %116 : vector<24x512xf32>
    %c1_i32_41 = arith.constant 1 : i32
    %118 = tpu.dynamic_rotate %107 by %c1_i32_41 dim 1 : vector<24x512xf32>, i32 -> vector<24x512xf32>
    %119 = vector.broadcast %4 : vector<1x512xf32> to vector<24x512xf32>
    %120 = arith.mulf %118, %119 : vector<24x512xf32>
    %c511_i32_42 = arith.constant 511 : i32
    %121 = tpu.dynamic_rotate %107 by %c511_i32_42 dim 1 : vector<24x512xf32>, i32 -> vector<24x512xf32>
    %122 = vector.broadcast %5 : vector<1x512xf32> to vector<24x512xf32>
    %123 = arith.mulf %121, %122 : vector<24x512xf32>
    %c497_i32_43 = arith.constant 497 : i32
    %124 = tpu.dynamic_rotate %107 by %c497_i32_43 dim 1 : vector<24x512xf32>, i32 -> vector<24x512xf32>
    %125 = vector.broadcast %6 : vector<1x512xf32> to vector<24x512xf32>
    %126 = arith.mulf %124, %125 : vector<24x512xf32>
    %c496_i32_44 = arith.constant 496 : i32
    %127 = tpu.dynamic_rotate %107 by %c496_i32_44 dim 1 : vector<24x512xf32>, i32 -> vector<24x512xf32>
    %128 = vector.broadcast %7 : vector<1x512xf32> to vector<24x512xf32>
    %129 = arith.mulf %127, %128 : vector<24x512xf32>
    %c495_i32_45 = arith.constant 495 : i32
    %130 = tpu.dynamic_rotate %107 by %c495_i32_45 dim 1 : vector<24x512xf32>, i32 -> vector<24x512xf32>
    %131 = vector.broadcast %8 : vector<1x512xf32> to vector<24x512xf32>
    %132 = arith.mulf %130, %131 : vector<24x512xf32>
    %133 = tpu.concatenate %111, %114, %117, %120, %107, %123, %126, %129, %132 in 0 : vector<24x512xf32>, vector<24x512xf32>, vector<24x512xf32>, vector<24x512xf32>, vector<24x512xf32>, vector<24x512xf32>, vector<24x512xf32>, vector<24x512xf32>, vector<24x512xf32> -> vector<216x512xf32>
    %cst_46 = arith.constant dense<0.000000e+00> : vector<24x512xf32>
    %134 = tpu.matmul %108, %133, %cst_46 {dimension_numbers = #tpu.dot_dimension_numbers<[1], [0], [0], [1], [0, 0, 1, 1], [], []>} : vector<24x216xf32>, vector<216x512xf32>, vector<24x512xf32> -> vector<24x512xf32>
    %c0_47 = arith.constant 0 : index
    %c0_48 = arith.constant 0 : index
    %135 = vector.load %arg10[%c0_47, %c0_48] : memref<24x1xf32, #tpu.memory_space<vmem>>, vector<24x1xf32>
    %136 = vector.broadcast %135 : vector<24x1xf32> to vector<24x512xf32>
    %137 = arith.addf %134, %136 : vector<24x512xf32>
    %cst_49 = arith.constant 0.000000e+00 : f32
    %138 = vector.broadcast %cst_49 : f32 to vector<24x512xf32>
    %139 = arith.maximumf %137, %138 : vector<24x512xf32>
    %c0_50 = arith.constant 0 : index
    %c0_51 = arith.constant 0 : index
    %140 = vector.load %arg11[%c0_50, %c0_51] : memref<16x216xf32, #tpu.memory_space<vmem>>, vector<16x216xf32>
    %c17_i32_52 = arith.constant 17 : i32
    %141 = tpu.dynamic_rotate %139 by %c17_i32_52 dim 1 : vector<24x512xf32>, i32 -> vector<24x512xf32>
    %142 = vector.broadcast %1 : vector<1x512xf32> to vector<24x512xf32>
    %143 = arith.mulf %141, %142 : vector<24x512xf32>
    %c16_i32_53 = arith.constant 16 : i32
    %144 = tpu.dynamic_rotate %139 by %c16_i32_53 dim 1 : vector<24x512xf32>, i32 -> vector<24x512xf32>
    %145 = vector.broadcast %2 : vector<1x512xf32> to vector<24x512xf32>
    %146 = arith.mulf %144, %145 : vector<24x512xf32>
    %c15_i32_54 = arith.constant 15 : i32
    %147 = tpu.dynamic_rotate %139 by %c15_i32_54 dim 1 : vector<24x512xf32>, i32 -> vector<24x512xf32>
    %148 = vector.broadcast %3 : vector<1x512xf32> to vector<24x512xf32>
    %149 = arith.mulf %147, %148 : vector<24x512xf32>
    %c1_i32_55 = arith.constant 1 : i32
    %150 = tpu.dynamic_rotate %139 by %c1_i32_55 dim 1 : vector<24x512xf32>, i32 -> vector<24x512xf32>
    %151 = vector.broadcast %4 : vector<1x512xf32> to vector<24x512xf32>
    %152 = arith.mulf %150, %151 : vector<24x512xf32>
    %c511_i32_56 = arith.constant 511 : i32
    %153 = tpu.dynamic_rotate %139 by %c511_i32_56 dim 1 : vector<24x512xf32>, i32 -> vector<24x512xf32>
    %154 = vector.broadcast %5 : vector<1x512xf32> to vector<24x512xf32>
    %155 = arith.mulf %153, %154 : vector<24x512xf32>
    %c497_i32_57 = arith.constant 497 : i32
    %156 = tpu.dynamic_rotate %139 by %c497_i32_57 dim 1 : vector<24x512xf32>, i32 -> vector<24x512xf32>
    %157 = vector.broadcast %6 : vector<1x512xf32> to vector<24x512xf32>
    %158 = arith.mulf %156, %157 : vector<24x512xf32>
    %c496_i32_58 = arith.constant 496 : i32
    %159 = tpu.dynamic_rotate %139 by %c496_i32_58 dim 1 : vector<24x512xf32>, i32 -> vector<24x512xf32>
    %160 = vector.broadcast %7 : vector<1x512xf32> to vector<24x512xf32>
    %161 = arith.mulf %159, %160 : vector<24x512xf32>
    %c495_i32_59 = arith.constant 495 : i32
    %162 = tpu.dynamic_rotate %139 by %c495_i32_59 dim 1 : vector<24x512xf32>, i32 -> vector<24x512xf32>
    %163 = vector.broadcast %8 : vector<1x512xf32> to vector<24x512xf32>
    %164 = arith.mulf %162, %163 : vector<24x512xf32>
    %165 = tpu.concatenate %143, %146, %149, %152, %139, %155, %158, %161, %164 in 0 : vector<24x512xf32>, vector<24x512xf32>, vector<24x512xf32>, vector<24x512xf32>, vector<24x512xf32>, vector<24x512xf32>, vector<24x512xf32>, vector<24x512xf32>, vector<24x512xf32> -> vector<216x512xf32>
    %cst_60 = arith.constant dense<0.000000e+00> : vector<16x512xf32>
    %166 = tpu.matmul %140, %165, %cst_60 {dimension_numbers = #tpu.dot_dimension_numbers<[1], [0], [0], [1], [0, 0, 1, 1], [], []>} : vector<16x216xf32>, vector<216x512xf32>, vector<16x512xf32> -> vector<16x512xf32>
    %c0_61 = arith.constant 0 : index
    %c0_62 = arith.constant 0 : index
    %167 = vector.load %arg12[%c0_61, %c0_62] : memref<16x1xf32, #tpu.memory_space<vmem>>, vector<16x1xf32>
    %168 = vector.broadcast %167 : vector<16x1xf32> to vector<16x512xf32>
    %169 = arith.addf %166, %168 : vector<16x512xf32>
    %170 = vector.extract_strided_slice %169 {offsets = [0, 0], sizes = [8, 512], strides = [1, 1]} : vector<16x512xf32> to vector<8x512xf32>
    %cst_63 = arith.constant 0.000000e+00 : f32
    %171 = vector.broadcast %cst_63 : f32 to vector<8x512xf32>
    %172 = arith.maximumf %170, %171 : vector<8x512xf32>
    %173 = vector.extract_strided_slice %169 {offsets = [8, 0], sizes = [8, 512], strides = [1, 1]} : vector<16x512xf32> to vector<8x512xf32>
    %c0_64 = arith.constant 0 : index
    %c0_65 = arith.constant 0 : index
    %174 = vector.load %arg13[%c0_64, %c0_65] : memref<8x72xf32, #tpu.memory_space<vmem>>, vector<8x72xf32>
    %c17_i32_66 = arith.constant 17 : i32
    %175 = tpu.dynamic_rotate %172 by %c17_i32_66 dim 1 : vector<8x512xf32>, i32 -> vector<8x512xf32>
    %176 = vector.broadcast %1 : vector<1x512xf32> to vector<8x512xf32>
    %177 = arith.mulf %175, %176 : vector<8x512xf32>
    %c16_i32_67 = arith.constant 16 : i32
    %178 = tpu.dynamic_rotate %172 by %c16_i32_67 dim 1 : vector<8x512xf32>, i32 -> vector<8x512xf32>
    %179 = vector.broadcast %2 : vector<1x512xf32> to vector<8x512xf32>
    %180 = arith.mulf %178, %179 : vector<8x512xf32>
    %c15_i32_68 = arith.constant 15 : i32
    %181 = tpu.dynamic_rotate %172 by %c15_i32_68 dim 1 : vector<8x512xf32>, i32 -> vector<8x512xf32>
    %182 = vector.broadcast %3 : vector<1x512xf32> to vector<8x512xf32>
    %183 = arith.mulf %181, %182 : vector<8x512xf32>
    %c1_i32_69 = arith.constant 1 : i32
    %184 = tpu.dynamic_rotate %172 by %c1_i32_69 dim 1 : vector<8x512xf32>, i32 -> vector<8x512xf32>
    %185 = vector.broadcast %4 : vector<1x512xf32> to vector<8x512xf32>
    %186 = arith.mulf %184, %185 : vector<8x512xf32>
    %c511_i32_70 = arith.constant 511 : i32
    %187 = tpu.dynamic_rotate %172 by %c511_i32_70 dim 1 : vector<8x512xf32>, i32 -> vector<8x512xf32>
    %188 = vector.broadcast %5 : vector<1x512xf32> to vector<8x512xf32>
    %189 = arith.mulf %187, %188 : vector<8x512xf32>
    %c497_i32_71 = arith.constant 497 : i32
    %190 = tpu.dynamic_rotate %172 by %c497_i32_71 dim 1 : vector<8x512xf32>, i32 -> vector<8x512xf32>
    %191 = vector.broadcast %6 : vector<1x512xf32> to vector<8x512xf32>
    %192 = arith.mulf %190, %191 : vector<8x512xf32>
    %c496_i32_72 = arith.constant 496 : i32
    %193 = tpu.dynamic_rotate %172 by %c496_i32_72 dim 1 : vector<8x512xf32>, i32 -> vector<8x512xf32>
    %194 = vector.broadcast %7 : vector<1x512xf32> to vector<8x512xf32>
    %195 = arith.mulf %193, %194 : vector<8x512xf32>
    %c495_i32_73 = arith.constant 495 : i32
    %196 = tpu.dynamic_rotate %172 by %c495_i32_73 dim 1 : vector<8x512xf32>, i32 -> vector<8x512xf32>
    %197 = vector.broadcast %8 : vector<1x512xf32> to vector<8x512xf32>
    %198 = arith.mulf %196, %197 : vector<8x512xf32>
    %199 = tpu.concatenate %177, %180, %183, %186, %172, %189, %192, %195, %198 in 0 : vector<8x512xf32>, vector<8x512xf32>, vector<8x512xf32>, vector<8x512xf32>, vector<8x512xf32>, vector<8x512xf32>, vector<8x512xf32>, vector<8x512xf32>, vector<8x512xf32> -> vector<72x512xf32>
    %cst_74 = arith.constant dense<0.000000e+00> : vector<8x512xf32>
    %200 = tpu.matmul %174, %199, %cst_74 {dimension_numbers = #tpu.dot_dimension_numbers<[1], [0], [0], [1], [0, 0, 1, 1], [], []>} : vector<8x72xf32>, vector<72x512xf32>, vector<8x512xf32> -> vector<8x512xf32>
    %c0_75 = arith.constant 0 : index
    %c0_76 = arith.constant 0 : index
    %201 = vector.load %arg14[%c0_75, %c0_76] : memref<8x1xf32, #tpu.memory_space<vmem>>, vector<8x1xf32>
    %202 = vector.broadcast %201 : vector<8x1xf32> to vector<8x512xf32>
    %203 = arith.addf %200, %202 : vector<8x512xf32>
    %204 = arith.addf %203, %173 : vector<8x512xf32>
    %cst_77 = arith.constant 0.000000e+00 : f32
    %205 = vector.broadcast %cst_77 : f32 to vector<8x512xf32>
    %206 = arith.maximumf %204, %205 : vector<8x512xf32>
    %207 = vector.shape_cast %206 : vector<8x512xf32> to vector<1x8x512xf32>
    %c0_78 = arith.constant 0 : index
    %c0_79 = arith.constant 0 : index
    %c0_80 = arith.constant 0 : index
    %208 = vector.load %arg15[%c0_78, %c0_79, %c0_80] : memref<1x8x512xf32, #tpu.memory_space<vmem>>, vector<1x8x512xf32>
    tpu.vector_store %arg15[%c0_78, %c0_79, %c0_80], %207 {strides = array<i32>} : memref<1x8x512xf32, #tpu.memory_space<vmem>>, vector<1x8x512xf32>,
    return
  }
  func.func @transform_0(%arg0: i32) -> (i32, i32, i32) {
    %c0_i32 = arith.constant 0 : i32
    %c0_i32_0 = arith.constant 0 : i32
    %c0_i32_1 = arith.constant 0 : i32
    return %arg0, %c0_i32, %c0_i32_0 : i32, i32, i32
  }
  func.func @transform_1(%arg0: i32) -> (i32, i32) {
    %c0_i32 = arith.constant 0 : i32
    %c0_i32_0 = arith.constant 0 : i32
    %c0_i32_1 = arith.constant 0 : i32
    return %c0_i32, %c0_i32_0 : i32, i32
  }
  func.func @transform_2(%arg0: i32) -> (i32, i32) {
    %c0_i32 = arith.constant 0 : i32
    %c0_i32_0 = arith.constant 0 : i32
    %c0_i32_1 = arith.constant 0 : i32
    return %c0_i32, %c0_i32_0 : i32, i32
  }
  func.func @transform_3(%arg0: i32) -> (i32, i32) {
    %c0_i32 = arith.constant 0 : i32
    %c0_i32_0 = arith.constant 0 : i32
    %c0_i32_1 = arith.constant 0 : i32
    return %c0_i32, %c0_i32_0 : i32, i32
  }
  func.func @transform_4(%arg0: i32) -> (i32, i32) {
    %c0_i32 = arith.constant 0 : i32
    %c0_i32_0 = arith.constant 0 : i32
    %c0_i32_1 = arith.constant 0 : i32
    return %c0_i32, %c0_i32_0 : i32, i32
  }
  func.func @transform_5(%arg0: i32) -> (i32, i32) {
    %c0_i32 = arith.constant 0 : i32
    %c0_i32_0 = arith.constant 0 : i32
    %c0_i32_1 = arith.constant 0 : i32
    return %c0_i32, %c0_i32_0 : i32, i32
  }
  func.func @transform_6(%arg0: i32) -> (i32, i32) {
    %c0_i32 = arith.constant 0 : i32
    %c0_i32_0 = arith.constant 0 : i32
    %c0_i32_1 = arith.constant 0 : i32
    return %c0_i32, %c0_i32_0 : i32, i32
  }
  func.func @transform_7(%arg0: i32) -> (i32, i32) {
    %c0_i32 = arith.constant 0 : i32
    %c0_i32_0 = arith.constant 0 : i32
    %c0_i32_1 = arith.constant 0 : i32
    return %c0_i32, %c0_i32_0 : i32, i32
  }
  func.func @transform_8(%arg0: i32) -> (i32, i32) {
    %c0_i32 = arith.constant 0 : i32
    %c0_i32_0 = arith.constant 0 : i32
    %c0_i32_1 = arith.constant 0 : i32
    return %c0_i32, %c0_i32_0 : i32, i32
  }
  func.func @transform_9(%arg0: i32) -> (i32, i32) {
    %c0_i32 = arith.constant 0 : i32
    %c0_i32_0 = arith.constant 0 : i32
    %c0_i32_1 = arith.constant 0 : i32
    return %c0_i32, %c0_i32_0 : i32, i32
  }
  func.func @transform_10(%arg0: i32) -> (i32, i32) {
    %c0_i32 = arith.constant 0 : i32
    %c0_i32_0 = arith.constant 0 : i32
    %c0_i32_1 = arith.constant 0 : i32
    return %c0_i32, %c0_i32_0 : i32, i32
  }
  func.func @transform_11(%arg0: i32) -> (i32, i32) {
    %c0_i32 = arith.constant 0 : i32
    %c0_i32_0 = arith.constant 0 : i32
    %c0_i32_1 = arith.constant 0 : i32
    return %c0_i32, %c0_i32_0 : i32, i32
  }
  func.func @transform_12(%arg0: i32) -> (i32, i32) {
    %c0_i32 = arith.constant 0 : i32
    %c0_i32_0 = arith.constant 0 : i32
    %c0_i32_1 = arith.constant 0 : i32
    return %c0_i32, %c0_i32_0 : i32, i32
  }
  func.func @transform_13(%arg0: i32) -> (i32, i32) {
    %c0_i32 = arith.constant 0 : i32
    %c0_i32_0 = arith.constant 0 : i32
    %c0_i32_1 = arith.constant 0 : i32
    return %c0_i32, %c0_i32_0 : i32, i32
  }
  func.func @transform_14(%arg0: i32) -> (i32, i32, i32) {
    %c0_i32 = arith.constant 0 : i32
    %c0_i32_0 = arith.constant 0 : i32
    %c0_i32_1 = arith.constant 0 : i32
    return %arg0, %c0_i32, %c0_i32_0 : i32, i32, i32
  }
}

</mosaic_0001>

<llo_original>
// kernel: spresnet_forward.1
$region0: #{spresnet_forward.1}
  #allocation0 [shape = 'u32[]', space=smem, size = 0x4, offset = 0x4, fixed_abs, tag = 'smem constant byte address 0x4 - core index']
  #allocation1 [shape = 'u32[144,128]{1,0:T(1,128)}', space=vmem, size = 0x12000, scoped, tag = 'internal scratch']
  %s0 = inlined_call_operand.vmem [shape: f32[2,8,512], index: 0, kind: input, shape index: {}]
  %s1 = inlined_call_operand.vmem [shape: f32[8,512], index: 1, kind: input, shape index: {}]
  %s2 = inlined_call_operand.vmem [shape: f32[16,72], index: 2, kind: input, shape index: {}]
  %s3 = inlined_call_operand.vmem [shape: f32[16,1], index: 3, kind: input, shape index: {}]
  %s4 = inlined_call_operand.vmem [shape: f32[8,72], index: 4, kind: input, shape index: {}]
  %s5 = inlined_call_operand.vmem [shape: f32[8,1], index: 5, kind: input, shape index: {}]
  %s6 = inlined_call_operand.vmem [shape: f32[24,72], index: 6, kind: input, shape index: {}]
  %s7 = inlined_call_operand.vmem [shape: f32[24,1], index: 7, kind: input, shape index: {}]
  %s8 = inlined_call_operand.vmem [shape: f32[24,216], index: 8, kind: input, shape index: {}]
  %s9 = inlined_call_operand.vmem [shape: f32[24,1], index: 9, kind: input, shape index: {}]
  %s10 = inlined_call_operand.vmem [shape: f32[16,216], index: 10, kind: input, shape index: {}]
  %s11 = inlined_call_operand.vmem [shape: f32[16,1], index: 11, kind: input, shape index: {}]
  %s12 = inlined_call_operand.vmem [shape: f32[8,72], index: 12, kind: input, shape index: {}]
  %s13 = inlined_call_operand.vmem [shape: f32[8,1], index: 13, kind: input, shape index: {}]
  %s14 = inlined_call_operand.vmem [shape: f32[2,8,512], index: 14, kind: output, shape index: {}]
  %s15 = sld [smem:[#allocation0]]
  $region89: #{spresnet_forward.1} parent=0
    _
  %s17 = ssub.s32 1, %s15
  %s18 = scalar_select 0, %s17, %s15
  loop: start=0, step=1, limit=4
  $region2: #{spresnet_forward.1} parent=0 // loop_pre_header
    _
  $region3: #{spresnet_forward.1} parent=0 // loop_header
    %s20 = sphi 0, %s24
    %p21 = scmp.ge.s32.totalorder %s20, 4
    %s30 = sphi 0, %s32
    %s33 = sphi 0, %s30
    %s34 = sphi 0, %s33
    %s50 = sphi 0, %s34
    %s54 = sphi 0, %s54
    %s56 = sphi 0, %s54
    %s57 = sphi 0, %s56
    %s71 = sphi 0, %s57
    %s75 = sphi 0, %s75
    %s77 = sphi 0, %s75
    %s78 = sphi 0, %s77
    %s92 = sphi 0, %s78
    %s96 = sphi 0, %s96
    %s98 = sphi 0, %s96
    %s99 = sphi 0, %s98
    %s113 = sphi 0, %s99
    %s117 = sphi 0, %s117
    %s119 = sphi 0, %s117
    %s120 = sphi 0, %s119
    %s134 = sphi 0, %s120
    %s138 = sphi 0, %s138
    %s140 = sphi 0, %s138
    %s141 = sphi 0, %s140
    %s155 = sphi 0, %s141
    %s159 = sphi 0, %s159
    %s161 = sphi 0, %s159
    %s162 = sphi 0, %s161
    %s176 = sphi 0, %s162
    %s180 = sphi 0, %s180
    %s182 = sphi 0, %s180
    %s183 = sphi 0, %s182
    %s197 = sphi 0, %s183
    %s201 = sphi 0, %s201
    %s203 = sphi 0, %s201
    %s204 = sphi 0, %s203
    %s218 = sphi 0, %s204
    %s222 = sphi 0, %s222
    %s224 = sphi 0, %s222
    %s225 = sphi 0, %s224
    %s239 = sphi 0, %s225
    %s243 = sphi 0, %s243
    %s245 = sphi 0, %s243
    %s246 = sphi 0, %s245
    %s260 = sphi 0, %s246
    %s264 = sphi 0, %s264
    %s266 = sphi 0, %s264
    %s267 = sphi 0, %s266
    %s281 = sphi 0, %s267
    %s285 = sphi 0, %s285
    %s287 = sphi 0, %s285
    %s288 = sphi 0, %s287
    %s302 = sphi 0, %s288
    %s306 = sphi 0, %s306
    %s308 = sphi 0, %s306
    %s309 = sphi 0, %s308
    %s323 = sphi 0, %s309
    %s329 = sphi 0, %s331
    %s332 = sphi 0, %s329
    %s333 = sphi 0, %s332
    %s349 = sphi 0, %s333
  $region4: #{spresnet_forward.1} parent=0 // loop_header_branch
    %23 = sbr.rel (%p21) target = $region8
  $region5: #{spresnet_forward.1} parent=0 // loop_body
    %s25 = ssub.s32 %s20, 1
    %s26 = ssub.s32 %s20, 2
    %s27 = sadd.s32 %s20, 1
    %s28 = ssub.s32 %s20, %s27
    %p29 = scmp.eq.s32.totalorder %s28, 0
    %s31 = sadd.s32 %s30, 1
    %s32 = scalar_select %p29, %s30, %s31
    %p35 = pneg %p29
    %p36 = scmp.eq.s32.totalorder %s20, 1
    %p37 = por %p35, %p36
    %p38 = scmp.ne.s32.totalorder %s30, %s33
    %p39 = scmp.eq.s32.totalorder %s20, 0
    %p40 = por %p38, %p39
    %p41 = scmp.ne.s32.totalorder %s30, %s33
    %p42 = scmp.eq.s32.totalorder %s25, 1
    %p43 = por %p41, %p42
    %p44 = scmp.ne.s32.totalorder %s33, %s34
    %p45 = scmp.eq.s32.totalorder %s25, 0
    %p46 = por %p44, %p45
    %p47 = scmp.ne.s32.totalorder %s33, %s34
    %p48 = scmp.eq.s32.totalorder %s26, 1
    %p49 = por %p47, %p48
    %p51 = scmp.ne.s32.totalorder %s34, %s50
    %p52 = scmp.eq.s32.totalorder %s26, 0
    %p53 = por %p51, %p52
    %s55 = sadd.s32 %s54, 1
    %p58 = scmp.eq.s32.totalorder %s20, 1
    %p59 = scmp.ne.s32.totalorder %s54, %s56
    %p60 = scmp.eq.s32.totalorder %s20, 0
    %p61 = por %p59, %p60
    %p62 = scmp.ne.s32.totalorder %s54, %s56
    %p63 = scmp.eq.s32.totalorder %s25, 1
    %p64 = por %p62, %p63
    %p65 = scmp.ne.s32.totalorder %s56, %s57
    %p66 = scmp.eq.s32.totalorder %s25, 0
    %p67 = por %p65, %p66
    %p68 = scmp.ne.s32.totalorder %s56, %s57
    %p69 = scmp.eq.s32.totalorder %s26, 1
    %p70 = por %p68, %p69
    %p72 = scmp.ne.s32.totalorder %s57, %s71
    %p73 = scmp.eq.s32.totalorder %s26, 0
    %p74 = por %p72, %p73
    %s76 = sadd.s32 %s75, 1
    %p79 = scmp.eq.s32.totalorder %s20, 1
    %p80 = scmp.ne.s32.totalorder %s75, %s77
    %p81 = scmp.eq.s32.totalorder %s20, 0
    %p82 = por %p80, %p81
    %p83 = scmp.ne.s32.totalorder %s75, %s77
    %p84 = scmp.eq.s32.totalorder %s25, 1
    %p85 = por %p83, %p84
    %p86 = scmp.ne.s32.totalorder %s77, %s78
    %p87 = scmp.eq.s32.totalorder %s25, 0
    %p88 = por %p86, %p87
    %p89 = scmp.ne.s32.totalorder %s77, %s78
    %p90 = scmp.eq.s32.totalorder %s26, 1
    %p91 = por %p89, %p90
    %p93 = scmp.ne.s32.totalorder %s78, %s92
    %p94 = scmp.eq.s32.totalorder %s26, 0
    %p95 = por %p93, %p94
    %s97 = sadd.s32 %s96, 1
    %p100 = scmp.eq.s32.totalorder %s20, 1
    %p101 = scmp.ne.s32.totalorder %s96, %s98
    %p102 = scmp.eq.s32.totalorder %s20, 0
    %p103 = por %p101, %p102
    %p104 = scmp.ne.s32.totalorder %s96, %s98
    %p105 = scmp.eq.s32.totalorder %s25, 1
    %p106 = por %p104, %p105
    %p107 = scmp.ne.s32.totalorder %s98, %s99
    %p108 = scmp.eq.s32.totalorder %s25, 0
    %p109 = por %p107, %p108
    %p110 = scmp.ne.s32.totalorder %s98, %s99
    %p111 = scmp.eq.s32.totalorder %s26, 1
    %p112 = por %p110, %p111
    %p114 = scmp.ne.s32.totalorder %s99, %s113
    %p115 = scmp.eq.s32.totalorder %s26, 0
    %p116 = por %p114, %p115
    %s118 = sadd.s32 %s117, 1
    %p121 = scmp.eq.s32.totalorder %s20, 1
    %p122 = scmp.ne.s32.totalorder %s117, %s119
    %p123 = scmp.eq.s32.totalorder %s20, 0
    %p124 = por %p122, %p123
    %p125 = scmp.ne.s32.totalorder %s117, %s119
    %p126 = scmp.eq.s32.totalorder %s25, 1
    %p127 = por %p125, %p126
    %p128 = scmp.ne.s32.totalorder %s119, %s120
    %p129 = scmp.eq.s32.totalorder %s25, 0
    %p130 = por %p128, %p129
    %p131 = scmp.ne.s32.totalorder %s119, %s120
    %p132 = scmp.eq.s32.totalorder %s26, 1
    %p133 = por %p131, %p132
    %p135 = scmp.ne.s32.totalorder %s120, %s134
    %p136 = scmp.eq.s32.totalorder %s26, 0
    %p137 = por %p135, %p136
    %s139 = sadd.s32 %s138, 1
    %p142 = scmp.eq.s32.totalorder %s20, 1
    %p143 = scmp.ne.s32.totalorder %s138, %s140
    %p144 = scmp.eq.s32.totalorder %s20, 0
    %p145 = por %p143, %p144
    %p146 = scmp.ne.s32.totalorder %s138, %s140
    %p147 = scmp.eq.s32.totalorder %s25, 1
    %p148 = por %p146, %p147
    %p149 = scmp.ne.s32.totalorder %s140, %s141
    %p150 = scmp.eq.s32.totalorder %s25, 0
    %p151 = por %p149, %p150
    %p152 = scmp.ne.s32.totalorder %s140, %s141
    %p153 = scmp.eq.s32.totalorder %s26, 1
    %p154 = por %p152, %p153
    %p156 = scmp.ne.s32.totalorder %s141, %s155
    %p157 = scmp.eq.s32.totalorder %s26, 0
    %p158 = por %p156, %p157
    %s160 = sadd.s32 %s159, 1
    %p163 = scmp.eq.s32.totalorder %s20, 1
    %p164 = scmp.ne.s32.totalorder %s159, %s161
    %p165 = scmp.eq.s32.totalorder %s20, 0
    %p166 = por %p164, %p165
    %p167 = scmp.ne.s32.totalorder %s159, %s161
    %p168 = scmp.eq.s32.totalorder %s25, 1
    %p169 = por %p167, %p168
    %p170 = scmp.ne.s32.totalorder %s161, %s162
    %p171 = scmp.eq.s32.totalorder %s25, 0
    %p172 = por %p170, %p171
    %p173 = scmp.ne.s32.totalorder %s161, %s162
    %p174 = scmp.eq.s32.totalorder %s26, 1
    %p175 = por %p173, %p174
    %p177 = scmp.ne.s32.totalorder %s162, %s176
    %p178 = scmp.eq.s32.totalorder %s26, 0
    %p179 = por %p177, %p178
    %s181 = sadd.s32 %s180, 1
    %p184 = scmp.eq.s32.totalorder %s20, 1
    %p185 = scmp.ne.s32.totalorder %s180, %s182
    %p186 = scmp.eq.s32.totalorder %s20, 0
    %p187 = por %p185, %p186
    %p188 = scmp.ne.s32.totalorder %s180, %s182
    %p189 = scmp.eq.s32.totalorder %s25, 1
    %p190 = por %p188, %p189
    %p191 = scmp.ne.s32.totalorder %s182, %s183
    %p192 = scmp.eq.s32.totalorder %s25, 0
    %p193 = por %p191, %p192
    %p194 = scmp.ne.s32.totalorder %s182, %s183
    %p195 = scmp.eq.s32.totalorder %s26, 1
    %p196 = por %p194, %p195
    %p198 = scmp.ne.s32.totalorder %s183, %s197
    %p199 = scmp.eq.s32.totalorder %s26, 0
    %p200 = por %p198, %p199
    %s202 = sadd.s32 %s201, 1
    %p205 = scmp.eq.s32.totalorder %s20, 1
    %p206 = scmp.ne.s32.totalorder %s201, %s203
    %p207 = scmp.eq.s32.totalorder %s20, 0
    %p208 = por %p206, %p207
    %p209 = scmp.ne.s32.totalorder %s201, %s203
    %p210 = scmp.eq.s32.totalorder %s25, 1
    %p211 = por %p209, %p210
    %p212 = scmp.ne.s32.totalorder %s203, %s204
    %p213 = scmp.eq.s32.totalorder %s25, 0
    %p214 = por %p212, %p213
    %p215 = scmp.ne.s32.totalorder %s203, %s204
    %p216 = scmp.eq.s32.totalorder %s26, 1
    %p217 = por %p215, %p216
    %p219 = scmp.ne.s32.totalorder %s204, %s218
    %p220 = scmp.eq.s32.totalorder %s26, 0
    %p221 = por %p219, %p220
    %s223 = sadd.s32 %s222, 1
    %p226 = scmp.eq.s32.totalorder %s20, 1
    %p227 = scmp.ne.s32.totalorder %s222, %s224
    %p228 = scmp.eq.s32.totalorder %s20, 0
    %p229 = por %p227, %p228
    %p230 = scmp.ne.s32.totalorder %s222, %s224
    %p231 = scmp.eq.s32.totalorder %s25, 1
    %p232 = por %p230, %p231
    %p233 = scmp.ne.s32.totalorder %s224, %s225
    %p234 = scmp.eq.s32.totalorder %s25, 0
    %p235 = por %p233, %p234
    %p236 = scmp.ne.s32.totalorder %s224, %s225
    %p237 = scmp.eq.s32.totalorder %s26, 1
    %p238 = por %p236, %p237
    %p240 = scmp.ne.s32.totalorder %s225, %s239
    %p241 = scmp.eq.s32.totalorder %s26, 0
    %p242 = por %p240, %p241
    %s244 = sadd.s32 %s243, 1
    %p247 = scmp.eq.s32.totalorder %s20, 1
    %p248 = scmp.ne.s32.totalorder %s243, %s245
    %p249 = scmp.eq.s32.totalorder %s20, 0
    %p250 = por %p248, %p249
    %p251 = scmp.ne.s32.totalorder %s243, %s245
    %p252 = scmp.eq.s32.totalorder %s25, 1
    %p253 = por %p251, %p252
    %p254 = scmp.ne.s32.totalorder %s245, %s246
    %p255 = scmp.eq.s32.totalorder %s25, 0
    %p256 = por %p254, %p255
    %p257 = scmp.ne.s32.totalorder %s245, %s246
    %p258 = scmp.eq.s32.totalorder %s26, 1
    %p259 = por %p257, %p258
    %p261 = scmp.ne.s32.totalorder %s246, %s260
    %p262 = scmp.eq.s32.totalorder %s26, 0
    %p263 = por %p261, %p262
    %s265 = sadd.s32 %s264, 1
    %p268 = scmp.eq.s32.totalorder %s20, 1
    %p269 = scmp.ne.s32.totalorder %s264, %s266
    %p270 = scmp.eq.s32.totalorder %s20, 0
    %p271 = por %p269, %p270
    %p272 = scmp.ne.s32.totalorder %s264, %s266
    %p273 = scmp.eq.s32.totalorder %s25, 1
    %p274 = por %p272, %p273
    %p275 = scmp.ne.s32.totalorder %s266, %s267
    %p276 = scmp.eq.s32.totalorder %s25, 0
    %p277 = por %p275, %p276
    %p278 = scmp.ne.s32.totalorder %s266, %s267
    %p279 = scmp.eq.s32.totalorder %s26, 1
    %p280 = por %p278, %p279
    %p282 = scmp.ne.s32.totalorder %s267, %s281
    %p283 = scmp.eq.s32.totalorder %s26, 0
    %p284 = por %p282, %p283
    %s286 = sadd.s32 %s285, 1
    %p289 = scmp.eq.s32.totalorder %s20, 1
    %p290 = scmp.ne.s32.totalorder %s285, %s287
    %p291 = scmp.eq.s32.totalorder %s20, 0
    %p292 = por %p290, %p291
    %p293 = scmp.ne.s32.totalorder %s285, %s287
    %p294 = scmp.eq.s32.totalorder %s25, 1
    %p295 = por %p293, %p294
    %p296 = scmp.ne.s32.totalorder %s287, %s288
    %p297 = scmp.eq.s32.totalorder %s25, 0
    %p298 = por %p296, %p297
    %p299 = scmp.ne.s32.totalorder %s287, %s288
    %p300 = scmp.eq.s32.totalorder %s26, 1
    %p301 = por %p299, %p300
    %p303 = scmp.ne.s32.totalorder %s288, %s302
    %p304 = scmp.eq.s32.totalorder %s26, 0
    %p305 = por %p303, %p304
    %s307 = sadd.s32 %s306, 1
    %p310 = scmp.eq.s32.totalorder %s20, 1
    %p311 = scmp.ne.s32.totalorder %s306, %s308
    %p312 = scmp.eq.s32.totalorder %s20, 0
    %p313 = por %p311, %p312
    %p314 = scmp.ne.s32.totalorder %s306, %s308
    %p315 = scmp.eq.s32.totalorder %s25, 1
    %p316 = por %p314, %p315
    %p317 = scmp.ne.s32.totalorder %s308, %s309
    %p318 = scmp.eq.s32.totalorder %s25, 0
    %p319 = por %p317, %p318
    %p320 = scmp.ne.s32.totalorder %s308, %s309
    %p321 = scmp.eq.s32.totalorder %s26, 1
    %p322 = por %p320, %p321
    %p324 = scmp.ne.s32.totalorder %s309, %s323
    %p325 = scmp.eq.s32.totalorder %s26, 0
    %p326 = por %p324, %p325
    %s327 = ssub.s32 %s20, %s27
    %p328 = scmp.eq.s32.totalorder %s327, 0
    %s330 = sadd.s32 %s329, 1
    %s331 = scalar_select %p328, %s329, %s330
    %p334 = pneg %p328
    %p335 = scmp.eq.s32.totalorder %s20, 1
    %p336 = por %p334, %p335
    %p337 = scmp.ne.s32.totalorder %s329, %s332
    %p338 = scmp.eq.s32.totalorder %s20, 0
    %p339 = por %p337, %p338
    %p340 = scmp.ne.s32.totalorder %s329, %s332
    %p341 = scmp.eq.s32.totalorder %s25, 1
    %p342 = por %p340, %p341
    %p343 = scmp.ne.s32.totalorder %s332, %s333
    %p344 = scmp.eq.s32.totalorder %s25, 0
    %p345 = por %p343, %p344
    %p346 = scmp.ne.s32.totalorder %s332, %s333
    %p347 = scmp.eq.s32.totalorder %s26, 1
    %p348 = por %p346, %p347
    %p350 = scmp.ne.s32.totalorder %s333, %s349
    %p351 = scmp.eq.s32.totalorder %s26, 0
    %p352 = por %p350, %p351
    %p353 = scmp.le.s32.totalorder 1, %s20
    %p354 = scmp.lt.s32.totalorder %s20, 3
    %p355 = pnand %p353, %p354
    %p356 = pneg %p355
    // Predicated region
    $region9: #{spresnet_forward.1} parent=5 // pred_check
      _
    $region10: #{spresnet_forward.1} parent=5 // pred_check_branch
      %358 = sbr.rel (%p355) target = $region12
    $region11: #{spresnet_forward.1} parent=5 // pred_region
      %s359 = ssub.s32 %s20, 1
      // Predicated region
      $region13: #{spresnet_forward.1} parent=11 // pred_check
        %p360 = pneg %p67
      $region14: #{spresnet_forward.1} parent=11 // pred_check_branch
        %362 = sbr.rel (%p360) target = $region16
      $region15: #{spresnet_forward.1} parent=11 // pred_region
        _
      $region16: #{spresnet_forward.1} parent=11 // pred_fallthru
        _
      // Predicated region
      $region17: #{spresnet_forward.1} parent=11 // pred_check
        %p363 = pneg %p88
      $region18: #{spresnet_forward.1} parent=11 // pred_check_branch
        %365 = sbr.rel (%p363) target = $region20
      $region19: #{spresnet_forward.1} parent=11 // pred_region
        _
      $region20: #{spresnet_forward.1} parent=11 // pred_fallthru
        _
      // Predicated region
      $region21: #{spresnet_forward.1} parent=11 // pred_check
        %p366 = pneg %p109
      $region22: #{spresnet_forward.1} parent=11 // pred_check_branch
        %368 = sbr.rel (%p366) target = $region24
      $region23: #{spresnet_forward.1} parent=11 // pred_region
        _
      $region24: #{spresnet_forward.1} parent=11 // pred_fallthru
        _
      // Predicated region
      $region25: #{spresnet_forward.1} parent=11 // pred_check
        %p369 = pneg %p130
      $region26: #{spresnet_forward.1} parent=11 // pred_check_branch
        %371 = sbr.rel (%p369) target = $region28
      $region27: #{spresnet_forward.1} parent=11 // pred_region
        _
      $region28: #{spresnet_forward.1} parent=11 // pred_fallthru
        _
      // Predicated region
      $region29: #{spresnet_forward.1} parent=11 // pred_check
        %p372 = pneg %p151
      $region30: #{spresnet_forward.1} parent=11 // pred_check_branch
        %374 = sbr.rel (%p372) target = $region32
      $region31: #{spresnet_forward.1} parent=11 // pred_region
        _
      $region32: #{spresnet_forward.1} parent=11 // pred_fallthru
        _
      // Predicated region
      $region33: #{spresnet_forward.1} parent=11 // pred_check
        %p375 = pneg %p172
      $region34: #{spresnet_forward.1} parent=11 // pred_check_branch
        %377 = sbr.rel (%p375) target = $region36
      $region35: #{spresnet_forward.1} parent=11 // pred_region
        _
      $region36: #{spresnet_forward.1} parent=11 // pred_fallthru
        _
      // Predicated region
      $region37: #{spresnet_forward.1} parent=11 // pred_check
        %p378 = pneg %p193
      $region38: #{spresnet_forward.1} parent=11 // pred_check_branch
        %380 = sbr.rel (%p378) target = $region40
      $region39: #{spresnet_forward.1} parent=11 // pred_region
        _
      $region40: #{spresnet_forward.1} parent=11 // pred_fallthru
        _
      // Predicated region
      $region41: #{spresnet_forward.1} parent=11 // pred_check
        %p381 = pneg %p214
      $region42: #{spresnet_forward.1} parent=11 // pred_check_branch
        %383 = sbr.rel (%p381) target = $region44
      $region43: #{spresnet_forward.1} parent=11 // pred_region
        _
      $region44: #{spresnet_forward.1} parent=11 // pred_fallthru
        _
      // Predicated region
      $region45: #{spresnet_forward.1} parent=11 // pred_check
        %p384 = pneg %p235
      $region46: #{spresnet_forward.1} parent=11 // pred_check_branch
        %386 = sbr.rel (%p384) target = $region48
      $region47: #{spresnet_forward.1} parent=11 // pred_region
        _
      $region48: #{spresnet_forward.1} parent=11 // pred_fallthru
        _
      // Predicated region
      $region49: #{spresnet_forward.1} parent=11 // pred_check
        %p387 = pneg %p256
      $region50: #{spresnet_forward.1} parent=11 // pred_check_branch
        %389 = sbr.rel (%p387) target = $region52
      $region51: #{spresnet_forward.1} parent=11 // pred_region
        _
      $region52: #{spresnet_forward.1} parent=11 // pred_fallthru
        _
      // Predicated region
      $region53: #{spresnet_forward.1} parent=11 // pred_check
        %p390 = pneg %p277
      $region54: #{spresnet_forward.1} parent=11 // pred_check_branch
        %392 = sbr.rel (%p390) target = $region56
      $region55: #{spresnet_forward.1} parent=11 // pred_region
        _
      $region56: #{spresnet_forward.1} parent=11 // pred_fallthru
        _
      // Predicated region
      $region57: #{spresnet_forward.1} parent=11 // pred_check
        %p393 = pneg %p298
      $region58: #{spresnet_forward.1} parent=11 // pred_check_branch
        %395 = sbr.rel (%p393) target = $region60
      $region59: #{spresnet_forward.1} parent=11 // pred_region
        _
      $region60: #{spresnet_forward.1} parent=11 // pred_fallthru
        _
      // Predicated region
      $region61: #{spresnet_forward.1} parent=11 // pred_check
        %p396 = pneg %p319
      $region62: #{spresnet_forward.1} parent=11 // pred_check_branch
        %398 = sbr.rel (%p396) target = $region64
      $region63: #{spresnet_forward.1} parent=11 // pred_region
        _
      $region64: #{spresnet_forward.1} parent=11 // pred_fallthru
        _
    $region12: #{spresnet_forward.1} parent=5 // pred_fallthru
      _
    %p399 = scmp.lt.s32.totalorder %s20, 2
    // Predicated region
    $region65: #{spresnet_forward.1} parent=5 // pred_check
      %p400 = pneg %p399
    $region66: #{spresnet_forward.1} parent=5 // pred_check_branch
      %402 = sbr.rel (%p400) target = $region68
    $region67: #{spresnet_forward.1} parent=5 // pred_region
      // Predicated region
      $region69: #{spresnet_forward.1} parent=67 // pred_check
        %p403 = pneg %p40
      $region70: #{spresnet_forward.1} parent=67 // pred_check_branch
        %405 = sbr.rel (%p403) target = $region72
      $region71: #{spresnet_forward.1} parent=67 // pred_region
        %p406 = scmp.lt.s32.totalorder %s20, 1
        %s407 = scalar_select %p406, %s20, 1
        %s408 = smul.addr %s407, 4
        %s409 = smul.addr %s408, 8
        %s410 = scalar_lea.vmem %s0, %s409
      $region72: #{spresnet_forward.1} parent=67 // pred_fallthru
        _
    $region68: #{spresnet_forward.1} parent=5 // pred_fallthru
      _
    %p411 = scmp.le.s32.totalorder 1, %s20
    %p412 = scmp.lt.s32.totalorder %s20, 3
    %p413 = pnand %p411, %p412
    %p414 = pneg %p413
    // Predicated region
    $region73: #{spresnet_forward.1} parent=5 // pred_check
      _
    $region74: #{spresnet_forward.1} parent=5 // pred_check_branch
      %416 = sbr.rel (%p413) target = $region76
    $region75: #{spresnet_forward.1} parent=5 // pred_region
      %s417 = ssub.s32 %s20, 1
      %p418 = scmp.lt.s32.totalorder %s25, 1
      %s419 = scalar_select %p418, %s25, 1
      %s420 = smul.addr %s419, 4
      %s421 = smul.addr %s420, 8
      %s422 = scalar_lea.vmem %s0, %s421
      %p423 = pneg %p46
      %p424 = pneg %p43
      %p425 = pneg %p67
      %p426 = pneg %p64
      %p427 = pneg %p88
      %p428 = pneg %p85
      %p429 = pneg %p109
      %p430 = pneg %p106
      %p431 = pneg %p130
      %p432 = pneg %p127
      %p433 = pneg %p151
      %p434 = pneg %p148
      %p435 = pneg %p172
      %p436 = pneg %p169
      %p437 = pneg %p193
      %p438 = pneg %p190
      %p439 = pneg %p214
      %p440 = pneg %p211
      %p441 = pneg %p235
      %p442 = pneg %p232
      %p443 = pneg %p256
      %p444 = pneg %p253
      %p445 = pneg %p277
      %p446 = pneg %p274
      %p447 = pneg %p298
      %p448 = pneg %p295
      %p449 = pneg %p319
      %p450 = pneg %p316
      %p451 = pneg %p345
      %p452 = pneg %p342
      %p453 = scmp.lt.s32.totalorder %s25, 1
      %s454 = scalar_select %p453, %s25, 1
      %s455 = smul.addr %s454, 4
      %s456 = smul.addr %s455, 8
      %s457 = scalar_lea.vmem %s14, %s456
      %p458 = scmp.lt.s32.totalorder %s25, 1
      %s459 = scalar_select %p458, %s25, 1
      %s460 = smul.addr %s459, 4
      %s461 = smul.addr %s460, 8
      %s462 = scalar_lea.vmem %s0, %s461
      %p463 = scmp.lt.s32.totalorder %s25, 1
      %s464 = scalar_select %p463, %s25, 1
      %s465 = smul.addr %s464, 4
      %s466 = smul.addr %s465, 8
      %s467 = scalar_lea.vmem %s14, %s466
      %v468 = vld [vmem:[%s1] sm:$0xff]
      %v469 = vld [vmem:[%s1 + $0x8] sm:$0xff]
      %v470 = vld [vmem:[%s1 + $0x10] sm:$0xff]
      %v471 = vld [vmem:[%s1 + $0x18] sm:$0xff]
      %v472 = vld [vmem:[%s462] sm:$0xff]
      %v473 = vld [vmem:[%s462 + $0x8] sm:$0xff]
      %v474 = vld [vmem:[%s462 + $0x10] sm:$0xff]
      %v475 = vld [vmem:[%s462 + $0x18] sm:$0xff]
      %v476 = vld [vmem:[%s2] sm:$0xff]
      %v477 = vld [vmem:[%s2 + $0x8] sm:$0xff]
      %478 = vrot.lane.b32.xlu0 %v472, 17
      %v479 = vpop.permute.xlu0 %478
      %480 = vrot.lane.b32.xlu0 %v473, 17
      %v481 = vpop.permute.xlu0 %480
      %482 = vrot.lane.b32.xlu0 %v474, 17
      %v483 = vpop.permute.xlu0 %482
      %484 = vrot.lane.b32.xlu0 %v475, 17
      %v485 = vpop.permute.xlu0 %484
      %v486 = vlaneseq
      %v487 = vand.u32 %v486, 127
      %vm488 = vcmp.lt.s32.totalorder %v487, 17
      %v489 = vsel %vm488, %v483, %v485
      %v490 = vsel %vm488, %v481, %v483
      %v491 = vsel %vm488, %v479, %v481
      %v492 = vsel %vm488, %v485, %v479
      %v493 = vlaneseq
      %v494 = vshrl.u32 %v493, 7
      %v495 = vsub.s32 0, %v494
      %v496 = vrot.slane %v468, %v495
      %v497 = vlaneseq
      %v498 = vshrl.u32 %v497, 7
      %v499 = vsub.s32 0, %v498
      %v500 = vrot.slane %v469, %v499
      %v501 = vlaneseq
      %v502 = vshrl.u32 %v501, 7
      %v503 = vsub.s32 0, %v502
      %v504 = vrot.slane %v470, %v503
      %v505 = vlaneseq
      %v506 = vshrl.u32 %v505, 7
      %v507 = vsub.s32 0, %v506
      %v508 = vrot.slane %v471, %v507
      %v509 = vmul.f32 %v492, %v496
      %v510 = vmul.f32 %v491, %v500
      %v511 = vmul.f32 %v490, %v504
      %v512 = vmul.f32 %v489, %v508
      %513 = vrot.lane.b32.xlu0 %v472, 16
      %v514 = vpop.permute.xlu0 %513
      %515 = vrot.lane.b32.xlu0 %v473, 16
      %v516 = vpop.permute.xlu0 %515
      %517 = vrot.lane.b32.xlu0 %v474, 16
      %v518 = vpop.permute.xlu0 %517
      %519 = vrot.lane.b32.xlu0 %v475, 16
      %v520 = vpop.permute.xlu0 %519
      %vm521 = vcmp.lt.s32.totalorder %v487, 16
      %v522 = vsel %vm521, %v518, %v520
      %v523 = vsel %vm521, %v516, %v518
      %v524 = vsel %vm521, %v514, %v516
      %v525 = vsel %vm521, %v520, %v514
      %v526 = vlaneseq
      %v527 = vshrl.u32 %v526, 7
      %v528 = vsub.s32 1, %v527
      %v529 = vrot.slane %v468, %v528
      %v530 = vlaneseq
      %v531 = vshrl.u32 %v530, 7
      %v532 = vsub.s32 1, %v531
      %v533 = vrot.slane %v469, %v532
      %v534 = vlaneseq
      %v535 = vshrl.u32 %v534, 7
      %v536 = vsub.s32 1, %v535
      %v537 = vrot.slane %v470, %v536
      %v538 = vlaneseq
      %v539 = vshrl.u32 %v538, 7
      %v540 = vsub.s32 1, %v539
      %v541 = vrot.slane %v471, %v540
      %v542 = vmul.f32 %v525, %v529
      %v543 = vmul.f32 %v524, %v533
      %v544 = vmul.f32 %v523, %v537
      %v545 = vmul.f32 %v522, %v541
      %546 = vrot.lane.b32.xlu0 %v472, 15
      %v547 = vpop.permute.xlu0 %546
      %548 = vrot.lane.b32.xlu0 %v473, 15
      %v549 = vpop.permute.xlu0 %548
      %550 = vrot.lane.b32.xlu0 %v474, 15
      %v551 = vpop.permute.xlu0 %550
      %552 = vrot.lane.b32.xlu0 %v475, 15
      %v553 = vpop.permute.xlu0 %552
      %vm554 = vcmp.lt.s32.totalorder %v487, 15
      %v555 = vsel %vm554, %v551, %v553
      %v556 = vsel %vm554, %v549, %v551
      %v557 = vsel %vm554, %v547, %v549
      %v558 = vsel %vm554, %v553, %v547
      %v559 = vlaneseq
      %v560 = vshrl.u32 %v559, 7
      %v561 = vsub.s32 2, %v560
      %v562 = vrot.slane %v468, %v561
      %v563 = vlaneseq
      %v564 = vshrl.u32 %v563, 7
      %v565 = vsub.s32 2, %v564
      %v566 = vrot.slane %v469, %v565
      %v567 = vlaneseq
      %v568 = vshrl.u32 %v567, 7
      %v569 = vsub.s32 2, %v568
      %v570 = vrot.slane %v470, %v569
      %v571 = vlaneseq
      %v572 = vshrl.u32 %v571, 7
      %v573 = vsub.s32 2, %v572
      %v574 = vrot.slane %v471, %v573
      %v575 = vmul.f32 %v558, %v562
      %v576 = vmul.f32 %v557, %v566
      %v577 = vmul.f32 %v556, %v570
      %v578 = vmul.f32 %v555, %v574
      %579 = vrot.lane.b32.xlu0 %v472, 1
      %v580 = vpop.permute.xlu0 %579
      %581 = vrot.lane.b32.xlu0 %v473, 1
      %v582 = vpop.permute.xlu0 %581
      %583 = vrot.lane.b32.xlu0 %v474, 1
      %v584 = vpop.permute.xlu0 %583
      %585 = vrot.lane.b32.xlu0 %v475, 1
      %v586 = vpop.permute.xlu0 %585
      %vm587 = vcmp.lt.s32.totalorder %v487, 1
      %v588 = vsel %vm587, %v584, %v586
      %v589 = vsel %vm587, %v582, %v584
      %v590 = vsel %vm587, %v580, %v582
      %v591 = vsel %vm587, %v586, %v580
      %v592 = vlaneseq
      %v593 = vshrl.u32 %v592, 7
      %v594 = vsub.s32 3, %v593
      %v595 = vrot.slane %v468, %v594
      %v596 = vlaneseq
      %v597 = vshrl.u32 %v596, 7
      %v598 = vsub.s32 3, %v597
      %v599 = vrot.slane %v469, %v598
      %v600 = vlaneseq
      %v601 = vshrl.u32 %v600, 7
      %v602 = vsub.s32 3, %v601
      %v603 = vrot.slane %v470, %v602
      %v604 = vlaneseq
      %v605 = vshrl.u32 %v604, 7
      %v606 = vsub.s32 3, %v605
      %v607 = vrot.slane %v471, %v606
      %v608 = vmul.f32 %v591, %v595
      %v609 = vmul.f32 %v590, %v599
      %v610 = vmul.f32 %v589, %v603
      %v611 = vmul.f32 %v588, %v607
      %612 = vrot.lane.b32.xlu0 %v472, 127
      %v613 = vpop.permute.xlu0 %612
      %614 = vrot.lane.b32.xlu0 %v473, 127
      %v615 = vpop.permute.xlu0 %614
      %616 = vrot.lane.b32.xlu0 %v474, 127
      %v617 = vpop.permute.xlu0 %616
      %618 = vrot.lane.b32.xlu0 %v475, 127
      %v619 = vpop.permute.xlu0 %618
      %vm620 = vcmp.lt.s32.totalorder %v487, 127
      %v621 = vsel %vm620, %v617, %v619
      %v622 = vsel %vm620, %v615, %v617
      %v623 = vsel %vm620, %v613, %v615
      %v624 = vsel %vm620, %v619, %v613
      %v625 = vlaneseq
      %v626 = vshrl.u32 %v625, 7
      %v627 = vsub.s32 4, %v626
      %v628 = vrot.slane %v468, %v627
      %v629 = vlaneseq
      %v630 = vshrl.u32 %v629, 7
      %v631 = vsub.s32 4, %v630
      %v632 = vrot.slane %v469, %v631
      %v633 = vlaneseq
      %v634 = vshrl.u32 %v633, 7
      %v635 = vsub.s32 4, %v634
      %v636 = vrot.slane %v470, %v635
      %v637 = vlaneseq
      %v638 = vshrl.u32 %v637, 7
      %v639 = vsub.s32 4, %v638
      %v640 = vrot.slane %v471, %v639
      %v641 = vmul.f32 %v623, %v628
      %v642 = vmul.f32 %v622, %v632
      %v643 = vmul.f32 %v621, %v636
      %v644 = vmul.f32 %v624, %v640
      %645 = vrot.lane.b32.xlu0 %v472, 113
      %v646 = vpop.permute.xlu0 %645
      %647 = vrot.lane.b32.xlu0 %v473, 113
      %v648 = vpop.permute.xlu0 %647
      %649 = vrot.lane.b32.xlu0 %v474, 113
      %v650 = vpop.permute.xlu0 %649
      %651 = vrot.lane.b32.xlu0 %v475, 113
      %v652 = vpop.permute.xlu0 %651
      %vm653 = vcmp.lt.s32.totalorder %v487, 113
      %v654 = vsel %vm653, %v650, %v652
      %v655 = vsel %vm653, %v648, %v650
      %v656 = vsel %vm653, %v646, %v648
      %v657 = vsel %vm653, %v652, %v646
      %v658 = vlaneseq
      %v659 = vshrl.u32 %v658, 7
      %v660 = vsub.s32 5, %v659
      %v661 = vrot.slane %v468, %v660
      %v662 = vlaneseq
      %v663 = vshrl.u32 %v662, 7
      %v664 = vsub.s32 5, %v663
      %v665 = vrot.slane %v469, %v664
      %v666 = vlaneseq
      %v667 = vshrl.u32 %v666, 7
      %v668 = vsub.s32 5, %v667
      %v669 = vrot.slane %v470, %v668
      %v670 = vlaneseq
      %v671 = vshrl.u32 %v670, 7
      %v672 = vsub.s32 5, %v671
      %v673 = vrot.slane %v471, %v672
      %v674 = vmul.f32 %v656, %v661
      %v675 = vmul.f32 %v655, %v665
      %v676 = vmul.f32 %v654, %v669
      %v677 = vmul.f32 %v657, %v673
      %678 = vrot.lane.b32.xlu0 %v472, 112
      %v679 = vpop.permute.xlu0 %678
      %680 = vrot.lane.b32.xlu0 %v473, 112
      %v681 = vpop.permute.xlu0 %680
      %682 = vrot.lane.b32.xlu0 %v474, 112
      %v683 = vpop.permute.xlu0 %682
      %684 = vrot.lane.b32.xlu0 %v475, 112
      %v685 = vpop.permute.xlu0 %684
      %vm686 = vcmp.lt.s32.totalorder %v487, 112
      %v687 = vsel %vm686, %v683, %v685
      %v688 = vsel %vm686, %v681, %v683
      %v689 = vsel %vm686, %v679, %v681
      %v690 = vsel %vm686, %v685, %v679
      %v691 = vlaneseq
      %v692 = vshrl.u32 %v691, 7
      %v693 = vsub.s32 6, %v692
      %v694 = vrot.slane %v468, %v693
      %v695 = vlaneseq
      %v696 = vshrl.u32 %v695, 7
      %v697 = vsub.s32 6, %v696
      %v698 = vrot.slane %v469, %v697
      %v699 = vlaneseq
      %v700 = vshrl.u32 %v699, 7
      %v701 = vsub.s32 6, %v700
      %v702 = vrot.slane %v470, %v701
      %v703 = vlaneseq
      %v704 = vshrl.u32 %v703, 7
      %v705 = vsub.s32 6, %v704
      %v706 = vrot.slane %v471, %v705
      %v707 = vmul.f32 %v689, %v694
      %v708 = vmul.f32 %v688, %v698
      %v709 = vmul.f32 %v687, %v702
      %v710 = vmul.f32 %v690, %v706
      %711 = vrot.lane.b32.xlu0 %v472, 111
      %v712 = vpop.permute.xlu0 %711
      %713 = vrot.lane.b32.xlu0 %v473, 111
      %v714 = vpop.permute.xlu0 %713
      %715 = vrot.lane.b32.xlu0 %v474, 111
      %v716 = vpop.permute.xlu0 %715
      %717 = vrot.lane.b32.xlu0 %v475, 111
      %v718 = vpop.permute.xlu0 %717
      %vm719 = vcmp.lt.s32.totalorder %v487, 111
      %v720 = vsel %vm719, %v716, %v718
      %v721 = vsel %vm719, %v714, %v716
      %v722 = vsel %vm719, %v712, %v714
      %v723 = vsel %vm719, %v718, %v712
      %v724 = vlaneseq
      %v725 = vshrl.u32 %v724, 7
      %v726 = vsub.s32 7, %v725
      %v727 = vrot.slane %v468, %v726
      %v728 = vlaneseq
      %v729 = vshrl.u32 %v728, 7
      %v730 = vsub.s32 7, %v729
      %v731 = vrot.slane %v469, %v730
      %v732 = vlaneseq
      %v733 = vshrl.u32 %v732, 7
      %v734 = vsub.s32 7, %v733
      %v735 = vrot.slane %v470, %v734
      %v736 = vlaneseq
      %v737 = vshrl.u32 %v736, 7
      %v738 = vsub.s32 7, %v737
      %v739 = vrot.slane %v471, %v738
      %v740 = vmul.f32 %v722, %v727
      %v741 = vmul.f32 %v721, %v731
      %v742 = vmul.f32 %v720, %v735
      %v743 = vmul.f32 %v723, %v739
      %v744 = vld [vmem:[%s3] sm:$0xff]
      %v745 = vld [vmem:[%s3 + $0x8] sm:$0xff]
      %747 = vset.pattern.permute.xlu0 0
      %748 = vperm.xlu0 %747, %v744
      %v749 = vpop.permute.xlu0 %748
      %752 = vset.pattern.permute.xlu0 0
      %753 = vperm.xlu0 %752, %v745
      %v754 = vpop.permute.xlu0 %753
      %vm756 = vcmask 588800
      %v758 = vsel %vm756, %v476, 0
      %v761 = vsel %vm756, %v477, 0
      %763 = vmatprep.subr.mxu0 %v510
      %764 = vmatpush1.msra.mxu0 %v509
      %765 = vmatprep.subr.mxu0 %v543
      %766 = vmatpush1.msra.mxu0 %v542
      %767 = vmatprep.subr.mxu0 %v576
      %768 = vmatpush1.msra.mxu0 %v575
      %769 = vmatprep.subr.mxu0 %v609
      %770 = vmatpush1.msra.mxu0 %v608
      %771 = vmatprep.subr.mxu0 %v473
      %772 = vmatpush1.msra.mxu0 %v472
      %773 = vmatprep.subr.mxu0 %v642
      %774 = vmatpush1.msra.mxu0 %v641
      %775 = vmatprep.subr.mxu0 %v675
      %776 = vmatpush1.msra.mxu0 %v674
      %777 = vmatprep.subr.mxu0 %v708
      %778 = vmatpush1.msra.mxu0 %v707
      %779 = vmatprep.subr.mxu0 %v741
      %780 = vmatpush1.msra.mxu0 %v740
      %781 = vmatprep.subr.mxu0 0.0
      %782 = vmatpush1.msra.mxu0 0.0
      %783 = vmatprep.subr.mxu0 0.0
      %784 = vmatpush1.msra.mxu0 0.0
      %785 = vmatprep.subr.mxu0 0.0
      %786 = vmatpush1.msra.mxu0 0.0
      %787 = vmatprep.subr.mxu0 0.0
      %788 = vmatpush1.msra.mxu0 0.0
      %789 = vmatprep.subr.mxu0 0.0
      %790 = vmatpush1.msra.mxu0 0.0
      %791 = vmatprep.subr.mxu0 0.0
      %792 = vmatpush1.msra.mxu0 0.0
      %793 = vmatprep.subr.mxu0 0.0
      %794 = vmatpush1.msra.mxu0 0.0
      %795 = vmatprep.subr.mxu0 0.0
      %796 = vmatpush1.msra.mxu0 0.0
      %797 = vmatprep.subr.mxu0 0.0
      %798 = vmatpush1.msra.mxu0 0.0
      %799 = vmatprep.subr.mxu0 0.0
      %800 = vmatpush1.msra.mxu0 0.0
      %801 = vmatprep.subr.mxu0 0.0
      %802 = vmatpush1.msra.mxu0 0.0
      %803 = vmatprep.subr.mxu0 0.0
      %804 = vmatpush1.msra.mxu0 0.0
      %805 = vmatprep.subr.mxu0 0.0
      %806 = vmatpush1.msra.mxu0 0.0
      %807 = vmatprep.subr.mxu0 0.0
      %808 = vmatpush1.msra.mxu0 0.0
      %809 = vmatprep.subr.mxu0 0.0
      %810 = vmatpush1.msra.mxu0 0.0
      %811 = vmatprep.subr.mxu0 0.0
      %812 = vmatpush1.msra.mxu0 0.0
      %813 = vmatprep.subr.mxu0 0.0
      %814 = vmatpush1.msra.mxu0 0.0
      %815 = vmatprep.subr.mxu0 0.0
      %816 = vmatpush1.msra.mxu0 0.0
      %817 = vmatprep.subr.mxu0 0.0
      %818 = vmatpush1.msra.mxu0 0.0
      %819 = vmatprep.subr.mxu0 0.0
      %820 = vmatpush1.msra.mxu0 0.0
      %821 = vmatprep.subr.mxu0 0.0
      %822 = vmatpush1.msra.mxu0 0.0
      %823 = vmatprep.subr.mxu0 0.0
      %824 = vmatpush1.msra.mxu0 0.0
      %825 = vmatprep.subr.mxu0 0.0
      %826 = vmatpush1.msra.mxu0 0.0
      %827 = vmatprep.mubr.f32.mxu0 0.0
      %828 = vmatmul.mubr.f32.gmra.mrb[0].mxu0 %v758
      %v829 = vpop.f32.mrb[0].mxu0
      %v830 = vadd.f32 %v749, %v829
      %v831 = vpop.f32.mrb[0].mxu0
      %v832 = vadd.f32 %v749, %v831
      %833 = vmatprep.mubr.f32.mxu0 0.0
      %834 = vmatmul.mubr.f32.gmra.mrb[0].mxu0 %v761
      %v835 = vpop.f32.mrb[0].mxu0
      %v836 = vadd.f32 %v754, %v835
      %v837 = vpop.f32.mrb[0].mxu0
      %v838 = vadd.f32 %v754, %v837
      %839 = vdwg.mxu0
      %840 = vmatprep.subr.mxu0 %v512
      %841 = vmatpush1.msra.mxu0 %v511
      %842 = vmatprep.subr.mxu0 %v545
      %843 = vmatpush1.msra.mxu0 %v544
      %844 = vmatprep.subr.mxu0 %v578
      %845 = vmatpush1.msra.mxu0 %v577
      %846 = vmatprep.subr.mxu0 %v611
      %847 = vmatpush1.msra.mxu0 %v610
      %848 = vmatprep.subr.mxu0 %v475
      %849 = vmatpush1.msra.mxu0 %v474
      %850 = vmatprep.subr.mxu0 %v644
      %851 = vmatpush1.msra.mxu0 %v643
      %852 = vmatprep.subr.mxu0 %v677
      %853 = vmatpush1.msra.mxu0 %v676
      %854 = vmatprep.subr.mxu0 %v710
      %855 = vmatpush1.msra.mxu0 %v709
      %856 = vmatprep.subr.mxu0 %v743
      %857 = vmatpush1.msra.mxu0 %v742
      %858 = vmatprep.subr.mxu0 0.0
      %859 = vmatpush1.msra.mxu0 0.0
      %860 = vmatprep.subr.mxu0 0.0
      %861 = vmatpush1.msra.mxu0 0.0
      %862 = vmatprep.subr.mxu0 0.0
      %863 = vmatpush1.msra.mxu0 0.0
      %864 = vmatprep.subr.mxu0 0.0
      %865 = vmatpush1.msra.mxu0 0.0
      %866 = vmatprep.subr.mxu0 0.0
      %867 = vmatpush1.msra.mxu0 0.0
      %868 = vmatprep.subr.mxu0 0.0
      %869 = vmatpush1.msra.mxu0 0.0
      %870 = vmatprep.subr.mxu0 0.0
      %871 = vmatpush1.msra.mxu0 0.0
      %872 = vmatprep.subr.mxu0 0.0
      %873 = vmatpush1.msra.mxu0 0.0
      %874 = vmatprep.subr.mxu0 0.0
      %875 = vmatpush1.msra.mxu0 0.0
      %876 = vmatprep.subr.mxu0 0.0
      %877 = vmatpush1.msra.mxu0 0.0
      %878 = vmatprep.subr.mxu0 0.0
      %879 = vmatpush1.msra.mxu0 0.0
      %880 = vmatprep.subr.mxu0 0.0
      %881 = vmatpush1.msra.mxu0 0.0
      %882 = vmatprep.subr.mxu0 0.0
      %883 = vmatpush1.msra.mxu0 0.0
      %884 = vmatprep.subr.mxu0 0.0
      %885 = vmatpush1.msra.mxu0 0.0
      %886 = vmatprep.subr.mxu0 0.0
      %887 = vmatpush1.msra.mxu0 0.0
      %888 = vmatprep.subr.mxu0 0.0
      %889 = vmatpush1.msra.mxu0 0.0
      %890 = vmatprep.subr.mxu0 0.0
      %891 = vmatpush1.msra.mxu0 0.0
      %892 = vmatprep.subr.mxu0 0.0
      %893 = vmatpush1.msra.mxu0 0.0
      %894 = vmatprep.subr.mxu0 0.0
      %895 = vmatpush1.msra.mxu0 0.0
      %896 = vmatprep.subr.mxu0 0.0
      %897 = vmatpush1.msra.mxu0 0.0
      %898 = vmatprep.subr.mxu0 0.0
      %899 = vmatpush1.msra.mxu0 0.0
      %900 = vmatprep.subr.mxu0 0.0
      %901 = vmatpush1.msra.mxu0 0.0
      %902 = vmatprep.subr.mxu0 0.0
      %903 = vmatpush1.msra.mxu0 0.0
      %904 = vmatprep.mubr.f32.mxu0 0.0
      %905 = vmatmul.mubr.f32.gmra.mrb[0].mxu0 %v758
      %v906 = vpop.f32.mrb[0].mxu0
      %v907 = vadd.f32 %v749, %v906
      %v908 = vpop.f32.mrb[0].mxu0
      %v909 = vadd.f32 %v749, %v908
      %910 = vmatprep.mubr.f32.mxu0 0.0
      %911 = vmatmul.mubr.f32.gmra.mrb[0].mxu0 %v761
      %v912 = vpop.f32.mrb[0].mxu0
      %v913 = vadd.f32 %v754, %v912
      %v914 = vpop.f32.mrb[0].mxu0
      %v915 = vadd.f32 %v754, %v914
      %916 = vdwg.mxu0
      %v917 = vmax.f32 %v830, 0.0
      %v918 = vmax.f32 %v832, 0.0
      %v919 = vmax.f32 %v907, 0.0
      %v920 = vmax.f32 %v909, 0.0
      %v921 = vld [vmem:[%s4] sm:$0xff]
      %922 = vrot.lane.b32.xlu0 %v917, 17
      %v923 = vpop.permute.xlu0 %922
      %924 = vrot.lane.b32.xlu0 %v918, 17
      %v925 = vpop.permute.xlu0 %924
      %926 = vrot.lane.b32.xlu0 %v919, 17
      %v927 = vpop.permute.xlu0 %926
      %928 = vrot.lane.b32.xlu0 %v920, 17
      %v929 = vpop.permute.xlu0 %928
      %v930 = vsel %vm488, %v927, %v929
      %v931 = vsel %vm488, %v925, %v927
      %v932 = vsel %vm488, %v923, %v925
      %v933 = vsel %vm488, %v929, %v923
      %v934 = vmul.f32 %v933, %v496
      %v935 = vmul.f32 %v932, %v500
      %v936 = vmul.f32 %v931, %v504
      %v937 = vmul.f32 %v930, %v508
      %938 = vrot.lane.b32.xlu0 %v917, 16
      %v939 = vpop.permute.xlu0 %938
      %940 = vrot.lane.b32.xlu0 %v918, 16
      %v941 = vpop.permute.xlu0 %940
      %942 = vrot.lane.b32.xlu0 %v919, 16
      %v943 = vpop.permute.xlu0 %942
      %944 = vrot.lane.b32.xlu0 %v920, 16
      %v945 = vpop.permute.xlu0 %944
      %v946 = vsel %vm521, %v943, %v945
      %v947 = vsel %vm521, %v941, %v943
      %v948 = vsel %vm521, %v939, %v941
      %v949 = vsel %vm521, %v945, %v939
      %v950 = vmul.f32 %v949, %v529
      %v951 = vmul.f32 %v948, %v533
      %v952 = vmul.f32 %v947, %v537
      %v953 = vmul.f32 %v946, %v541
      %954 = vrot.lane.b32.xlu0 %v917, 15
      %v955 = vpop.permute.xlu0 %954
      %956 = vrot.lane.b32.xlu0 %v918, 15
      %v957 = vpop.permute.xlu0 %956
      %958 = vrot.lane.b32.xlu0 %v919, 15
      %v959 = vpop.permute.xlu0 %958
      %960 = vrot.lane.b32.xlu0 %v920, 15
      %v961 = vpop.permute.xlu0 %960
      %v962 = vsel %vm554, %v959, %v961
      %v963 = vsel %vm554, %v957, %v959
      %v964 = vsel %vm554, %v955, %v957
      %v965 = vsel %vm554, %v961, %v955
      %v966 = vmul.f32 %v965, %v562
      %v967 = vmul.f32 %v964, %v566
      %v968 = vmul.f32 %v963, %v570
      %v969 = vmul.f32 %v962, %v574
      %970 = vrot.lane.b32.xlu0 %v917, 1
      %v971 = vpop.permute.xlu0 %970
      %972 = vrot.lane.b32.xlu0 %v918, 1
      %v973 = vpop.permute.xlu0 %972
      %974 = vrot.lane.b32.xlu0 %v919, 1
      %v975 = vpop.permute.xlu0 %974
      %976 = vrot.lane.b32.xlu0 %v920, 1
      %v977 = vpop.permute.xlu0 %976
      %v978 = vsel %vm587, %v975, %v977
      %v979 = vsel %vm587, %v973, %v975
      %v980 = vsel %vm587, %v971, %v973
      %v981 = vsel %vm587, %v977, %v971
      %v982 = vmul.f32 %v981, %v595
      %v983 = vmul.f32 %v980, %v599
      %v984 = vmul.f32 %v979, %v603
      %v985 = vmul.f32 %v978, %v607
      %986 = vrot.lane.b32.xlu0 %v917, 127
      %v987 = vpop.permute.xlu0 %986
      %988 = vrot.lane.b32.xlu0 %v918, 127
      %v989 = vpop.permute.xlu0 %988
      %990 = vrot.lane.b32.xlu0 %v919, 127
      %v991 = vpop.permute.xlu0 %990
      %992 = vrot.lane.b32.xlu0 %v920, 127
      %v993 = vpop.permute.xlu0 %992
      %v994 = vsel %vm620, %v991, %v993
      %v995 = vsel %vm620, %v989, %v991
      %v996 = vsel %vm620, %v987, %v989
      %v997 = vsel %vm620, %v993, %v987
      %v998 = vmul.f32 %v996, %v628
      %v999 = vmul.f32 %v995, %v632
      %v1000 = vmul.f32 %v994, %v636
      %v1001 = vmul.f32 %v997, %v640
      %1002 = vrot.lane.b32.xlu0 %v917, 113
      %v1003 = vpop.permute.xlu0 %1002
      %1004 = vrot.lane.b32.xlu0 %v918, 113
      %v1005 = vpop.permute.xlu0 %1004
      %1006 = vrot.lane.b32.xlu0 %v919, 113
      %v1007 = vpop.permute.xlu0 %1006
      %1008 = vrot.lane.b32.xlu0 %v920, 113
      %v1009 = vpop.permute.xlu0 %1008
      %v1010 = vsel %vm653, %v1007, %v1009
      %v1011 = vsel %vm653, %v1005, %v1007
      %v1012 = vsel %vm653, %v1003, %v1005
      %v1013 = vsel %vm653, %v1009, %v1003
      %v1014 = vmul.f32 %v1012, %v661
      %v1015 = vmul.f32 %v1011, %v665
      %v1016 = vmul.f32 %v1010, %v669
      %v1017 = vmul.f32 %v1013, %v673
      %1018 = vrot.lane.b32.xlu0 %v917, 112
      %v1019 = vpop.permute.xlu0 %1018
      %1020 = vrot.lane.b32.xlu0 %v918, 112
      %v1021 = vpop.permute.xlu0 %1020
      %1022 = vrot.lane.b32.xlu0 %v919, 112
      %v1023 = vpop.permute.xlu0 %1022
      %1024 = vrot.lane.b32.xlu0 %v920, 112
      %v1025 = vpop.permute.xlu0 %1024
      %v1026 = vsel %vm686, %v1023, %v1025
      %v1027 = vsel %vm686, %v1021, %v1023
      %v1028 = vsel %vm686, %v1019, %v1021
      %v1029 = vsel %vm686, %v1025, %v1019
      %v1030 = vmul.f32 %v1028, %v694
      %v1031 = vmul.f32 %v1027, %v698
      %v1032 = vmul.f32 %v1026, %v702
      %v1033 = vmul.f32 %v1029, %v706
      %1034 = vrot.lane.b32.xlu0 %v917, 111
      %v1035 = vpop.permute.xlu0 %1034
      %1036 = vrot.lane.b32.xlu0 %v918, 111
      %v1037 = vpop.permute.xlu0 %1036
      %1038 = vrot.lane.b32.xlu0 %v919, 111
      %v1039 = vpop.permute.xlu0 %1038
      %1040 = vrot.lane.b32.xlu0 %v920, 111
      %v1041 = vpop.permute.xlu0 %1040
      %v1042 = vsel %vm719, %v1039, %v1041
      %v1043 = vsel %vm719, %v1037, %v1039
      %v1044 = vsel %vm719, %v1035, %v1037
      %v1045 = vsel %vm719, %v1041, %v1035
      %v1046 = vmul.f32 %v1044, %v727
      %v1047 = vmul.f32 %v1043, %v731
      %v1048 = vmul.f32 %v1042, %v735
      %v1049 = vmul.f32 %v1045, %v739
      %v1050 = vld [vmem:[%s5] sm:$0xff]
      %1052 = vset.pattern.permute.xlu0 0
      %1053 = vperm.xlu0 %1052, %v1050
      %v1054 = vpop.permute.xlu0 %1053
      %v1057 = vsel %vm756, %v921, 0
      %1059 = vmatprep.subr.mxu0 %v935
      %1060 = vmatpush1.msra.mxu0 %v934
      %1061 = vmatprep.subr.mxu0 %v951
      %1062 = vmatpush1.msra.mxu0 %v950
      %1063 = vmatprep.subr.mxu0 %v967
      %1064 = vmatpush1.msra.mxu0 %v966
      %1065 = vmatprep.subr.mxu0 %v983
      %1066 = vmatpush1.msra.mxu0 %v982
      %1067 = vmatprep.subr.mxu0 %v918
      %1068 = vmatpush1.msra.mxu0 %v917
      %1069 = vmatprep.subr.mxu0 %v999
      %1070 = vmatpush1.msra.mxu0 %v998
      %1071 = vmatprep.subr.mxu0 %v1015
      %1072 = vmatpush1.msra.mxu0 %v1014
      %1073 = vmatprep.subr.mxu0 %v1031
      %1074 = vmatpush1.msra.mxu0 %v1030
      %1075 = vmatprep.subr.mxu0 %v1047
      %1076 = vmatpush1.msra.mxu0 %v1046
      %1077 = vmatprep.subr.mxu0 0.0
      %1078 = vmatpush1.msra.mxu0 0.0
      %1079 = vmatprep.subr.mxu0 0.0
      %1080 = vmatpush1.msra.mxu0 0.0
      %1081 = vmatprep.subr.mxu0 0.0
      %1082 = vmatpush1.msra.mxu0 0.0
      %1083 = vmatprep.subr.mxu0 0.0
      %1084 = vmatpush1.msra.mxu0 0.0
      %1085 = vmatprep.subr.mxu0 0.0
      %1086 = vmatpush1.msra.mxu0 0.0
      %1087 = vmatprep.subr.mxu0 0.0
      %1088 = vmatpush1.msra.mxu0 0.0
      %1089 = vmatprep.subr.mxu0 0.0
      %1090 = vmatpush1.msra.mxu0 0.0
      %1091 = vmatprep.subr.mxu0 0.0
      %1092 = vmatpush1.msra.mxu0 0.0
      %1093 = vmatprep.subr.mxu0 0.0
      %1094 = vmatpush1.msra.mxu0 0.0
      %1095 = vmatprep.subr.mxu0 0.0
      %1096 = vmatpush1.msra.mxu0 0.0
      %1097 = vmatprep.subr.mxu0 0.0
      %1098 = vmatpush1.msra.mxu0 0.0
      %1099 = vmatprep.subr.mxu0 0.0
      %1100 = vmatpush1.msra.mxu0 0.0
      %1101 = vmatprep.subr.mxu0 0.0
      %1102 = vmatpush1.msra.mxu0 0.0
      %1103 = vmatprep.subr.mxu0 0.0
      %1104 = vmatpush1.msra.mxu0 0.0
      %1105 = vmatprep.subr.mxu0 0.0
      %1106 = vmatpush1.msra.mxu0 0.0
      %1107 = vmatprep.subr.mxu0 0.0
      %1108 = vmatpush1.msra.mxu0 0.0
      %1109 = vmatprep.subr.mxu0 0.0
      %1110 = vmatpush1.msra.mxu0 0.0
      %1111 = vmatprep.subr.mxu0 0.0
      %1112 = vmatpush1.msra.mxu0 0.0
      %1113 = vmatprep.subr.mxu0 0.0
      %1114 = vmatpush1.msra.mxu0 0.0
      %1115 = vmatprep.subr.mxu0 0.0
      %1116 = vmatpush1.msra.mxu0 0.0
      %1117 = vmatprep.subr.mxu0 0.0
      %1118 = vmatpush1.msra.mxu0 0.0
      %1119 = vmatprep.subr.mxu0 0.0
      %1120 = vmatpush1.msra.mxu0 0.0
      %1121 = vmatprep.subr.mxu0 0.0
      %1122 = vmatpush1.msra.mxu0 0.0
      %1123 = vmatprep.mubr.f32.mxu0 0.0
      %1124 = vmatmul.mubr.f32.gmra.mrb[0].mxu0 %v1057
      %v1125 = vpop.f32.mrb[0].mxu0
      %v1126 = vadd.f32 %v1054, %v1125
      %v1127 = vpop.f32.mrb[0].mxu0
      %v1128 = vadd.f32 %v1054, %v1127
      %1129 = vdwg.mxu0
      %1130 = vmatprep.subr.mxu0 %v937
      %1131 = vmatpush1.msra.mxu0 %v936
      %1132 = vmatprep.subr.mxu0 %v953
      %1133 = vmatpush1.msra.mxu0 %v952
      %1134 = vmatprep.subr.mxu0 %v969
      %1135 = vmatpush1.msra.mxu0 %v968
      %1136 = vmatprep.subr.mxu0 %v985
      %1137 = vmatpush1.msra.mxu0 %v984
      %1138 = vmatprep.subr.mxu0 %v920
      %1139 = vmatpush1.msra.mxu0 %v919
      %1140 = vmatprep.subr.mxu0 %v1001
      %1141 = vmatpush1.msra.mxu0 %v1000
      %1142 = vmatprep.subr.mxu0 %v1017
      %1143 = vmatpush1.msra.mxu0 %v1016
      %1144 = vmatprep.subr.mxu0 %v1033
      %1145 = vmatpush1.msra.mxu0 %v1032
      %1146 = vmatprep.subr.mxu0 %v1049
      %1147 = vmatpush1.msra.mxu0 %v1048
      %1148 = vmatprep.subr.mxu0 0.0
      %1149 = vmatpush1.msra.mxu0 0.0
      %1150 = vmatprep.subr.mxu0 0.0
      %1151 = vmatpush1.msra.mxu0 0.0
      %1152 = vmatprep.subr.mxu0 0.0
      %1153 = vmatpush1.msra.mxu0 0.0
      %1154 = vmatprep.subr.mxu0 0.0
      %1155 = vmatpush1.msra.mxu0 0.0
      %1156 = vmatprep.subr.mxu0 0.0
      %1157 = vmatpush1.msra.mxu0 0.0
      %1158 = vmatprep.subr.mxu0 0.0
      %1159 = vmatpush1.msra.mxu0 0.0
      %1160 = vmatprep.subr.mxu0 0.0
      %1161 = vmatpush1.msra.mxu0 0.0
      %1162 = vmatprep.subr.mxu0 0.0
      %1163 = vmatpush1.msra.mxu0 0.0
      %1164 = vmatprep.subr.mxu0 0.0
      %1165 = vmatpush1.msra.mxu0 0.0
      %1166 = vmatprep.subr.mxu0 0.0
      %1167 = vmatpush1.msra.mxu0 0.0
      %1168 = vmatprep.subr.mxu0 0.0
      %1169 = vmatpush1.msra.mxu0 0.0
      %1170 = vmatprep.subr.mxu0 0.0
      %1171 = vmatpush1.msra.mxu0 0.0
      %1172 = vmatprep.subr.mxu0 0.0
      %1173 = vmatpush1.msra.mxu0 0.0
      %1174 = vmatprep.subr.mxu0 0.0
      %1175 = vmatpush1.msra.mxu0 0.0
      %1176 = vmatprep.subr.mxu0 0.0
      %1177 = vmatpush1.msra.mxu0 0.0
      %1178 = vmatprep.subr.mxu0 0.0
      %1179 = vmatpush1.msra.mxu0 0.0
      %1180 = vmatprep.subr.mxu0 0.0
      %1181 = vmatpush1.msra.mxu0 0.0
      %1182 = vmatprep.subr.mxu0 0.0
      %1183 = vmatpush1.msra.mxu0 0.0
      %1184 = vmatprep.subr.mxu0 0.0
      %1185 = vmatpush1.msra.mxu0 0.0
      %1186 = vmatprep.subr.mxu0 0.0
      %1187 = vmatpush1.msra.mxu0 0.0
      %1188 = vmatprep.subr.mxu0 0.0
      %1189 = vmatpush1.msra.mxu0 0.0
      %1190 = vmatprep.subr.mxu0 0.0
      %1191 = vmatpush1.msra.mxu0 0.0
      %1192 = vmatprep.subr.mxu0 0.0
      %1193 = vmatpush1.msra.mxu0 0.0
      %1194 = vmatprep.mubr.f32.mxu0 0.0
      %1195 = vmatmul.mubr.f32.gmra.mrb[0].mxu0 %v1057
      %v1196 = vpop.f32.mrb[0].mxu0
      %v1197 = vadd.f32 %v1054, %v1196
      %v1198 = vpop.f32.mrb[0].mxu0
      %v1199 = vadd.f32 %v1054, %v1198
      %1200 = vdwg.mxu0
      %v1201 = vadd.f32 %v1126, %v836
      %v1202 = vadd.f32 %v1128, %v838
      %v1203 = vadd.f32 %v1197, %v913
      %v1204 = vadd.f32 %v1199, %v915
      %v1205 = vmax.f32 %v1201, 0.0
      %v1206 = vmax.f32 %v1202, 0.0
      %v1207 = vmax.f32 %v1203, 0.0
      %v1208 = vmax.f32 %v1204, 0.0
      %v1209 = vld [vmem:[%s6] sm:$0xff]
      %v1210 = vld [vmem:[%s6 + $0x8] sm:$0xff]
      %v1211 = vld [vmem:[%s6 + $0x10] sm:$0xff]
      %1212 = vrot.lane.b32.xlu0 %v1205, 17
      %v1213 = vpop.permute.xlu0 %1212
      %1214 = vrot.lane.b32.xlu0 %v1206, 17
      %v1215 = vpop.permute.xlu0 %1214
      %1216 = vrot.lane.b32.xlu0 %v1207, 17
      %v1217 = vpop.permute.xlu0 %1216
      %1218 = vrot.lane.b32.xlu0 %v1208, 17
      %v1219 = vpop.permute.xlu0 %1218
      %v1220 = vsel %vm488, %v1217, %v1219
      %v1221 = vsel %vm488, %v1215, %v1217
      %v1222 = vsel %vm488, %v1213, %v1215
      %v1223 = vsel %vm488, %v1219, %v1213
      %v1224 = vmul.f32 %v1223, %v496
      %v1225 = vmul.f32 %v1222, %v500
      %v1226 = vmul.f32 %v1221, %v504
      %v1227 = vmul.f32 %v1220, %v508
      %1228 = vrot.lane.b32.xlu0 %v1205, 16
      %v1229 = vpop.permute.xlu0 %1228
      %1230 = vrot.lane.b32.xlu0 %v1206, 16
      %v1231 = vpop.permute.xlu0 %1230
      %1232 = vrot.lane.b32.xlu0 %v1207, 16
      %v1233 = vpop.permute.xlu0 %1232
      %1234 = vrot.lane.b32.xlu0 %v1208, 16
      %v1235 = vpop.permute.xlu0 %1234
      %v1236 = vsel %vm521, %v1233, %v1235
      %v1237 = vsel %vm521, %v1231, %v1233
      %v1238 = vsel %vm521, %v1229, %v1231
      %v1239 = vsel %vm521, %v1235, %v1229
      %v1240 = vmul.f32 %v1239, %v529
      %v1241 = vmul.f32 %v1238, %v533
      %v1242 = vmul.f32 %v1237, %v537
      %v1243 = vmul.f32 %v1236, %v541
      %1244 = vrot.lane.b32.xlu0 %v1205, 15
      %v1245 = vpop.permute.xlu0 %1244
      %1246 = vrot.lane.b32.xlu0 %v1206, 15
      %v1247 = vpop.permute.xlu0 %1246
      %1248 = vrot.lane.b32.xlu0 %v1207, 15
      %v1249 = vpop.permute.xlu0 %1248
      %1250 = vrot.lane.b32.xlu0 %v1208, 15
      %v1251 = vpop.permute.xlu0 %1250
      %v1252 = vsel %vm554, %v1249, %v1251
      %v1253 = vsel %vm554, %v1247, %v1249
      %v1254 = vsel %vm554, %v1245, %v1247
      %v1255 = vsel %vm554, %v1251, %v1245
      %v1256 = vmul.f32 %v1255, %v562
      %v1257 = vmul.f32 %v1254, %v566
      %v1258 = vmul.f32 %v1253, %v570
      %v1259 = vmul.f32 %v1252, %v574
      %1260 = vrot.lane.b32.xlu0 %v1205, 1
      %v1261 = vpop.permute.xlu0 %1260
      %1262 = vrot.lane.b32.xlu0 %v1206, 1
      %v1263 = vpop.permute.xlu0 %1262
      %1264 = vrot.lane.b32.xlu0 %v1207, 1
      %v1265 = vpop.permute.xlu0 %1264
      %1266 = vrot.lane.b32.xlu0 %v1208, 1
      %v1267 = vpop.permute.xlu0 %1266
      %v1268 = vsel %vm587, %v1265, %v1267
      %v1269 = vsel %vm587, %v1263, %v1265
      %v1270 = vsel %vm587, %v1261, %v1263
      %v1271 = vsel %vm587, %v1267, %v1261
      %v1272 = vmul.f32 %v1271, %v595
      %v1273 = vmul.f32 %v1270, %v599
      %v1274 = vmul.f32 %v1269, %v603
      %v1275 = vmul.f32 %v1268, %v607
      %1276 = vrot.lane.b32.xlu0 %v1205, 127
      %v1277 = vpop.permute.xlu0 %1276
      %1278 = vrot.lane.b32.xlu0 %v1206, 127
      %v1279 = vpop.permute.xlu0 %1278
      %1280 = vrot.lane.b32.xlu0 %v1207, 127
      %v1281 = vpop.permute.xlu0 %1280
      %1282 = vrot.lane.b32.xlu0 %v1208, 127
      %v1283 = vpop.permute.xlu0 %1282
      %v1284 = vsel %vm620, %v1281, %v1283
      %v1285 = vsel %vm620, %v1279, %v1281
      %v1286 = vsel %vm620, %v1277, %v1279
      %v1287 = vsel %vm620, %v1283, %v1277
      %v1288 = vmul.f32 %v1286, %v628
      %v1289 = vmul.f32 %v1285, %v632
      %v1290 = vmul.f32 %v1284, %v636
      %v1291 = vmul.f32 %v1287, %v640
      %1292 = vrot.lane.b32.xlu0 %v1205, 113
      %v1293 = vpop.permute.xlu0 %1292
      %1294 = vrot.lane.b32.xlu0 %v1206, 113
      %v1295 = vpop.permute.xlu0 %1294
      %1296 = vrot.lane.b32.xlu0 %v1207, 113
      %v1297 = vpop.permute.xlu0 %1296
      %1298 = vrot.lane.b32.xlu0 %v1208, 113
      %v1299 = vpop.permute.xlu0 %1298
      %v1300 = vsel %vm653, %v1297, %v1299
      %v1301 = vsel %vm653, %v1295, %v1297
      %v1302 = vsel %vm653, %v1293, %v1295
      %v1303 = vsel %vm653, %v1299, %v1293
      %v1304 = vmul.f32 %v1302, %v661
      %v1305 = vmul.f32 %v1301, %v665
      %v1306 = vmul.f32 %v1300, %v669
      %v1307 = vmul.f32 %v1303, %v673
      %1308 = vrot.lane.b32.xlu0 %v1205, 112
      %v1309 = vpop.permute.xlu0 %1308
      %1310 = vrot.lane.b32.xlu0 %v1206, 112
      %v1311 = vpop.permute.xlu0 %1310
      %1312 = vrot.lane.b32.xlu0 %v1207, 112
      %v1313 = vpop.permute.xlu0 %1312
      %1314 = vrot.lane.b32.xlu0 %v1208, 112
      %v1315 = vpop.permute.xlu0 %1314
      %v1316 = vsel %vm686, %v1313, %v1315
      %v1317 = vsel %vm686, %v1311, %v1313
      %v1318 = vsel %vm686, %v1309, %v1311
      %v1319 = vsel %vm686, %v1315, %v1309
      %v1320 = vmul.f32 %v1318, %v694
      %v1321 = vmul.f32 %v1317, %v698
      %v1322 = vmul.f32 %v1316, %v702
      %v1323 = vmul.f32 %v1319, %v706
      %1324 = vrot.lane.b32.xlu0 %v1205, 111
      %v1325 = vpop.permute.xlu0 %1324
      %1326 = vrot.lane.b32.xlu0 %v1206, 111
      %v1327 = vpop.permute.xlu0 %1326
      %1328 = vrot.lane.b32.xlu0 %v1207, 111
      %v1329 = vpop.permute.xlu0 %1328
      %1330 = vrot.lane.b32.xlu0 %v1208, 111
      %v1331 = vpop.permute.xlu0 %1330
      %v1332 = vsel %vm719, %v1329, %v1331
      %v1333 = vsel %vm719, %v1327, %v1329
      %v1334 = vsel %vm719, %v1325, %v1327
      %v1335 = vsel %vm719, %v1331, %v1325
      %v1336 = vmul.f32 %v1334, %v727
      %v1337 = vmul.f32 %v1333, %v731
      %v1338 = vmul.f32 %v1332, %v735
      %v1339 = vmul.f32 %v1335, %v739
      %v1340 = vld [vmem:[%s7] sm:$0xff]
      %v1341 = vld [vmem:[%s7 + $0x8] sm:$0xff]
      %v1342 = vld [vmem:[%s7 + $0x10] sm:$0xff]
      %1344 = vset.pattern.permute.xlu0 0
      %1345 = vperm.xlu0 %1344, %v1340
      %v1346 = vpop.permute.xlu0 %1345
      %1349 = vset.pattern.permute.xlu0 0
      %1350 = vperm.xlu0 %1349, %v1341
      %v1351 = vpop.permute.xlu0 %1350
      %1354 = vset.pattern.permute.xlu0 0
      %1355 = vperm.xlu0 %1354, %v1342
      %v1356 = vpop.permute.xlu0 %1355
      %v1359 = vsel %vm756, %v1209, 0
      %v1362 = vsel %vm756, %v1210, 0
      %v1365 = vsel %vm756, %v1211, 0
      %1367 = vmatprep.subr.mxu0 %v1225
      %1368 = vmatpush1.msra.mxu0 %v1224
      %1369 = vmatprep.subr.mxu0 %v1241
      %1370 = vmatpush1.msra.mxu0 %v1240
      %1371 = vmatprep.subr.mxu0 %v1257
      %1372 = vmatpush1.msra.mxu0 %v1256
      %1373 = vmatprep.subr.mxu0 %v1273
      %1374 = vmatpush1.msra.mxu0 %v1272
      %1375 = vmatprep.subr.mxu0 %v1206
      %1376 = vmatpush1.msra.mxu0 %v1205
      %1377 = vmatprep.subr.mxu0 %v1289
      %1378 = vmatpush1.msra.mxu0 %v1288
      %1379 = vmatprep.subr.mxu0 %v1305
      %1380 = vmatpush1.msra.mxu0 %v1304
      %1381 = vmatprep.subr.mxu0 %v1321
      %1382 = vmatpush1.msra.mxu0 %v1320
      %1383 = vmatprep.subr.mxu0 %v1337
      %1384 = vmatpush1.msra.mxu0 %v1336
      %1385 = vmatprep.subr.mxu0 0.0
      %1386 = vmatpush1.msra.mxu0 0.0
      %1387 = vmatprep.subr.mxu0 0.0
      %1388 = vmatpush1.msra.mxu0 0.0
      %1389 = vmatprep.subr.mxu0 0.0
      %1390 = vmatpush1.msra.mxu0 0.0
      %1391 = vmatprep.subr.mxu0 0.0
      %1392 = vmatpush1.msra.mxu0 0.0
      %1393 = vmatprep.subr.mxu0 0.0
      %1394 = vmatpush1.msra.mxu0 0.0
      %1395 = vmatprep.subr.mxu0 0.0
      %1396 = vmatpush1.msra.mxu0 0.0
      %1397 = vmatprep.subr.mxu0 0.0
      %1398 = vmatpush1.msra.mxu0 0.0
      %1399 = vmatprep.subr.mxu0 0.0
      %1400 = vmatpush1.msra.mxu0 0.0
      %1401 = vmatprep.subr.mxu0 0.0
      %1402 = vmatpush1.msra.mxu0 0.0
      %1403 = vmatprep.subr.mxu0 0.0
      %1404 = vmatpush1.msra.mxu0 0.0
      %1405 = vmatprep.subr.mxu0 0.0
      %1406 = vmatpush1.msra.mxu0 0.0
      %1407 = vmatprep.subr.mxu0 0.0
      %1408 = vmatpush1.msra.mxu0 0.0
      %1409 = vmatprep.subr.mxu0 0.0
      %1410 = vmatpush1.msra.mxu0 0.0
      %1411 = vmatprep.subr.mxu0 0.0
      %1412 = vmatpush1.msra.mxu0 0.0
      %1413 = vmatprep.subr.mxu0 0.0
      %1414 = vmatpush1.msra.mxu0 0.0
      %1415 = vmatprep.subr.mxu0 0.0
      %1416 = vmatpush1.msra.mxu0 0.0
      %1417 = vmatprep.subr.mxu0 0.0
      %1418 = vmatpush1.msra.mxu0 0.0
      %1419 = vmatprep.subr.mxu0 0.0
      %1420 = vmatpush1.msra.mxu0 0.0
      %1421 = vmatprep.subr.mxu0 0.0
      %1422 = vmatpush1.msra.mxu0 0.0
      %1423 = vmatprep.subr.mxu0 0.0
      %1424 = vmatpush1.msra.mxu0 0.0
      %1425 = vmatprep.subr.mxu0 0.0
      %1426 = vmatpush1.msra.mxu0 0.0
      %1427 = vmatprep.subr.mxu0 0.0
      %1428 = vmatpush1.msra.mxu0 0.0
      %1429 = vmatprep.subr.mxu0 0.0
      %1430 = vmatpush1.msra.mxu0 0.0
      %1431 = vmatprep.mubr.f32.mxu0 0.0
      %1432 = vmatmul.mubr.f32.gmra.mrb[0].mxu0 %v1359
      %v1433 = vpop.f32.mrb[0].mxu0
      %v1434 = vadd.f32 %v1346, %v1433
      %v1435 = vpop.f32.mrb[0].mxu0
      %v1436 = vadd.f32 %v1346, %v1435
      %1437 = vmatprep.mubr.f32.mxu0 0.0
      %1438 = vmatmul.mubr.f32.gmra.mrb[0].mxu0 %v1362
      %v1439 = vpop.f32.mrb[0].mxu0
      %v1440 = vadd.f32 %v1351, %v1439
      %v1441 = vpop.f32.mrb[0].mxu0
      %v1442 = vadd.f32 %v1351, %v1441
      %1443 = vmatprep.mubr.f32.mxu0 0.0
      %1444 = vmatmul.mubr.f32.gmra.mrb[0].mxu0 %v1365
      %v1445 = vpop.f32.mrb[0].mxu0
      %v1446 = vadd.f32 %v1356, %v1445
      %v1447 = vpop.f32.mrb[0].mxu0
      %v1448 = vadd.f32 %v1356, %v1447
      %1449 = vdwg.mxu0
      %1450 = vmatprep.subr.mxu0 %v1227
      %1451 = vmatpush1.msra.mxu0 %v1226
      %1452 = vmatprep.subr.mxu0 %v1243
      %1453 = vmatpush1.msra.mxu0 %v1242
      %1454 = vmatprep.subr.mxu0 %v1259
      %1455 = vmatpush1.msra.mxu0 %v1258
      %1456 = vmatprep.subr.mxu0 %v1275
      %1457 = vmatpush1.msra.mxu0 %v1274
      %1458 = vmatprep.subr.mxu0 %v1208
      %1459 = vmatpush1.msra.mxu0 %v1207
      %1460 = vmatprep.subr.mxu0 %v1291
      %1461 = vmatpush1.msra.mxu0 %v1290
      %1462 = vmatprep.subr.mxu0 %v1307
      %1463 = vmatpush1.msra.mxu0 %v1306
      %1464 = vmatprep.subr.mxu0 %v1323
      %1465 = vmatpush1.msra.mxu0 %v1322
      %1466 = vmatprep.subr.mxu0 %v1339
      %1467 = vmatpush1.msra.mxu0 %v1338
      %1468 = vmatprep.subr.mxu0 0.0
      %1469 = vmatpush1.msra.mxu0 0.0
      %1470 = vmatprep.subr.mxu0 0.0
      %1471 = vmatpush1.msra.mxu0 0.0
      %1472 = vmatprep.subr.mxu0 0.0
      %1473 = vmatpush1.msra.mxu0 0.0
      %1474 = vmatprep.subr.mxu0 0.0
      %1475 = vmatpush1.msra.mxu0 0.0
      %1476 = vmatprep.subr.mxu0 0.0
      %1477 = vmatpush1.msra.mxu0 0.0
      %1478 = vmatprep.subr.mxu0 0.0
      %1479 = vmatpush1.msra.mxu0 0.0
      %1480 = vmatprep.subr.mxu0 0.0
      %1481 = vmatpush1.msra.mxu0 0.0
      %1482 = vmatprep.subr.mxu0 0.0
      %1483 = vmatpush1.msra.mxu0 0.0
      %1484 = vmatprep.subr.mxu0 0.0
      %1485 = vmatpush1.msra.mxu0 0.0
      %1486 = vmatprep.subr.mxu0 0.0
      %1487 = vmatpush1.msra.mxu0 0.0
      %1488 = vmatprep.subr.mxu0 0.0
      %1489 = vmatpush1.msra.mxu0 0.0
      %1490 = vmatprep.subr.mxu0 0.0
      %1491 = vmatpush1.msra.mxu0 0.0
      %1492 = vmatprep.subr.mxu0 0.0
      %1493 = vmatpush1.msra.mxu0 0.0
      %1494 = vmatprep.subr.mxu0 0.0
      %1495 = vmatpush1.msra.mxu0 0.0
      %1496 = vmatprep.subr.mxu0 0.0
      %1497 = vmatpush1.msra.mxu0 0.0
      %1498 = vmatprep.subr.mxu0 0.0
      %1499 = vmatpush1.msra.mxu0 0.0
      %1500 = vmatprep.subr.mxu0 0.0
      %1501 = vmatpush1.msra.mxu0 0.0
      %1502 = vmatprep.subr.mxu0 0.0
      %1503 = vmatpush1.msra.mxu0 0.0
      %1504 = vmatprep.subr.mxu0 0.0
      %1505 = vmatpush1.msra.mxu0 0.0
      %1506 = vmatprep.subr.mxu0 0.0
      %1507 = vmatpush1.msra.mxu0 0.0
      %1508 = vmatprep.subr.mxu0 0.0
      %1509 = vmatpush1.msra.mxu0 0.0
      %1510 = vmatprep.subr.mxu0 0.0
      %1511 = vmatpush1.msra.mxu0 0.0
      %1512 = vmatprep.subr.mxu0 0.0
      %1513 = vmatpush1.msra.mxu0 0.0
      %1514 = vmatprep.mubr.f32.mxu0 0.0
      %1515 = vmatmul.mubr.f32.gmra.mrb[0].mxu0 %v1359
      %v1516 = vpop.f32.mrb[0].mxu0
      %v1517 = vadd.f32 %v1346, %v1516
      %v1518 = vpop.f32.mrb[0].mxu0
      %v1519 = vadd.f32 %v1346, %v1518
      %1520 = vmatprep.mubr.f32.mxu0 0.0
      %1521 = vmatmul.mubr.f32.gmra.mrb[0].mxu0 %v1362
      %v1522 = vpop.f32.mrb[0].mxu0
      %v1523 = vadd.f32 %v1351, %v1522
      %v1524 = vpop.f32.mrb[0].mxu0
      %v1525 = vadd.f32 %v1351, %v1524
      %1526 = vmatprep.mubr.f32.mxu0 0.0
      %1527 = vmatmul.mubr.f32.gmra.mrb[0].mxu0 %v1365
      %v1528 = vpop.f32.mrb[0].mxu0
      %v1529 = vadd.f32 %v1356, %v1528
      %v1530 = vpop.f32.mrb[0].mxu0
      %v1531 = vadd.f32 %v1356, %v1530
      %1532 = vdwg.mxu0
      %v1533 = vld [vmem:[%s8] sm:$0xff]
      %v1534 = vld [vmem:[%s8 + $0x8] sm:$0xff]
      %v1535 = vld [vmem:[%s8 + $0x10] sm:$0xff]
      %v1536 = vld [vmem:[%s8 + $0x18] sm:$0xff]
      %v1537 = vld [vmem:[%s8 + $0x20] sm:$0xff]
      %v1538 = vld [vmem:[%s8 + $0x28] sm:$0xff]
      %1539 = vrot.lane.b32.xlu0 %v1434, 17
      %v1540 = vpop.permute.xlu0 %1539
      %1541 = vrot.lane.b32.xlu0 %v1440, 17
      %v1542 = vpop.permute.xlu0 %1541
      %1543 = vrot.lane.b32.xlu0 %v1446, 17
      %v1544 = vpop.permute.xlu0 %1543
      %1545 = vrot.lane.b32.xlu0 %v1436, 17
      %v1546 = vpop.permute.xlu0 %1545
      %1547 = vrot.lane.b32.xlu0 %v1442, 17
      %v1548 = vpop.permute.xlu0 %1547
      %1549 = vrot.lane.b32.xlu0 %v1448, 17
      %v1550 = vpop.permute.xlu0 %1549
      %1551 = vrot.lane.b32.xlu0 %v1517, 17
      %v1552 = vpop.permute.xlu0 %1551
      %1553 = vrot.lane.b32.xlu0 %v1523, 17
      %v1554 = vpop.permute.xlu0 %1553
      %1555 = vrot.lane.b32.xlu0 %v1529, 17
      %v1556 = vpop.permute.xlu0 %1555
      %1557 = vrot.lane.b32.xlu0 %v1519, 17
      %v1558 = vpop.permute.xlu0 %1557
      %1559 = vrot.lane.b32.xlu0 %v1525, 17
      %v1560 = vpop.permute.xlu0 %1559
      %1561 = vrot.lane.b32.xlu0 %v1531, 17
      %v1562 = vpop.permute.xlu0 %1561
      %v1563 = vsel %vm488, %v1552, %v1558
      %v1564 = vsel %vm488, %v1554, %v1560
      %v1565 = vsel %vm488, %v1556, %v1562
      %v1566 = vsel %vm488, %v1546, %v1552
      %v1567 = vsel %vm488, %v1548, %v1554
      %v1568 = vsel %vm488, %v1550, %v1556
      %v1569 = vsel %vm488, %v1540, %v1546
      %v1570 = vsel %vm488, %v1542, %v1548
      %v1571 = vsel %vm488, %v1544, %v1550
      %v1572 = vsel %vm488, %v1558, %v1540
      %v1573 = vsel %vm488, %v1560, %v1542
      %v1574 = vsel %vm488, %v1562, %v1544
      %v1575 = vmul.f32 %v1572, %v496
      %v1576 = vmul.f32 %v1569, %v500
      %v1577 = vmul.f32 %v1566, %v504
      %v1578 = vmul.f32 %v1563, %v508
      %v1579 = vmul.f32 %v1573, %v496
      %v1580 = vmul.f32 %v1570, %v500
      %v1581 = vmul.f32 %v1567, %v504
      %v1582 = vmul.f32 %v1564, %v508
      %v1583 = vmul.f32 %v1574, %v496
      %v1584 = vmul.f32 %v1571, %v500
      %v1585 = vmul.f32 %v1568, %v504
      %v1586 = vmul.f32 %v1565, %v508
      %1587 = vrot.lane.b32.xlu0 %v1434, 16
      %v1588 = vpop.permute.xlu0 %1587
      %1589 = vrot.lane.b32.xlu0 %v1440, 16
      %v1590 = vpop.permute.xlu0 %1589
      %1591 = vrot.lane.b32.xlu0 %v1446, 16
      %v1592 = vpop.permute.xlu0 %1591
      %1593 = vrot.lane.b32.xlu0 %v1436, 16
      %v1594 = vpop.permute.xlu0 %1593
      %1595 = vrot.lane.b32.xlu0 %v1442, 16
      %v1596 = vpop.permute.xlu0 %1595
      %1597 = vrot.lane.b32.xlu0 %v1448, 16
      %v1598 = vpop.permute.xlu0 %1597
      %1599 = vrot.lane.b32.xlu0 %v1517, 16
      %v1600 = vpop.permute.xlu0 %1599
      %1601 = vrot.lane.b32.xlu0 %v1523, 16
      %v1602 = vpop.permute.xlu0 %1601
      %1603 = vrot.lane.b32.xlu0 %v1529, 16
      %v1604 = vpop.permute.xlu0 %1603
      %1605 = vrot.lane.b32.xlu0 %v1519, 16
      %v1606 = vpop.permute.xlu0 %1605
      %1607 = vrot.lane.b32.xlu0 %v1525, 16
      %v1608 = vpop.permute.xlu0 %1607
      %1609 = vrot.lane.b32.xlu0 %v1531, 16
      %v1610 = vpop.permute.xlu0 %1609
      %v1611 = vsel %vm521, %v1600, %v1606
      %v1612 = vsel %vm521, %v1602, %v1608
      %v1613 = vsel %vm521, %v1604, %v1610
      %v1614 = vsel %vm521, %v1594, %v1600
      %v1615 = vsel %vm521, %v1596, %v1602
      %v1616 = vsel %vm521, %v1598, %v1604
      %v1617 = vsel %vm521, %v1588, %v1594
      %v1618 = vsel %vm521, %v1590, %v1596
      %v1619 = vsel %vm521, %v1592, %v1598
      %v1620 = vsel %vm521, %v1606, %v1588
      %v1621 = vsel %vm521, %v1608, %v1590
      %v1622 = vsel %vm521, %v1610, %v1592
      %v1623 = vmul.f32 %v1620, %v529
      %v1624 = vmul.f32 %v1617, %v533
      %v1625 = vmul.f32 %v1614, %v537
      %v1626 = vmul.f32 %v1611, %v541
      %v1627 = vmul.f32 %v1621, %v529
      %v1628 = vmul.f32 %v1618, %v533
      %v1629 = vmul.f32 %v1615, %v537
      %v1630 = vmul.f32 %v1612, %v541
      %v1631 = vmul.f32 %v1622, %v529
      %v1632 = vmul.f32 %v1619, %v533
      %v1633 = vmul.f32 %v1616, %v537
      %v1634 = vmul.f32 %v1613, %v541
      %1635 = vrot.lane.b32.xlu0 %v1434, 15
      %v1636 = vpop.permute.xlu0 %1635
      %1637 = vrot.lane.b32.xlu0 %v1440, 15
      %v1638 = vpop.permute.xlu0 %1637
      %1639 = vrot.lane.b32.xlu0 %v1446, 15
      %v1640 = vpop.permute.xlu0 %1639
      %1641 = vrot.lane.b32.xlu0 %v1436, 15
      %v1642 = vpop.permute.xlu0 %1641
      %1643 = vrot.lane.b32.xlu0 %v1442, 15
      %v1644 = vpop.permute.xlu0 %1643
      %1645 = vrot.lane.b32.xlu0 %v1448, 15
      %v1646 = vpop.permute.xlu0 %1645
      %1647 = vrot.lane.b32.xlu0 %v1517, 15
      %v1648 = vpop.permute.xlu0 %1647
      %1649 = vrot.lane.b32.xlu0 %v1523, 15
      %v1650 = vpop.permute.xlu0 %1649
      %1651 = vrot.lane.b32.xlu0 %v1529, 15
      %v1652 = vpop.permute.xlu0 %1651
      %1653 = vrot.lane.b32.xlu0 %v1519, 15
      %v1654 = vpop.permute.xlu0 %1653
      %1655 = vrot.lane.b32.xlu0 %v1525, 15
      %v1656 = vpop.permute.xlu0 %1655
      %1657 = vrot.lane.b32.xlu0 %v1531, 15
      %v1658 = vpop.permute.xlu0 %1657
      %v1659 = vsel %vm554, %v1648, %v1654
      %v1660 = vsel %vm554, %v1650, %v1656
      %v1661 = vsel %vm554, %v1652, %v1658
      %v1662 = vsel %vm554, %v1642, %v1648
      %v1663 = vsel %vm554, %v1644, %v1650
      %v1664 = vsel %vm554, %v1646, %v1652
      %v1665 = vsel %vm554, %v1636, %v1642
      %v1666 = vsel %vm554, %v1638, %v1644
      %v1667 = vsel %vm554, %v1640, %v1646
      %v1668 = vsel %vm554, %v1654, %v1636
      %v1669 = vsel %vm554, %v1656, %v1638
      %v1670 = vsel %vm554, %v1658, %v1640
      %v1671 = vmul.f32 %v1668, %v562
      %v1672 = vmul.f32 %v1665, %v566
      %v1673 = vmul.f32 %v1662, %v570
      %v1674 = vmul.f32 %v1659, %v574
      %v1675 = vmul.f32 %v1669, %v562
      %v1676 = vmul.f32 %v1666, %v566
      %v1677 = vmul.f32 %v1663, %v570
      %v1678 = vmul.f32 %v1660, %v574
      %v1679 = vmul.f32 %v1670, %v562
      %v1680 = vmul.f32 %v1667, %v566
      %v1681 = vmul.f32 %v1664, %v570
      %v1682 = vmul.f32 %v1661, %v574
      %1683 = vrot.lane.b32.xlu0 %v1434, 1
      %v1684 = vpop.permute.xlu0 %1683
      %1685 = vrot.lane.b32.xlu0 %v1440, 1
      %v1686 = vpop.permute.xlu0 %1685
      %1687 = vrot.lane.b32.xlu0 %v1446, 1
      %v1688 = vpop.permute.xlu0 %1687
      %1689 = vrot.lane.b32.xlu0 %v1436, 1
      %v1690 = vpop.permute.xlu0 %1689
      %1691 = vrot.lane.b32.xlu0 %v1442, 1
      %v1692 = vpop.permute.xlu0 %1691
      %1693 = vrot.lane.b32.xlu0 %v1448, 1
      %v1694 = vpop.permute.xlu0 %1693
      %1695 = vrot.lane.b32.xlu0 %v1517, 1
      %v1696 = vpop.permute.xlu0 %1695
      %1697 = vrot.lane.b32.xlu0 %v1523, 1
      %v1698 = vpop.permute.xlu0 %1697
      %1699 = vrot.lane.b32.xlu0 %v1529, 1
      %v1700 = vpop.permute.xlu0 %1699
      %1701 = vrot.lane.b32.xlu0 %v1519, 1
      %v1702 = vpop.permute.xlu0 %1701
      %1703 = vrot.lane.b32.xlu0 %v1525, 1
      %v1704 = vpop.permute.xlu0 %1703
      %1705 = vrot.lane.b32.xlu0 %v1531, 1
      %v1706 = vpop.permute.xlu0 %1705
      %v1707 = vsel %vm587, %v1696, %v1702
      %v1708 = vsel %vm587, %v1698, %v1704
      %v1709 = vsel %vm587, %v1700, %v1706
      %v1710 = vsel %vm587, %v1690, %v1696
      %v1711 = vsel %vm587, %v1692, %v1698
      %v1712 = vsel %vm587, %v1694, %v1700
      %v1713 = vsel %vm587, %v1684, %v1690
      %v1714 = vsel %vm587, %v1686, %v1692
      %v1715 = vsel %vm587, %v1688, %v1694
      %v1716 = vsel %vm587, %v1702, %v1684
      %v1717 = vsel %vm587, %v1704, %v1686
      %v1718 = vsel %vm587, %v1706, %v1688
      %v1719 = vmul.f32 %v1716, %v595
      %v1720 = vmul.f32 %v1713, %v599
      %v1721 = vmul.f32 %v1710, %v603
      %v1722 = vmul.f32 %v1707, %v607
      %v1723 = vmul.f32 %v1717, %v595
      %v1724 = vmul.f32 %v1714, %v599
      %v1725 = vmul.f32 %v1711, %v603
      %v1726 = vmul.f32 %v1708, %v607
      %v1727 = vmul.f32 %v1718, %v595
      %v1728 = vmul.f32 %v1715, %v599
      %v1729 = vmul.f32 %v1712, %v603
      %v1730 = vmul.f32 %v1709, %v607
      %1731 = vrot.lane.b32.xlu0 %v1434, 127
      %v1732 = vpop.permute.xlu0 %1731
      %1733 = vrot.lane.b32.xlu0 %v1440, 127
      %v1734 = vpop.permute.xlu0 %1733
      %1735 = vrot.lane.b32.xlu0 %v1446, 127
      %v1736 = vpop.permute.xlu0 %1735
      %1737 = vrot.lane.b32.xlu0 %v1436, 127
      %v1738 = vpop.permute.xlu0 %1737
      %1739 = vrot.lane.b32.xlu0 %v1442, 127
      %v1740 = vpop.permute.xlu0 %1739
      %1741 = vrot.lane.b32.xlu0 %v1448, 127
      %v1742 = vpop.permute.xlu0 %1741
      %1743 = vrot.lane.b32.xlu0 %v1517, 127
      %v1744 = vpop.permute.xlu0 %1743
      %1745 = vrot.lane.b32.xlu0 %v1523, 127
      %v1746 = vpop.permute.xlu0 %1745
      %1747 = vrot.lane.b32.xlu0 %v1529, 127
      %v1748 = vpop.permute.xlu0 %1747
      %1749 = vrot.lane.b32.xlu0 %v1519, 127
      %v1750 = vpop.permute.xlu0 %1749
      %1751 = vrot.lane.b32.xlu0 %v1525, 127
      %v1752 = vpop.permute.xlu0 %1751
      %1753 = vrot.lane.b32.xlu0 %v1531, 127
      %v1754 = vpop.permute.xlu0 %1753
      %v1755 = vsel %vm620, %v1744, %v1750
      %v1756 = vsel %vm620, %v1746, %v1752
      %v1757 = vsel %vm620, %v1748, %v1754
      %v1758 = vsel %vm620, %v1738, %v1744
      %v1759 = vsel %vm620, %v1740, %v1746
      %v1760 = vsel %vm620, %v1742, %v1748
      %v1761 = vsel %vm620, %v1732, %v1738
      %v1762 = vsel %vm620, %v1734, %v1740
      %v1763 = vsel %vm620, %v1736, %v1742
      %v1764 = vsel %vm620, %v1750, %v1732
      %v1765 = vsel %vm620, %v1752, %v1734
      %v1766 = vsel %vm620, %v1754, %v1736
      %v1767 = vmul.f32 %v1761, %v628
      %v1768 = vmul.f32 %v1758, %v632
      %v1769 = vmul.f32 %v1755, %v636
      %v1770 = vmul.f32 %v1764, %v640
      %v1771 = vmul.f32 %v1762, %v628
      %v1772 = vmul.f32 %v1759, %v632
      %v1773 = vmul.f32 %v1756, %v636
      %v1774 = vmul.f32 %v1765, %v640
      %v1775 = vmul.f32 %v1763, %v628
      %v1776 = vmul.f32 %v1760, %v632
      %v1777 = vmul.f32 %v1757, %v636
      %v1778 = vmul.f32 %v1766, %v640
      %1779 = vrot.lane.b32.xlu0 %v1434, 113
      %v1780 = vpop.permute.xlu0 %1779
      %1781 = vrot.lane.b32.xlu0 %v1440, 113
      %v1782 = vpop.permute.xlu0 %1781
      %1783 = vrot.lane.b32.xlu0 %v1446, 113
      %v1784 = vpop.permute.xlu0 %1783
      %1785 = vrot.lane.b32.xlu0 %v1436, 113
      %v1786 = vpop.permute.xlu0 %1785
      %1787 = vrot.lane.b32.xlu0 %v1442, 113
      %v1788 = vpop.permute.xlu0 %1787
      %1789 = vrot.lane.b32.xlu0 %v1448, 113
      %v1790 = vpop.permute.xlu0 %1789
      %1791 = vrot.lane.b32.xlu0 %v1517, 113
      %v1792 = vpop.permute.xlu0 %1791
      %1793 = vrot.lane.b32.xlu0 %v1523, 113
      %v1794 = vpop.permute.xlu0 %1793
      %1795 = vrot.lane.b32.xlu0 %v1529, 113
      %v1796 = vpop.permute.xlu0 %1795
      %1797 = vrot.lane.b32.xlu0 %v1519, 113
      %v1798 = vpop.permute.xlu0 %1797
      %1799 = vrot.lane.b32.xlu0 %v1525, 113
      %v1800 = vpop.permute.xlu0 %1799
      %1801 = vrot.lane.b32.xlu0 %v1531, 113
      %v1802 = vpop.permute.xlu0 %1801
      %v1803 = vsel %vm653, %v1792, %v1798
      %v1804 = vsel %vm653, %v1794, %v1800
      %v1805 = vsel %vm653, %v1796, %v1802
      %v1806 = vsel %vm653, %v1786, %v1792
      %v1807 = vsel %vm653, %v1788, %v1794
      %v1808 = vsel %vm653, %v1790, %v1796
      %v1809 = vsel %vm653, %v1780, %v1786
      %v1810 = vsel %vm653, %v1782, %v1788
      %v1811 = vsel %vm653, %v1784, %v1790
      %v1812 = vsel %vm653, %v1798, %v1780
      %v1813 = vsel %vm653, %v1800, %v1782
      %v1814 = vsel %vm653, %v1802, %v1784
      %v1815 = vmul.f32 %v1809, %v661
      %v1816 = vmul.f32 %v1806, %v665
      %v1817 = vmul.f32 %v1803, %v669
      %v1818 = vmul.f32 %v1812, %v673
      %v1819 = vmul.f32 %v1810, %v661
      %v1820 = vmul.f32 %v1807, %v665
      %v1821 = vmul.f32 %v1804, %v669
      %v1822 = vmul.f32 %v1813, %v673
      %v1823 = vmul.f32 %v1811, %v661
      %v1824 = vmul.f32 %v1808, %v665
      %v1825 = vmul.f32 %v1805, %v669
      %v1826 = vmul.f32 %v1814, %v673
      %1827 = vrot.lane.b32.xlu0 %v1434, 112
      %v1828 = vpop.permute.xlu0 %1827
      %1829 = vrot.lane.b32.xlu0 %v1440, 112
      %v1830 = vpop.permute.xlu0 %1829
      %1831 = vrot.lane.b32.xlu0 %v1446, 112
      %v1832 = vpop.permute.xlu0 %1831
      %1833 = vrot.lane.b32.xlu0 %v1436, 112
      %v1834 = vpop.permute.xlu0 %1833
      %1835 = vrot.lane.b32.xlu0 %v1442, 112
      %v1836 = vpop.permute.xlu0 %1835
      %1837 = vrot.lane.b32.xlu0 %v1448, 112
      %v1838 = vpop.permute.xlu0 %1837
      %1839 = vrot.lane.b32.xlu0 %v1517, 112
      %v1840 = vpop.permute.xlu0 %1839
      %1841 = vrot.lane.b32.xlu0 %v1523, 112
      %v1842 = vpop.permute.xlu0 %1841
      %1843 = vrot.lane.b32.xlu0 %v1529, 112
      %v1844 = vpop.permute.xlu0 %1843
      %1845 = vrot.lane.b32.xlu0 %v1519, 112
      %v1846 = vpop.permute.xlu0 %1845
      %1847 = vrot.lane.b32.xlu0 %v1525, 112
      %v1848 = vpop.permute.xlu0 %1847
      %1849 = vrot.lane.b32.xlu0 %v1531, 112
      %v1850 = vpop.permute.xlu0 %1849
      %v1851 = vsel %vm686, %v1840, %v1846
      %v1852 = vsel %vm686, %v1842, %v1848
      %v1853 = vsel %vm686, %v1844, %v1850
      %v1854 = vsel %vm686, %v1834, %v1840
      %v1855 = vsel %vm686, %v1836, %v1842
      %v1856 = vsel %vm686, %v1838, %v1844
      %v1857 = vsel %vm686, %v1828, %v1834
      %v1858 = vsel %vm686, %v1830, %v1836
      %v1859 = vsel %vm686, %v1832, %v1838
      %v1860 = vsel %vm686, %v1846, %v1828
      %v1861 = vsel %vm686, %v1848, %v1830
      %v1862 = vsel %vm686, %v1850, %v1832
      %v1863 = vmul.f32 %v1857, %v694
      %v1864 = vmul.f32 %v1854, %v698
      %v1865 = vmul.f32 %v1851, %v702
      %v1866 = vmul.f32 %v1860, %v706
      %v1867 = vmul.f32 %v1858, %v694
      %v1868 = vmul.f32 %v1855, %v698
      %v1869 = vmul.f32 %v1852, %v702
      %v1870 = vmul.f32 %v1861, %v706
      %v1871 = vmul.f32 %v1859, %v694
      %v1872 = vmul.f32 %v1856, %v698
      %v1873 = vmul.f32 %v1853, %v702
      %v1874 = vmul.f32 %v1862, %v706
      %1875 = vrot.lane.b32.xlu0 %v1434, 111
      %v1876 = vpop.permute.xlu0 %1875
      %1877 = vrot.lane.b32.xlu0 %v1440, 111
      %v1878 = vpop.permute.xlu0 %1877
      %1879 = vrot.lane.b32.xlu0 %v1446, 111
      %v1880 = vpop.permute.xlu0 %1879
      %1881 = vrot.lane.b32.xlu0 %v1436, 111
      %v1882 = vpop.permute.xlu0 %1881
      %1883 = vrot.lane.b32.xlu0 %v1442, 111
      %v1884 = vpop.permute.xlu0 %1883
      %1885 = vrot.lane.b32.xlu0 %v1448, 111
      %v1886 = vpop.permute.xlu0 %1885
      %1887 = vrot.lane.b32.xlu0 %v1517, 111
      %v1888 = vpop.permute.xlu0 %1887
      %1889 = vrot.lane.b32.xlu0 %v1523, 111
      %v1890 = vpop.permute.xlu0 %1889
      %1891 = vrot.lane.b32.xlu0 %v1529, 111
      %v1892 = vpop.permute.xlu0 %1891
      %1893 = vrot.lane.b32.xlu0 %v1519, 111
      %v1894 = vpop.permute.xlu0 %1893
      %1895 = vrot.lane.b32.xlu0 %v1525, 111
      %v1896 = vpop.permute.xlu0 %1895
      %1897 = vrot.lane.b32.xlu0 %v1531, 111
      %v1898 = vpop.permute.xlu0 %1897
      %v1899 = vsel %vm719, %v1888, %v1894
      %v1900 = vsel %vm719, %v1890, %v1896
      %v1901 = vsel %vm719, %v1892, %v1898
      %v1902 = vsel %vm719, %v1882, %v1888
      %v1903 = vsel %vm719, %v1884, %v1890
      %v1904 = vsel %vm719, %v1886, %v1892
      %v1905 = vsel %vm719, %v1876, %v1882
      %v1906 = vsel %vm719, %v1878, %v1884
      %v1907 = vsel %vm719, %v1880, %v1886
      %v1908 = vsel %vm719, %v1894, %v1876
      %v1909 = vsel %vm719, %v1896, %v1878
      %v1910 = vsel %vm719, %v1898, %v1880
      %v1911 = vmul.f32 %v1905, %v727
      %v1912 = vmul.f32 %v1902, %v731
      %v1913 = vmul.f32 %v1899, %v735
      %v1914 = vmul.f32 %v1908, %v739
      %v1915 = vmul.f32 %v1906, %v727
      %v1916 = vmul.f32 %v1903, %v731
      %v1917 = vmul.f32 %v1900, %v735
      %v1918 = vmul.f32 %v1909, %v739
      %v1919 = vmul.f32 %v1907, %v727
      %v1920 = vmul.f32 %v1904, %v731
      %v1921 = vmul.f32 %v1901, %v735
      %v1922 = vmul.f32 %v1910, %v739
      %v1923 = vld [vmem:[%s9] sm:$0xff]
      %v1924 = vld [vmem:[%s9 + $0x8] sm:$0xff]
      %v1925 = vld [vmem:[%s9 + $0x10] sm:$0xff]
      %1927 = vset.pattern.permute.xlu0 0
      %1928 = vperm.xlu0 %1927, %v1923
      %v1929 = vpop.permute.xlu0 %1928
      %1932 = vset.pattern.permute.xlu0 0
      %1933 = vperm.xlu0 %1932, %v1924
      %v1934 = vpop.permute.xlu0 %1933
      %1937 = vset.pattern.permute.xlu0 0
      %1938 = vperm.xlu0 %1937, %v1925
      %v1939 = vpop.permute.xlu0 %1938
      %vm1941 = vcmask 719872
      %v1943 = vsel %vm1941, %v1534, 0
      %v1946 = vsel %vm1941, %v1536, 0
      %v1949 = vsel %vm1941, %v1538, 0
      %1951 = vmatprep.subr.mxu0 %v1576
      %1952 = vmatpush1.msra.mxu0 %v1575
      %1953 = vmatprep.subr.mxu0 %v1580
      %1954 = vmatpush1.msra.mxu0 %v1579
      %1955 = vmatprep.subr.mxu0 %v1584
      %1956 = vmatpush1.msra.mxu0 %v1583
      %1957 = vmatprep.subr.mxu0 %v1624
      %1958 = vmatpush1.msra.mxu0 %v1623
      %1959 = vmatprep.subr.mxu0 %v1628
      %1960 = vmatpush1.msra.mxu0 %v1627
      %1961 = vmatprep.subr.mxu0 %v1632
      %1962 = vmatpush1.msra.mxu0 %v1631
      %1963 = vmatprep.subr.mxu0 %v1672
      %1964 = vmatpush1.msra.mxu0 %v1671
      %1965 = vmatprep.subr.mxu0 %v1676
      %1966 = vmatpush1.msra.mxu0 %v1675
      %1967 = vmatprep.subr.mxu0 %v1680
      %1968 = vmatpush1.msra.mxu0 %v1679
      %1969 = vmatprep.subr.mxu0 %v1720
      %1970 = vmatpush1.msra.mxu0 %v1719
      %1971 = vmatprep.subr.mxu0 %v1724
      %1972 = vmatpush1.msra.mxu0 %v1723
      %1973 = vmatprep.subr.mxu0 %v1728
      %1974 = vmatpush1.msra.mxu0 %v1727
      %1975 = vmatprep.subr.mxu0 %v1436
      %1976 = vmatpush1.msra.mxu0 %v1434
      %1977 = vmatprep.subr.mxu0 %v1442
      %1978 = vmatpush1.msra.mxu0 %v1440
      %1979 = vmatprep.subr.mxu0 %v1448
      %1980 = vmatpush1.msra.mxu0 %v1446
      %1981 = vmatprep.subr.mxu0 %v1768
      %1982 = vmatpush1.msra.mxu0 %v1767
      %1983 = vmatprep.subr.mxu0 %v1772
      %1984 = vmatpush1.msra.mxu0 %v1771
      %1985 = vmatprep.subr.mxu0 %v1776
      %1986 = vmatpush1.msra.mxu0 %v1775
      %1987 = vmatprep.subr.mxu0 %v1816
      %1988 = vmatpush1.msra.mxu0 %v1815
      %1989 = vmatprep.subr.mxu0 %v1820
      %1990 = vmatpush1.msra.mxu0 %v1819
      %1991 = vmatprep.subr.mxu0 %v1824
      %1992 = vmatpush1.msra.mxu0 %v1823
      %1993 = vmatprep.subr.mxu0 %v1864
      %1994 = vmatpush1.msra.mxu0 %v1863
      %1995 = vmatprep.subr.mxu0 %v1868
      %1996 = vmatpush1.msra.mxu0 %v1867
      %1997 = vmatprep.subr.mxu0 %v1872
      %1998 = vmatpush1.msra.mxu0 %v1871
      %1999 = vmatprep.subr.mxu0 %v1912
      %2000 = vmatpush1.msra.mxu0 %v1911
      %2001 = vmatprep.subr.mxu0 %v1916
      %2002 = vmatpush1.msra.mxu0 %v1915
      %2003 = vmatprep.subr.mxu0 %v1920
      %2004 = vmatpush1.msra.mxu0 %v1919
      %2005 = vmatprep.subr.mxu0 0.0
      %2006 = vmatpush1.msra.mxu0 0.0
      %2007 = vmatprep.subr.mxu0 0.0
      %2008 = vmatpush1.msra.mxu0 0.0
      %2009 = vmatprep.subr.mxu0 0.0
      %2010 = vmatpush1.msra.mxu0 0.0
      %2011 = vmatprep.subr.mxu0 0.0
      %2012 = vmatpush1.msra.mxu0 0.0
      %2013 = vmatprep.subr.mxu0 0.0
      %2014 = vmatpush1.msra.mxu0 0.0
      %2015 = vmatprep.mubr.f32.mxu0 %v1943
      %2016 = vmatmul.mubr.f32.gmra.mrb[0].mxu0 %v1533
      %v2017 = vpop.f32.mrb[0].mxu0
      %v2018 = vadd.f32 %v1929, %v2017
      %v2019 = vpop.f32.mrb[0].mxu0
      %v2020 = vadd.f32 %v1929, %v2019
      %2021 = vmatprep.mubr.f32.mxu0 %v1946
      %2022 = vmatmul.mubr.f32.gmra.mrb[0].mxu0 %v1535
      %v2023 = vpop.f32.mrb[0].mxu0
      %v2024 = vadd.f32 %v1934, %v2023
      %v2025 = vpop.f32.mrb[0].mxu0
      %v2026 = vadd.f32 %v1934, %v2025
      %2027 = vmatprep.mubr.f32.mxu0 %v1949
      %2028 = vmatmul.mubr.f32.gmra.mrb[0].mxu0 %v1537
      %v2029 = vpop.f32.mrb[0].mxu0
      %v2030 = vadd.f32 %v1939, %v2029
      %v2031 = vpop.f32.mrb[0].mxu0
      %v2032 = vadd.f32 %v1939, %v2031
      %2033 = vdwg.mxu0
      %2034 = vmatprep.subr.mxu0 %v1578
      %2035 = vmatpush1.msra.mxu0 %v1577
      %2036 = vmatprep.subr.mxu0 %v1582
      %2037 = vmatpush1.msra.mxu0 %v1581
      %2038 = vmatprep.subr.mxu0 %v1586
      %2039 = vmatpush1.msra.mxu0 %v1585
      %2040 = vmatprep.subr.mxu0 %v1626
      %2041 = vmatpush1.msra.mxu0 %v1625
      %2042 = vmatprep.subr.mxu0 %v1630
      %2043 = vmatpush1.msra.mxu0 %v1629
      %2044 = vmatprep.subr.mxu0 %v1634
      %2045 = vmatpush1.msra.mxu0 %v1633
      %2046 = vmatprep.subr.mxu0 %v1674
      %2047 = vmatpush1.msra.mxu0 %v1673
      %2048 = vmatprep.subr.mxu0 %v1678
      %2049 = vmatpush1.msra.mxu0 %v1677
      %2050 = vmatprep.subr.mxu0 %v1682
      %2051 = vmatpush1.msra.mxu0 %v1681
      %2052 = vmatprep.subr.mxu0 %v1722
      %2053 = vmatpush1.msra.mxu0 %v1721
      %2054 = vmatprep.subr.mxu0 %v1726
      %2055 = vmatpush1.msra.mxu0 %v1725
      %2056 = vmatprep.subr.mxu0 %v1730
      %2057 = vmatpush1.msra.mxu0 %v1729
      %2058 = vmatprep.subr.mxu0 %v1519
      %2059 = vmatpush1.msra.mxu0 %v1517
      %2060 = vmatprep.subr.mxu0 %v1525
      %2061 = vmatpush1.msra.mxu0 %v1523
      %2062 = vmatprep.subr.mxu0 %v1531
      %2063 = vmatpush1.msra.mxu0 %v1529
      %2064 = vmatprep.subr.mxu0 %v1770
      %2065 = vmatpush1.msra.mxu0 %v1769
      %2066 = vmatprep.subr.mxu0 %v1774
      %2067 = vmatpush1.msra.mxu0 %v1773
      %2068 = vmatprep.subr.mxu0 %v1778
      %2069 = vmatpush1.msra.mxu0 %v1777
      %2070 = vmatprep.subr.mxu0 %v1818
      %2071 = vmatpush1.msra.mxu0 %v1817
      %2072 = vmatprep.subr.mxu0 %v1822
      %2073 = vmatpush1.msra.mxu0 %v1821
      %2074 = vmatprep.subr.mxu0 %v1826
      %2075 = vmatpush1.msra.mxu0 %v1825
      %2076 = vmatprep.subr.mxu0 %v1866
      %2077 = vmatpush1.msra.mxu0 %v1865
      %2078 = vmatprep.subr.mxu0 %v1870
      %2079 = vmatpush1.msra.mxu0 %v1869
      %2080 = vmatprep.subr.mxu0 %v1874
      %2081 = vmatpush1.msra.mxu0 %v1873
      %2082 = vmatprep.subr.mxu0 %v1914
      %2083 = vmatpush1.msra.mxu0 %v1913
      %2084 = vmatprep.subr.mxu0 %v1918
      %2085 = vmatpush1.msra.mxu0 %v1917
      %2086 = vmatprep.subr.mxu0 %v1922
      %2087 = vmatpush1.msra.mxu0 %v1921
      %2088 = vmatprep.subr.mxu0 0.0
      %2089 = vmatpush1.msra.mxu0 0.0
      %2090 = vmatprep.subr.mxu0 0.0
      %2091 = vmatpush1.msra.mxu0 0.0
      %2092 = vmatprep.subr.mxu0 0.0
      %2093 = vmatpush1.msra.mxu0 0.0
      %2094 = vmatprep.subr.mxu0 0.0
      %2095 = vmatpush1.msra.mxu0 0.0
      %2096 = vmatprep.subr.mxu0 0.0
      %2097 = vmatpush1.msra.mxu0 0.0
      %2098 = vmatprep.mubr.f32.mxu0 %v1943
      %2099 = vmatmul.mubr.f32.gmra.mrb[0].mxu0 %v1533
      %v2100 = vpop.f32.mrb[0].mxu0
      %v2101 = vadd.f32 %v1929, %v2100
      %v2102 = vpop.f32.mrb[0].mxu0
      %v2103 = vadd.f32 %v1929, %v2102
      %2104 = vmatprep.mubr.f32.mxu0 %v1946
      %2105 = vmatmul.mubr.f32.gmra.mrb[0].mxu0 %v1535
      %v2106 = vpop.f32.mrb[0].mxu0
      %v2107 = vadd.f32 %v1934, %v2106
      %v2108 = vpop.f32.mrb[0].mxu0
      %v2109 = vadd.f32 %v1934, %v2108
      %2110 = vmatprep.mubr.f32.mxu0 %v1949
      %2111 = vmatmul.mubr.f32.gmra.mrb[0].mxu0 %v1537
      %v2112 = vpop.f32.mrb[0].mxu0
      %v2113 = vadd.f32 %v1939, %v2112
      %v2114 = vpop.f32.mrb[0].mxu0
      %v2115 = vadd.f32 %v1939, %v2114
      %2116 = vdwg.mxu0
      %v2117 = vmax.f32 %v2018, 0.0
      %v2118 = vmax.f32 %v2020, 0.0
      %v2119 = vmax.f32 %v2101, 0.0
      %v2120 = vmax.f32 %v2103, 0.0
      %v2121 = vmax.f32 %v2024, 0.0
      %v2122 = vmax.f32 %v2026, 0.0
      %v2123 = vmax.f32 %v2107, 0.0
      %v2124 = vmax.f32 %v2109, 0.0
      %v2125 = vmax.f32 %v2030, 0.0
      %v2126 = vmax.f32 %v2032, 0.0
      %v2127 = vmax.f32 %v2113, 0.0
      %v2128 = vmax.f32 %v2115, 0.0
      %v2129 = vld [vmem:[%s10] sm:$0xff]
      %v2130 = vld [vmem:[%s10 + $0x8] sm:$0xff]
      %v2131 = vld [vmem:[%s10 + $0x10] sm:$0xff]
      %v2132 = vld [vmem:[%s10 + $0x18] sm:$0xff]
      %2133 = vrot.lane.b32.xlu0 %v2117, 17
      %v2134 = vpop.permute.xlu0 %2133
      %2135 = vrot.lane.b32.xlu0 %v2121, 17
      %v2136 = vpop.permute.xlu0 %2135
      %2137 = vrot.lane.b32.xlu0 %v2125, 17
      %v2138 = vpop.permute.xlu0 %2137
      %2139 = vrot.lane.b32.xlu0 %v2118, 17
      %v2140 = vpop.permute.xlu0 %2139
      %2141 = vrot.lane.b32.xlu0 %v2122, 17
      %v2142 = vpop.permute.xlu0 %2141
      %2143 = vrot.lane.b32.xlu0 %v2126, 17
      %v2144 = vpop.permute.xlu0 %2143
      %2145 = vrot.lane.b32.xlu0 %v2119, 17
      %v2146 = vpop.permute.xlu0 %2145
      %2147 = vrot.lane.b32.xlu0 %v2123, 17
      %v2148 = vpop.permute.xlu0 %2147
      %2149 = vrot.lane.b32.xlu0 %v2127, 17
      %v2150 = vpop.permute.xlu0 %2149
      %2151 = vrot.lane.b32.xlu0 %v2120, 17
      %v2152 = vpop.permute.xlu0 %2151
      %2153 = vrot.lane.b32.xlu0 %v2124, 17
      %v2154 = vpop.permute.xlu0 %2153
      %2155 = vrot.lane.b32.xlu0 %v2128, 17
      %v2156 = vpop.permute.xlu0 %2155
      %v2157 = vsel %vm488, %v2146, %v2152
      %v2158 = vsel %vm488, %v2148, %v2154
      %v2159 = vsel %vm488, %v2150, %v2156
      %v2160 = vsel %vm488, %v2140, %v2146
      %v2161 = vsel %vm488, %v2142, %v2148
      %v2162 = vsel %vm488, %v2144, %v2150
      %v2163 = vsel %vm488, %v2134, %v2140
      %v2164 = vsel %vm488, %v2136, %v2142
      %v2165 = vsel %vm488, %v2138, %v2144
      %v2166 = vsel %vm488, %v2152, %v2134
      %v2167 = vsel %vm488, %v2154, %v2136
      %v2168 = vsel %vm488, %v2156, %v2138
      %v2169 = vmul.f32 %v2166, %v496
      %v2170 = vmul.f32 %v2163, %v500
      %v2171 = vmul.f32 %v2160, %v504
      %v2172 = vmul.f32 %v2157, %v508
      %v2173 = vmul.f32 %v2167, %v496
      %v2174 = vmul.f32 %v2164, %v500
      %v2175 = vmul.f32 %v2161, %v504
      %v2176 = vmul.f32 %v2158, %v508
      %v2177 = vmul.f32 %v2168, %v496
      %v2178 = vmul.f32 %v2165, %v500
      %v2179 = vmul.f32 %v2162, %v504
      %v2180 = vmul.f32 %v2159, %v508
      %2181 = vrot.lane.b32.xlu0 %v2117, 16
      %v2182 = vpop.permute.xlu0 %2181
      %2183 = vrot.lane.b32.xlu0 %v2121, 16
      %v2184 = vpop.permute.xlu0 %2183
      %2185 = vrot.lane.b32.xlu0 %v2125, 16
      %v2186 = vpop.permute.xlu0 %2185
      %2187 = vrot.lane.b32.xlu0 %v2118, 16
      %v2188 = vpop.permute.xlu0 %2187
      %2189 = vrot.lane.b32.xlu0 %v2122, 16
      %v2190 = vpop.permute.xlu0 %2189
      %2191 = vrot.lane.b32.xlu0 %v2126, 16
      %v2192 = vpop.permute.xlu0 %2191
      %2193 = vrot.lane.b32.xlu0 %v2119, 16
      %v2194 = vpop.permute.xlu0 %2193
      %2195 = vrot.lane.b32.xlu0 %v2123, 16
      %v2196 = vpop.permute.xlu0 %2195
      %2197 = vrot.lane.b32.xlu0 %v2127, 16
      %v2198 = vpop.permute.xlu0 %2197
      %2199 = vrot.lane.b32.xlu0 %v2120, 16
      %v2200 = vpop.permute.xlu0 %2199
      %2201 = vrot.lane.b32.xlu0 %v2124, 16
      %v2202 = vpop.permute.xlu0 %2201
      %2203 = vrot.lane.b32.xlu0 %v2128, 16
      %v2204 = vpop.permute.xlu0 %2203
      %v2205 = vsel %vm521, %v2194, %v2200
      %v2206 = vsel %vm521, %v2196, %v2202
      %v2207 = vsel %vm521, %v2198, %v2204
      %v2208 = vsel %vm521, %v2188, %v2194
      %v2209 = vsel %vm521, %v2190, %v2196
      %v2210 = vsel %vm521, %v2192, %v2198
      %v2211 = vsel %vm521, %v2182, %v2188
      %v2212 = vsel %vm521, %v2184, %v2190
      %v2213 = vsel %vm521, %v2186, %v2192
      %v2214 = vsel %vm521, %v2200, %v2182
      %v2215 = vsel %vm521, %v2202, %v2184
      %v2216 = vsel %vm521, %v2204, %v2186
      %v2217 = vmul.f32 %v2214, %v529
      %v2218 = vmul.f32 %v2211, %v533
      %v2219 = vmul.f32 %v2208, %v537
      %v2220 = vmul.f32 %v2205, %v541
      %v2221 = vmul.f32 %v2215, %v529
      %v2222 = vmul.f32 %v2212, %v533
      %v2223 = vmul.f32 %v2209, %v537
      %v2224 = vmul.f32 %v2206, %v541
      %v2225 = vmul.f32 %v2216, %v529
      %v2226 = vmul.f32 %v2213, %v533
      %v2227 = vmul.f32 %v2210, %v537
      %v2228 = vmul.f32 %v2207, %v541
      %2229 = vrot.lane.b32.xlu0 %v2117, 15
      %v2230 = vpop.permute.xlu0 %2229
      %2231 = vrot.lane.b32.xlu0 %v2121, 15
      %v2232 = vpop.permute.xlu0 %2231
      %2233 = vrot.lane.b32.xlu0 %v2125, 15
      %v2234 = vpop.permute.xlu0 %2233
      %2235 = vrot.lane.b32.xlu0 %v2118, 15
      %v2236 = vpop.permute.xlu0 %2235
      %2237 = vrot.lane.b32.xlu0 %v2122, 15
      %v2238 = vpop.permute.xlu0 %2237
      %2239 = vrot.lane.b32.xlu0 %v2126, 15
      %v2240 = vpop.permute.xlu0 %2239
      %2241 = vrot.lane.b32.xlu0 %v2119, 15
      %v2242 = vpop.permute.xlu0 %2241
      %2243 = vrot.lane.b32.xlu0 %v2123, 15
      %v2244 = vpop.permute.xlu0 %2243
      %2245 = vrot.lane.b32.xlu0 %v2127, 15
      %v2246 = vpop.permute.xlu0 %2245
      %2247 = vrot.lane.b32.xlu0 %v2120, 15
      %v2248 = vpop.permute.xlu0 %2247
      %2249 = vrot.lane.b32.xlu0 %v2124, 15
      %v2250 = vpop.permute.xlu0 %2249
      %2251 = vrot.lane.b32.xlu0 %v2128, 15
      %v2252 = vpop.permute.xlu0 %2251
      %v2253 = vsel %vm554, %v2242, %v2248
      %v2254 = vsel %vm554, %v2244, %v2250
      %v2255 = vsel %vm554, %v2246, %v2252
      %v2256 = vsel %vm554, %v2236, %v2242
      %v2257 = vsel %vm554, %v2238, %v2244
      %v2258 = vsel %vm554, %v2240, %v2246
      %v2259 = vsel %vm554, %v2230, %v2236
      %v2260 = vsel %vm554, %v2232, %v2238
      %v2261 = vsel %vm554, %v2234, %v2240
      %v2262 = vsel %vm554, %v2248, %v2230
      %v2263 = vsel %vm554, %v2250, %v2232
      %v2264 = vsel %vm554, %v2252, %v2234
      %v2265 = vmul.f32 %v2262, %v562
      %v2266 = vmul.f32 %v2259, %v566
      %v2267 = vmul.f32 %v2256, %v570
      %v2268 = vmul.f32 %v2253, %v574
      %v2269 = vmul.f32 %v2263, %v562
      %v2270 = vmul.f32 %v2260, %v566
      %v2271 = vmul.f32 %v2257, %v570
      %v2272 = vmul.f32 %v2254, %v574
      %v2273 = vmul.f32 %v2264, %v562
      %v2274 = vmul.f32 %v2261, %v566
      %v2275 = vmul.f32 %v2258, %v570
      %v2276 = vmul.f32 %v2255, %v574
      %2277 = vrot.lane.b32.xlu0 %v2117, 1
      %v2278 = vpop.permute.xlu0 %2277
      %2279 = vrot.lane.b32.xlu0 %v2121, 1
      %v2280 = vpop.permute.xlu0 %2279
      %2281 = vrot.lane.b32.xlu0 %v2125, 1
      %v2282 = vpop.permute.xlu0 %2281
      %2283 = vrot.lane.b32.xlu0 %v2118, 1
      %v2284 = vpop.permute.xlu0 %2283
      %2285 = vrot.lane.b32.xlu0 %v2122, 1
      %v2286 = vpop.permute.xlu0 %2285
      %2287 = vrot.lane.b32.xlu0 %v2126, 1
      %v2288 = vpop.permute.xlu0 %2287
      %2289 = vrot.lane.b32.xlu0 %v2119, 1
      %v2290 = vpop.permute.xlu0 %2289
      %2291 = vrot.lane.b32.xlu0 %v2123, 1
      %v2292 = vpop.permute.xlu0 %2291
      %2293 = vrot.lane.b32.xlu0 %v2127, 1
      %v2294 = vpop.permute.xlu0 %2293
      %2295 = vrot.lane.b32.xlu0 %v2120, 1
      %v2296 = vpop.permute.xlu0 %2295
      %2297 = vrot.lane.b32.xlu0 %v2124, 1
      %v2298 = vpop.permute.xlu0 %2297
      %2299 = vrot.lane.b32.xlu0 %v2128, 1
      %v2300 = vpop.permute.xlu0 %2299
      %v2301 = vsel %vm587, %v2290, %v2296
      %v2302 = vsel %vm587, %v2292, %v2298
      %v2303 = vsel %vm587, %v2294, %v2300
      %v2304 = vsel %vm587, %v2284, %v2290
      %v2305 = vsel %vm587, %v2286, %v2292
      %v2306 = vsel %vm587, %v2288, %v2294
      %v2307 = vsel %vm587, %v2278, %v2284
      %v2308 = vsel %vm587, %v2280, %v2286
      %v2309 = vsel %vm587, %v2282, %v2288
      %v2310 = vsel %vm587, %v2296, %v2278
      %v2311 = vsel %vm587, %v2298, %v2280
      %v2312 = vsel %vm587, %v2300, %v2282
      %v2313 = vmul.f32 %v2310, %v595
      %v2314 = vmul.f32 %v2307, %v599
      %v2315 = vmul.f32 %v2304, %v603
      %v2316 = vmul.f32 %v2301, %v607
      %v2317 = vmul.f32 %v2311, %v595
      %v2318 = vmul.f32 %v2308, %v599
      %v2319 = vmul.f32 %v2305, %v603
      %v2320 = vmul.f32 %v2302, %v607
      %v2321 = vmul.f32 %v2312, %v595
      %v2322 = vmul.f32 %v2309, %v599
      %v2323 = vmul.f32 %v2306, %v603
      %v2324 = vmul.f32 %v2303, %v607
      %2325 = vrot.lane.b32.xlu0 %v2117, 127
      %v2326 = vpop.permute.xlu0 %2325
      %2327 = vrot.lane.b32.xlu0 %v2121, 127
      %v2328 = vpop.permute.xlu0 %2327
      %2329 = vrot.lane.b32.xlu0 %v2125, 127
      %v2330 = vpop.permute.xlu0 %2329
      %2331 = vrot.lane.b32.xlu0 %v2118, 127
      %v2332 = vpop.permute.xlu0 %2331
      %2333 = vrot.lane.b32.xlu0 %v2122, 127
      %v2334 = vpop.permute.xlu0 %2333
      %2335 = vrot.lane.b32.xlu0 %v2126, 127
      %v2336 = vpop.permute.xlu0 %2335
      %2337 = vrot.lane.b32.xlu0 %v2119, 127
      %v2338 = vpop.permute.xlu0 %2337
      %2339 = vrot.lane.b32.xlu0 %v2123, 127
      %v2340 = vpop.permute.xlu0 %2339
      %2341 = vrot.lane.b32.xlu0 %v2127, 127
      %v2342 = vpop.permute.xlu0 %2341
      %2343 = vrot.lane.b32.xlu0 %v2120, 127
      %v2344 = vpop.permute.xlu0 %2343
      %2345 = vrot.lane.b32.xlu0 %v2124, 127
      %v2346 = vpop.permute.xlu0 %2345
      %2347 = vrot.lane.b32.xlu0 %v2128, 127
      %v2348 = vpop.permute.xlu0 %2347
      %v2349 = vsel %vm620, %v2338, %v2344
      %v2350 = vsel %vm620, %v2340, %v2346
      %v2351 = vsel %vm620, %v2342, %v2348
      %v2352 = vsel %vm620, %v2332, %v2338
      %v2353 = vsel %vm620, %v2334, %v2340
      %v2354 = vsel %vm620, %v2336, %v2342
      %v2355 = vsel %vm620, %v2326, %v2332
      %v2356 = vsel %vm620, %v2328, %v2334
      %v2357 = vsel %vm620, %v2330, %v2336
      %v2358 = vsel %vm620, %v2344, %v2326
      %v2359 = vsel %vm620, %v2346, %v2328
      %v2360 = vsel %vm620, %v2348, %v2330
      %v2361 = vmul.f32 %v2355, %v628
      %v2362 = vmul.f32 %v2352, %v632
      %v2363 = vmul.f32 %v2349, %v636
      %v2364 = vmul.f32 %v2358, %v640
      %v2365 = vmul.f32 %v2356, %v628
      %v2366 = vmul.f32 %v2353, %v632
      %v2367 = vmul.f32 %v2350, %v636
      %v2368 = vmul.f32 %v2359, %v640
      %v2369 = vmul.f32 %v2357, %v628
      %v2370 = vmul.f32 %v2354, %v632
      %v2371 = vmul.f32 %v2351, %v636
      %v2372 = vmul.f32 %v2360, %v640
      %2373 = vrot.lane.b32.xlu0 %v2117, 113
      %v2374 = vpop.permute.xlu0 %2373
      %2375 = vrot.lane.b32.xlu0 %v2121, 113
      %v2376 = vpop.permute.xlu0 %2375
      %2377 = vrot.lane.b32.xlu0 %v2125, 113
      %v2378 = vpop.permute.xlu0 %2377
      %2379 = vrot.lane.b32.xlu0 %v2118, 113
      %v2380 = vpop.permute.xlu0 %2379
      %2381 = vrot.lane.b32.xlu0 %v2122, 113
      %v2382 = vpop.permute.xlu0 %2381
      %2383 = vrot.lane.b32.xlu0 %v2126, 113
      %v2384 = vpop.permute.xlu0 %2383
      %2385 = vrot.lane.b32.xlu0 %v2119, 113
      %v2386 = vpop.permute.xlu0 %2385
      %2387 = vrot.lane.b32.xlu0 %v2123, 113
      %v2388 = vpop.permute.xlu0 %2387
      %2389 = vrot.lane.b32.xlu0 %v2127, 113
      %v2390 = vpop.permute.xlu0 %2389
      %2391 = vrot.lane.b32.xlu0 %v2120, 113
      %v2392 = vpop.permute.xlu0 %2391
      %2393 = vrot.lane.b32.xlu0 %v2124, 113
      %v2394 = vpop.permute.xlu0 %2393
      %2395 = vrot.lane.b32.xlu0 %v2128, 113
      %v2396 = vpop.permute.xlu0 %2395
      %v2397 = vsel %vm653, %v2386, %v2392
      %v2398 = vsel %vm653, %v2388, %v2394
      %v2399 = vsel %vm653, %v2390, %v2396
      %v2400 = vsel %vm653, %v2380, %v2386
      %v2401 = vsel %vm653, %v2382, %v2388
      %v2402 = vsel %vm653, %v2384, %v2390
      %v2403 = vsel %vm653, %v2374, %v2380
      %v2404 = vsel %vm653, %v2376, %v2382
      %v2405 = vsel %vm653, %v2378, %v2384
      %v2406 = vsel %vm653, %v2392, %v2374
      %v2407 = vsel %vm653, %v2394, %v2376
      %v2408 = vsel %vm653, %v2396, %v2378
      %v2409 = vmul.f32 %v2403, %v661
      %v2410 = vmul.f32 %v2400, %v665
      %v2411 = vmul.f32 %v2397, %v669
      %v2412 = vmul.f32 %v2406, %v673
      %v2413 = vmul.f32 %v2404, %v661
      %v2414 = vmul.f32 %v2401, %v665
      %v2415 = vmul.f32 %v2398, %v669
      %v2416 = vmul.f32 %v2407, %v673
      %v2417 = vmul.f32 %v2405, %v661
      %v2418 = vmul.f32 %v2402, %v665
      %v2419 = vmul.f32 %v2399, %v669
      %v2420 = vmul.f32 %v2408, %v673
      %2421 = vrot.lane.b32.xlu0 %v2117, 112
      %v2422 = vpop.permute.xlu0 %2421
      %2423 = vrot.lane.b32.xlu0 %v2121, 112
      %v2424 = vpop.permute.xlu0 %2423
      %2425 = vrot.lane.b32.xlu0 %v2125, 112
      %v2426 = vpop.permute.xlu0 %2425
      %2427 = vrot.lane.b32.xlu0 %v2118, 112
      %v2428 = vpop.permute.xlu0 %2427
      %2429 = vrot.lane.b32.xlu0 %v2122, 112
      %v2430 = vpop.permute.xlu0 %2429
      %2431 = vrot.lane.b32.xlu0 %v2126, 112
      %v2432 = vpop.permute.xlu0 %2431
      %2433 = vrot.lane.b32.xlu0 %v2119, 112
      %v2434 = vpop.permute.xlu0 %2433
      %2435 = vrot.lane.b32.xlu0 %v2123, 112
      %v2436 = vpop.permute.xlu0 %2435
      %2437 = vrot.lane.b32.xlu0 %v2127, 112
      %v2438 = vpop.permute.xlu0 %2437
      %2439 = vrot.lane.b32.xlu0 %v2120, 112
      %v2440 = vpop.permute.xlu0 %2439
      %2441 = vrot.lane.b32.xlu0 %v2124, 112
      %v2442 = vpop.permute.xlu0 %2441
      %2443 = vrot.lane.b32.xlu0 %v2128, 112
      %v2444 = vpop.permute.xlu0 %2443
      %v2445 = vsel %vm686, %v2434, %v2440
      %v2446 = vsel %vm686, %v2436, %v2442
      %v2447 = vsel %vm686, %v2438, %v2444
      %v2448 = vsel %vm686, %v2428, %v2434
      %v2449 = vsel %vm686, %v2430, %v2436
      %v2450 = vsel %vm686, %v2432, %v2438
      %v2451 = vsel %vm686, %v2422, %v2428
      %v2452 = vsel %vm686, %v2424, %v2430
      %v2453 = vsel %vm686, %v2426, %v2432
      %v2454 = vsel %vm686, %v2440, %v2422
      %v2455 = vsel %vm686, %v2442, %v2424
      %v2456 = vsel %vm686, %v2444, %v2426
      %v2457 = vmul.f32 %v2451, %v694
      %v2458 = vmul.f32 %v2448, %v698
      %v2459 = vmul.f32 %v2445, %v702
      %v2460 = vmul.f32 %v2454, %v706
      %v2461 = vmul.f32 %v2452, %v694
      %v2462 = vmul.f32 %v2449, %v698
      %v2463 = vmul.f32 %v2446, %v702
      %v2464 = vmul.f32 %v2455, %v706
      %v2465 = vmul.f32 %v2453, %v694
      %v2466 = vmul.f32 %v2450, %v698
      %v2467 = vmul.f32 %v2447, %v702
      %v2468 = vmul.f32 %v2456, %v706
      %2469 = vrot.lane.b32.xlu0 %v2117, 111
      %v2470 = vpop.permute.xlu0 %2469
      %2471 = vrot.lane.b32.xlu0 %v2121, 111
      %v2472 = vpop.permute.xlu0 %2471
      %2473 = vrot.lane.b32.xlu0 %v2125, 111
      %v2474 = vpop.permute.xlu0 %2473
      %2475 = vrot.lane.b32.xlu0 %v2118, 111
      %v2476 = vpop.permute.xlu0 %2475
      %2477 = vrot.lane.b32.xlu0 %v2122, 111
      %v2478 = vpop.permute.xlu0 %2477
      %2479 = vrot.lane.b32.xlu0 %v2126, 111
      %v2480 = vpop.permute.xlu0 %2479
      %2481 = vrot.lane.b32.xlu0 %v2119, 111
      %v2482 = vpop.permute.xlu0 %2481
      %2483 = vrot.lane.b32.xlu0 %v2123, 111
      %v2484 = vpop.permute.xlu0 %2483
      %2485 = vrot.lane.b32.xlu0 %v2127, 111
      %v2486 = vpop.permute.xlu0 %2485
      %2487 = vrot.lane.b32.xlu0 %v2120, 111
      %v2488 = vpop.permute.xlu0 %2487
      %2489 = vrot.lane.b32.xlu0 %v2124, 111
      %v2490 = vpop.permute.xlu0 %2489
      %2491 = vrot.lane.b32.xlu0 %v2128, 111
      %v2492 = vpop.permute.xlu0 %2491
      %v2493 = vsel %vm719, %v2482, %v2488
      %v2494 = vsel %vm719, %v2484, %v2490
      %v2495 = vsel %vm719, %v2486, %v2492
      %v2496 = vsel %vm719, %v2476, %v2482
      %v2497 = vsel %vm719, %v2478, %v2484
      %v2498 = vsel %vm719, %v2480, %v2486
      %v2499 = vsel %vm719, %v2470, %v2476
      %v2500 = vsel %vm719, %v2472, %v2478
      %v2501 = vsel %vm719, %v2474, %v2480
      %v2502 = vsel %vm719, %v2488, %v2470
      %v2503 = vsel %vm719, %v2490, %v2472
      %v2504 = vsel %vm719, %v2492, %v2474
      %v2505 = vmul.f32 %v2499, %v727
      %v2506 = vmul.f32 %v2496, %v731
      %v2507 = vmul.f32 %v2493, %v735
      %v2508 = vmul.f32 %v2502, %v739
      %v2509 = vmul.f32 %v2500, %v727
      %v2510 = vmul.f32 %v2497, %v731
      %v2511 = vmul.f32 %v2494, %v735
      %v2512 = vmul.f32 %v2503, %v739
      %v2513 = vmul.f32 %v2501, %v727
      %v2514 = vmul.f32 %v2498, %v731
      %v2515 = vmul.f32 %v2495, %v735
      %v2516 = vmul.f32 %v2504, %v739
      %v2517 = vld [vmem:[%s11] sm:$0xff]
      %v2518 = vld [vmem:[%s11 + $0x8] sm:$0xff]
      %2520 = vset.pattern.permute.xlu0 0
      %2521 = vperm.xlu0 %2520, %v2517
      %v2522 = vpop.permute.xlu0 %2521
      %2525 = vset.pattern.permute.xlu0 0
      %2526 = vperm.xlu0 %2525, %v2518
      %v2527 = vpop.permute.xlu0 %2526
      %v2530 = vsel %vm1941, %v2130, 0
      %v2533 = vsel %vm1941, %v2132, 0
      %2535 = vmatprep.subr.mxu0 %v2170
      %2536 = vmatpush1.msra.mxu0 %v2169
      %2537 = vmatprep.subr.mxu0 %v2174
      %2538 = vmatpush1.msra.mxu0 %v2173
      %2539 = vmatprep.subr.mxu0 %v2178
      %2540 = vmatpush1.msra.mxu0 %v2177
      %2541 = vmatprep.subr.mxu0 %v2218
      %2542 = vmatpush1.msra.mxu0 %v2217
      %2543 = vmatprep.subr.mxu0 %v2222
      %2544 = vmatpush1.msra.mxu0 %v2221
      %2545 = vmatprep.subr.mxu0 %v2226
      %2546 = vmatpush1.msra.mxu0 %v2225
      %2547 = vmatprep.subr.mxu0 %v2266
      %2548 = vmatpush1.msra.mxu0 %v2265
      %2549 = vmatprep.subr.mxu0 %v2270
      %2550 = vmatpush1.msra.mxu0 %v2269
      %2551 = vmatprep.subr.mxu0 %v2274
      %2552 = vmatpush1.msra.mxu0 %v2273
      %2553 = vmatprep.subr.mxu0 %v2314
      %2554 = vmatpush1.msra.mxu0 %v2313
      %2555 = vmatprep.subr.mxu0 %v2318
      %2556 = vmatpush1.msra.mxu0 %v2317
      %2557 = vmatprep.subr.mxu0 %v2322
      %2558 = vmatpush1.msra.mxu0 %v2321
      %2559 = vmatprep.subr.mxu0 %v2118
      %2560 = vmatpush1.msra.mxu0 %v2117
      %2561 = vmatprep.subr.mxu0 %v2122
      %2562 = vmatpush1.msra.mxu0 %v2121
      %2563 = vmatprep.subr.mxu0 %v2126
      %2564 = vmatpush1.msra.mxu0 %v2125
      %2565 = vmatprep.subr.mxu0 %v2362
      %2566 = vmatpush1.msra.mxu0 %v2361
      %2567 = vmatprep.subr.mxu0 %v2366
      %2568 = vmatpush1.msra.mxu0 %v2365
      %2569 = vmatprep.subr.mxu0 %v2370
      %2570 = vmatpush1.msra.mxu0 %v2369
      %2571 = vmatprep.subr.mxu0 %v2410
      %2572 = vmatpush1.msra.mxu0 %v2409
      %2573 = vmatprep.subr.mxu0 %v2414
      %2574 = vmatpush1.msra.mxu0 %v2413
      %2575 = vmatprep.subr.mxu0 %v2418
      %2576 = vmatpush1.msra.mxu0 %v2417
      %2577 = vmatprep.subr.mxu0 %v2458
      %2578 = vmatpush1.msra.mxu0 %v2457
      %2579 = vmatprep.subr.mxu0 %v2462
      %2580 = vmatpush1.msra.mxu0 %v2461
      %2581 = vmatprep.subr.mxu0 %v2466
      %2582 = vmatpush1.msra.mxu0 %v2465
      %2583 = vmatprep.subr.mxu0 %v2506
      %2584 = vmatpush1.msra.mxu0 %v2505
      %2585 = vmatprep.subr.mxu0 %v2510
      %2586 = vmatpush1.msra.mxu0 %v2509
      %2587 = vmatprep.subr.mxu0 %v2514
      %2588 = vmatpush1.msra.mxu0 %v2513
      %2589 = vmatprep.subr.mxu0 0.0
      %2590 = vmatpush1.msra.mxu0 0.0
      %2591 = vmatprep.subr.mxu0 0.0
      %2592 = vmatpush1.msra.mxu0 0.0
      %2593 = vmatprep.subr.mxu0 0.0
      %2594 = vmatpush1.msra.mxu0 0.0
      %2595 = vmatprep.subr.mxu0 0.0
      %2596 = vmatpush1.msra.mxu0 0.0
      %2597 = vmatprep.subr.mxu0 0.0
      %2598 = vmatpush1.msra.mxu0 0.0
      %2599 = vmatprep.mubr.f32.mxu0 %v2530
      %2600 = vmatmul.mubr.f32.gmra.mrb[0].mxu0 %v2129
      %v2601 = vpop.f32.mrb[0].mxu0
      %v2602 = vadd.f32 %v2522, %v2601
      %v2603 = vpop.f32.mrb[0].mxu0
      %v2604 = vadd.f32 %v2522, %v2603
      %2605 = vmatprep.mubr.f32.mxu0 %v2533
      %2606 = vmatmul.mubr.f32.gmra.mrb[0].mxu0 %v2131
      %v2607 = vpop.f32.mrb[0].mxu0
      %v2608 = vadd.f32 %v2527, %v2607
      %v2609 = vpop.f32.mrb[0].mxu0
      %v2610 = vadd.f32 %v2527, %v2609
      %2611 = vdwg.mxu0
      %2612 = vmatprep.subr.mxu0 %v2172
      %2613 = vmatpush1.msra.mxu0 %v2171
      %2614 = vmatprep.subr.mxu0 %v2176
      %2615 = vmatpush1.msra.mxu0 %v2175
      %2616 = vmatprep.subr.mxu0 %v2180
      %2617 = vmatpush1.msra.mxu0 %v2179
      %2618 = vmatprep.subr.mxu0 %v2220
      %2619 = vmatpush1.msra.mxu0 %v2219
      %2620 = vmatprep.subr.mxu0 %v2224
      %2621 = vmatpush1.msra.mxu0 %v2223
      %2622 = vmatprep.subr.mxu0 %v2228
      %2623 = vmatpush1.msra.mxu0 %v2227
      %2624 = vmatprep.subr.mxu0 %v2268
      %2625 = vmatpush1.msra.mxu0 %v2267
      %2626 = vmatprep.subr.mxu0 %v2272
      %2627 = vmatpush1.msra.mxu0 %v2271
      %2628 = vmatprep.subr.mxu0 %v2276
      %2629 = vmatpush1.msra.mxu0 %v2275
      %2630 = vmatprep.subr.mxu0 %v2316
      %2631 = vmatpush1.msra.mxu0 %v2315
      %2632 = vmatprep.subr.mxu0 %v2320
      %2633 = vmatpush1.msra.mxu0 %v2319
      %2634 = vmatprep.subr.mxu0 %v2324
      %2635 = vmatpush1.msra.mxu0 %v2323
      %2636 = vmatprep.subr.mxu0 %v2120
      %2637 = vmatpush1.msra.mxu0 %v2119
      %2638 = vmatprep.subr.mxu0 %v2124
      %2639 = vmatpush1.msra.mxu0 %v2123
      %2640 = vmatprep.subr.mxu0 %v2128
      %2641 = vmatpush1.msra.mxu0 %v2127
      %2642 = vmatprep.subr.mxu0 %v2364
      %2643 = vmatpush1.msra.mxu0 %v2363
      %2644 = vmatprep.subr.mxu0 %v2368
      %2645 = vmatpush1.msra.mxu0 %v2367
      %2646 = vmatprep.subr.mxu0 %v2372
      %2647 = vmatpush1.msra.mxu0 %v2371
      %2648 = vmatprep.subr.mxu0 %v2412
      %2649 = vmatpush1.msra.mxu0 %v2411
      %2650 = vmatprep.subr.mxu0 %v2416
      %2651 = vmatpush1.msra.mxu0 %v2415
      %2652 = vmatprep.subr.mxu0 %v2420
      %2653 = vmatpush1.msra.mxu0 %v2419
      %2654 = vmatprep.subr.mxu0 %v2460
      %2655 = vmatpush1.msra.mxu0 %v2459
      %2656 = vmatprep.subr.mxu0 %v2464
      %2657 = vmatpush1.msra.mxu0 %v2463
      %2658 = vmatprep.subr.mxu0 %v2468
      %2659 = vmatpush1.msra.mxu0 %v2467
      %2660 = vmatprep.subr.mxu0 %v2508
      %2661 = vmatpush1.msra.mxu0 %v2507
      %2662 = vmatprep.subr.mxu0 %v2512
      %2663 = vmatpush1.msra.mxu0 %v2511
      %2664 = vmatprep.subr.mxu0 %v2516
      %2665 = vmatpush1.msra.mxu0 %v2515
      %2666 = vmatprep.subr.mxu0 0.0
      %2667 = vmatpush1.msra.mxu0 0.0
      %2668 = vmatprep.subr.mxu0 0.0
      %2669 = vmatpush1.msra.mxu0 0.0
      %2670 = vmatprep.subr.mxu0 0.0
      %2671 = vmatpush1.msra.mxu0 0.0
      %2672 = vmatprep.subr.mxu0 0.0
      %2673 = vmatpush1.msra.mxu0 0.0
      %2674 = vmatprep.subr.mxu0 0.0
      %2675 = vmatpush1.msra.mxu0 0.0
      %2676 = vmatprep.mubr.f32.mxu0 %v2530
      %2677 = vmatmul.mubr.f32.gmra.mrb[0].mxu0 %v2129
      %v2678 = vpop.f32.mrb[0].mxu0
      %v2679 = vadd.f32 %v2522, %v2678
      %v2680 = vpop.f32.mrb[0].mxu0
      %v2681 = vadd.f32 %v2522, %v2680
      %2682 = vmatprep.mubr.f32.mxu0 %v2533
      %2683 = vmatmul.mubr.f32.gmra.mrb[0].mxu0 %v2131
      %v2684 = vpop.f32.mrb[0].mxu0
      %v2685 = vadd.f32 %v2527, %v2684
      %v2686 = vpop.f32.mrb[0].mxu0
      %v2687 = vadd.f32 %v2527, %v2686
      %2688 = vdwg.mxu0
      %v2689 = vmax.f32 %v2602, 0.0
      %v2690 = vmax.f32 %v2604, 0.0
      %v2691 = vmax.f32 %v2679, 0.0
      %v2692 = vmax.f32 %v2681, 0.0
      %v2693 = vld [vmem:[%s12] sm:$0xff]
      %2694 = vrot.lane.b32.xlu0 %v2689, 17
      %v2695 = vpop.permute.xlu0 %2694
      %2696 = vrot.lane.b32.xlu0 %v2690, 17
      %v2697 = vpop.permute.xlu0 %2696
      %2698 = vrot.lane.b32.xlu0 %v2691, 17
      %v2699 = vpop.permute.xlu0 %2698
      %2700 = vrot.lane.b32.xlu0 %v2692, 17
      %v2701 = vpop.permute.xlu0 %2700
      %v2702 = vsel %vm488, %v2699, %v2701
      %v2703 = vsel %vm488, %v2697, %v2699
      %v2704 = vsel %vm488, %v2695, %v2697
      %v2705 = vsel %vm488, %v2701, %v2695
      %v2706 = vmul.f32 %v2705, %v496
      %v2707 = vmul.f32 %v2704, %v500
      %v2708 = vmul.f32 %v2703, %v504
      %v2709 = vmul.f32 %v2702, %v508
      %2710 = vrot.lane.b32.xlu0 %v2689, 16
      %v2711 = vpop.permute.xlu0 %2710
      %2712 = vrot.lane.b32.xlu0 %v2690, 16
      %v2713 = vpop.permute.xlu0 %2712
      %2714 = vrot.lane.b32.xlu0 %v2691, 16
      %v2715 = vpop.permute.xlu0 %2714
      %2716 = vrot.lane.b32.xlu0 %v2692, 16
      %v2717 = vpop.permute.xlu0 %2716
      %v2718 = vsel %vm521, %v2715, %v2717
      %v2719 = vsel %vm521, %v2713, %v2715
      %v2720 = vsel %vm521, %v2711, %v2713
      %v2721 = vsel %vm521, %v2717, %v2711
      %v2722 = vmul.f32 %v2721, %v529
      %v2723 = vmul.f32 %v2720, %v533
      %v2724 = vmul.f32 %v2719, %v537
      %v2725 = vmul.f32 %v2718, %v541
      %2726 = vrot.lane.b32.xlu0 %v2689, 15
      %v2727 = vpop.permute.xlu0 %2726
      %2728 = vrot.lane.b32.xlu0 %v2690, 15
      %v2729 = vpop.permute.xlu0 %2728
      %2730 = vrot.lane.b32.xlu0 %v2691, 15
      %v2731 = vpop.permute.xlu0 %2730
      %2732 = vrot.lane.b32.xlu0 %v2692, 15
      %v2733 = vpop.permute.xlu0 %2732
      %v2734 = vsel %vm554, %v2731, %v2733
      %v2735 = vsel %vm554, %v2729, %v2731
      %v2736 = vsel %vm554, %v2727, %v2729
      %v2737 = vsel %vm554, %v2733, %v2727
      %v2738 = vmul.f32 %v2737, %v562
      %v2739 = vmul.f32 %v2736, %v566
      %v2740 = vmul.f32 %v2735, %v570
      %v2741 = vmul.f32 %v2734, %v574
      %2742 = vrot.lane.b32.xlu0 %v2689, 1
      %v2743 = vpop.permute.xlu0 %2742
      %2744 = vrot.lane.b32.xlu0 %v2690, 1
      %v2745 = vpop.permute.xlu0 %2744
      %2746 = vrot.lane.b32.xlu0 %v2691, 1
      %v2747 = vpop.permute.xlu0 %2746
      %2748 = vrot.lane.b32.xlu0 %v2692, 1
      %v2749 = vpop.permute.xlu0 %2748
      %v2750 = vsel %vm587, %v2747, %v2749
      %v2751 = vsel %vm587, %v2745, %v2747
      %v2752 = vsel %vm587, %v2743, %v2745
      %v2753 = vsel %vm587, %v2749, %v2743
      %v2754 = vmul.f32 %v2753, %v595
      %v2755 = vmul.f32 %v2752, %v599
      %v2756 = vmul.f32 %v2751, %v603
      %v2757 = vmul.f32 %v2750, %v607
      %2758 = vrot.lane.b32.xlu0 %v2689, 127
      %v2759 = vpop.permute.xlu0 %2758
      %2760 = vrot.lane.b32.xlu0 %v2690, 127
      %v2761 = vpop.permute.xlu0 %2760
      %2762 = vrot.lane.b32.xlu0 %v2691, 127
      %v2763 = vpop.permute.xlu0 %2762
      %2764 = vrot.lane.b32.xlu0 %v2692, 127
      %v2765 = vpop.permute.xlu0 %2764
      %v2766 = vsel %vm620, %v2763, %v2765
      %v2767 = vsel %vm620, %v2761, %v2763
      %v2768 = vsel %vm620, %v2759, %v2761
      %v2769 = vsel %vm620, %v2765, %v2759
      %v2770 = vmul.f32 %v2768, %v628
      %v2771 = vmul.f32 %v2767, %v632
      %v2772 = vmul.f32 %v2766, %v636
      %v2773 = vmul.f32 %v2769, %v640
      %2774 = vrot.lane.b32.xlu0 %v2689, 113
      %v2775 = vpop.permute.xlu0 %2774
      %2776 = vrot.lane.b32.xlu0 %v2690, 113
      %v2777 = vpop.permute.xlu0 %2776
      %2778 = vrot.lane.b32.xlu0 %v2691, 113
      %v2779 = vpop.permute.xlu0 %2778
      %2780 = vrot.lane.b32.xlu0 %v2692, 113
      %v2781 = vpop.permute.xlu0 %2780
      %v2782 = vsel %vm653, %v2779, %v2781
      %v2783 = vsel %vm653, %v2777, %v2779
      %v2784 = vsel %vm653, %v2775, %v2777
      %v2785 = vsel %vm653, %v2781, %v2775
      %v2786 = vmul.f32 %v2784, %v661
      %v2787 = vmul.f32 %v2783, %v665
      %v2788 = vmul.f32 %v2782, %v669
      %v2789 = vmul.f32 %v2785, %v673
      %2790 = vrot.lane.b32.xlu0 %v2689, 112
      %v2791 = vpop.permute.xlu0 %2790
      %2792 = vrot.lane.b32.xlu0 %v2690, 112
      %v2793 = vpop.permute.xlu0 %2792
      %2794 = vrot.lane.b32.xlu0 %v2691, 112
      %v2795 = vpop.permute.xlu0 %2794
      %2796 = vrot.lane.b32.xlu0 %v2692, 112
      %v2797 = vpop.permute.xlu0 %2796
      %v2798 = vsel %vm686, %v2795, %v2797
      %v2799 = vsel %vm686, %v2793, %v2795
      %v2800 = vsel %vm686, %v2791, %v2793
      %v2801 = vsel %vm686, %v2797, %v2791
      %v2802 = vmul.f32 %v2800, %v694
      %v2803 = vmul.f32 %v2799, %v698
      %v2804 = vmul.f32 %v2798, %v702
      %v2805 = vmul.f32 %v2801, %v706
      %2806 = vrot.lane.b32.xlu0 %v2689, 111
      %v2807 = vpop.permute.xlu0 %2806
      %2808 = vrot.lane.b32.xlu0 %v2690, 111
      %v2809 = vpop.permute.xlu0 %2808
      %2810 = vrot.lane.b32.xlu0 %v2691, 111
      %v2811 = vpop.permute.xlu0 %2810
      %2812 = vrot.lane.b32.xlu0 %v2692, 111
      %v2813 = vpop.permute.xlu0 %2812
      %v2814 = vsel %vm719, %v2811, %v2813
      %v2815 = vsel %vm719, %v2809, %v2811
      %v2816 = vsel %vm719, %v2807, %v2809
      %v2817 = vsel %vm719, %v2813, %v2807
      %v2818 = vmul.f32 %v2816, %v727
      %v2819 = vmul.f32 %v2815, %v731
      %v2820 = vmul.f32 %v2814, %v735
      %v2821 = vmul.f32 %v2817, %v739
      %v2822 = vld [vmem:[%s13] sm:$0xff]
      %2824 = vset.pattern.permute.xlu0 0
      %2825 = vperm.xlu0 %2824, %v2822
      %v2826 = vpop.permute.xlu0 %2825
      %v2829 = vsel %vm756, %v2693, 0
      %2831 = vmatprep.subr.mxu0 %v2707
      %2832 = vmatpush1.msra.mxu0 %v2706
      %2833 = vmatprep.subr.mxu0 %v2723
      %2834 = vmatpush1.msra.mxu0 %v2722
      %2835 = vmatprep.subr.mxu0 %v2739
      %2836 = vmatpush1.msra.mxu0 %v2738
      %2837 = vmatprep.subr.mxu0 %v2755
      %2838 = vmatpush1.msra.mxu0 %v2754
      %2839 = vmatprep.subr.mxu0 %v2690
      %2840 = vmatpush1.msra.mxu0 %v2689
      %2841 = vmatprep.subr.mxu0 %v2771
      %2842 = vmatpush1.msra.mxu0 %v2770
      %2843 = vmatprep.subr.mxu0 %v2787
      %2844 = vmatpush1.msra.mxu0 %v2786
      %2845 = vmatprep.subr.mxu0 %v2803
      %2846 = vmatpush1.msra.mxu0 %v2802
      %2847 = vmatprep.subr.mxu0 %v2819
      %2848 = vmatpush1.msra.mxu0 %v2818
      %2849 = vmatprep.subr.mxu0 0.0
      %2850 = vmatpush1.msra.mxu0 0.0
      %2851 = vmatprep.subr.mxu0 0.0
      %2852 = vmatpush1.msra.mxu0 0.0
      %2853 = vmatprep.subr.mxu0 0.0
      %2854 = vmatpush1.msra.mxu0 0.0
      %2855 = vmatprep.subr.mxu0 0.0
      %2856 = vmatpush1.msra.mxu0 0.0
      %2857 = vmatprep.subr.mxu0 0.0
      %2858 = vmatpush1.msra.mxu0 0.0
      %2859 = vmatprep.subr.mxu0 0.0
      %2860 = vmatpush1.msra.mxu0 0.0
      %2861 = vmatprep.subr.mxu0 0.0
      %2862 = vmatpush1.msra.mxu0 0.0
      %2863 = vmatprep.subr.mxu0 0.0
      %2864 = vmatpush1.msra.mxu0 0.0
      %2865 = vmatprep.subr.mxu0 0.0
      %2866 = vmatpush1.msra.mxu0 0.0
      %2867 = vmatprep.subr.mxu0 0.0
      %2868 = vmatpush1.msra.mxu0 0.0
      %2869 = vmatprep.subr.mxu0 0.0
      %2870 = vmatpush1.msra.mxu0 0.0
      %2871 = vmatprep.subr.mxu0 0.0
      %2872 = vmatpush1.msra.mxu0 0.0
      %2873 = vmatprep.subr.mxu0 0.0
      %2874 = vmatpush1.msra.mxu0 0.0
      %2875 = vmatprep.subr.mxu0 0.0
      %2876 = vmatpush1.msra.mxu0 0.0
      %2877 = vmatprep.subr.mxu0 0.0
      %2878 = vmatpush1.msra.mxu0 0.0
      %2879 = vmatprep.subr.mxu0 0.0
      %2880 = vmatpush1.msra.mxu0 0.0
      %2881 = vmatprep.subr.mxu0 0.0
      %2882 = vmatpush1.msra.mxu0 0.0
      %2883 = vmatprep.subr.mxu0 0.0
      %2884 = vmatpush1.msra.mxu0 0.0
      %2885 = vmatprep.subr.mxu0 0.0
      %2886 = vmatpush1.msra.mxu0 0.0
      %2887 = vmatprep.subr.mxu0 0.0
      %2888 = vmatpush1.msra.mxu0 0.0
      %2889 = vmatprep.subr.mxu0 0.0
      %2890 = vmatpush1.msra.mxu0 0.0
      %2891 = vmatprep.subr.mxu0 0.0
      %2892 = vmatpush1.msra.mxu0 0.0
      %2893 = vmatprep.subr.mxu0 0.0
      %2894 = vmatpush1.msra.mxu0 0.0
      %2895 = vmatprep.mubr.f32.mxu0 0.0
      %2896 = vmatmul.mubr.f32.gmra.mrb[0].mxu0 %v2829
      %v2897 = vpop.f32.mrb[0].mxu0
      %v2898 = vadd.f32 %v2826, %v2897
      %v2899 = vpop.f32.mrb[0].mxu0
      %v2900 = vadd.f32 %v2826, %v2899
      %2901 = vdwg.mxu0
      %2902 = vmatprep.subr.mxu0 %v2709
      %2903 = vmatpush1.msra.mxu0 %v2708
      %2904 = vmatprep.subr.mxu0 %v2725
      %2905 = vmatpush1.msra.mxu0 %v2724
      %2906 = vmatprep.subr.mxu0 %v2741
      %2907 = vmatpush1.msra.mxu0 %v2740
      %2908 = vmatprep.subr.mxu0 %v2757
      %2909 = vmatpush1.msra.mxu0 %v2756
      %2910 = vmatprep.subr.mxu0 %v2692
      %2911 = vmatpush1.msra.mxu0 %v2691
      %2912 = vmatprep.subr.mxu0 %v2773
      %2913 = vmatpush1.msra.mxu0 %v2772
      %2914 = vmatprep.subr.mxu0 %v2789
      %2915 = vmatpush1.msra.mxu0 %v2788
      %2916 = vmatprep.subr.mxu0 %v2805
      %2917 = vmatpush1.msra.mxu0 %v2804
      %2918 = vmatprep.subr.mxu0 %v2821
      %2919 = vmatpush1.msra.mxu0 %v2820
      %2920 = vmatprep.subr.mxu0 0.0
      %2921 = vmatpush1.msra.mxu0 0.0
      %2922 = vmatprep.subr.mxu0 0.0
      %2923 = vmatpush1.msra.mxu0 0.0
      %2924 = vmatprep.subr.mxu0 0.0
      %2925 = vmatpush1.msra.mxu0 0.0
      %2926 = vmatprep.subr.mxu0 0.0
      %2927 = vmatpush1.msra.mxu0 0.0
      %2928 = vmatprep.subr.mxu0 0.0
      %2929 = vmatpush1.msra.mxu0 0.0
      %2930 = vmatprep.subr.mxu0 0.0
      %2931 = vmatpush1.msra.mxu0 0.0
      %2932 = vmatprep.subr.mxu0 0.0
      %2933 = vmatpush1.msra.mxu0 0.0
      %2934 = vmatprep.subr.mxu0 0.0
      %2935 = vmatpush1.msra.mxu0 0.0
      %2936 = vmatprep.subr.mxu0 0.0
      %2937 = vmatpush1.msra.mxu0 0.0
      %2938 = vmatprep.subr.mxu0 0.0
      %2939 = vmatpush1.msra.mxu0 0.0
      %2940 = vmatprep.subr.mxu0 0.0
      %2941 = vmatpush1.msra.mxu0 0.0
      %2942 = vmatprep.subr.mxu0 0.0
      %2943 = vmatpush1.msra.mxu0 0.0
      %2944 = vmatprep.subr.mxu0 0.0
      %2945 = vmatpush1.msra.mxu0 0.0
      %2946 = vmatprep.subr.mxu0 0.0
      %2947 = vmatpush1.msra.mxu0 0.0
      %2948 = vmatprep.subr.mxu0 0.0
      %2949 = vmatpush1.msra.mxu0 0.0
      %2950 = vmatprep.subr.mxu0 0.0
      %2951 = vmatpush1.msra.mxu0 0.0
      %2952 = vmatprep.subr.mxu0 0.0
      %2953 = vmatpush1.msra.mxu0 0.0
      %2954 = vmatprep.subr.mxu0 0.0
      %2955 = vmatpush1.msra.mxu0 0.0
      %2956 = vmatprep.subr.mxu0 0.0
      %2957 = vmatpush1.msra.mxu0 0.0
      %2958 = vmatprep.subr.mxu0 0.0
      %2959 = vmatpush1.msra.mxu0 0.0
      %2960 = vmatprep.subr.mxu0 0.0
      %2961 = vmatpush1.msra.mxu0 0.0
      %2962 = vmatprep.subr.mxu0 0.0
      %2963 = vmatpush1.msra.mxu0 0.0
      %2964 = vmatprep.subr.mxu0 0.0
      %2965 = vmatpush1.msra.mxu0 0.0
      %2966 = vmatprep.mubr.f32.mxu0 0.0
      %2967 = vmatmul.mubr.f32.gmra.mrb[0].mxu0 %v2829
      %v2968 = vpop.f32.mrb[0].mxu0
      %v2969 = vadd.f32 %v2826, %v2968
      %v2970 = vpop.f32.mrb[0].mxu0
      %v2971 = vadd.f32 %v2826, %v2970
      %2972 = vdwg.mxu0
      %v2973 = vadd.f32 %v2898, %v2608
      %v2974 = vadd.f32 %v2900, %v2610
      %v2975 = vadd.f32 %v2969, %v2685
      %v2976 = vadd.f32 %v2971, %v2687
      %v2977 = vmax.f32 %v2973, 0.0
      %v2978 = vmax.f32 %v2974, 0.0
      %v2979 = vmax.f32 %v2975, 0.0
      %v2980 = vmax.f32 %v2976, 0.0
      %2981 = vst [vmem:[%s467] sm:$0xff] %v2977
      %2982 = vst [vmem:[%s467 + $0x8] sm:$0xff] %v2978
      %2983 = vst [vmem:[%s467 + $0x10] sm:$0xff] %v2979
      %2984 = vst [vmem:[%s467 + $0x18] sm:$0xff] %v2980
      %p2985 = scmp.lt.s32.totalorder %s25, 1
      %s2986 = scalar_select %p2985, %s25, 1
      %s2987 = smul.addr %s2986, 4
      %s2988 = smul.addr %s2987, 8
      %s2989 = scalar_lea.vmem %s14, %s2988
      // Predicated region
      $region77: #{spresnet_forward.1} parent=75 // pred_check
        %p2990 = pneg %p342
      $region78: #{spresnet_forward.1} parent=75 // pred_check_branch
        %2992 = sbr.rel (%p2990) target = $region80
      $region79: #{spresnet_forward.1} parent=75 // pred_region
        _
      $region80: #{spresnet_forward.1} parent=75 // pred_fallthru
        _
    $region76: #{spresnet_forward.1} parent=5 // pred_fallthru
      _
    %p2993 = scmp.le.s32.totalorder 2, %s20
    // Predicated region
    $region81: #{spresnet_forward.1} parent=5 // pred_check
      %p2994 = pneg %p2993
    $region82: #{spresnet_forward.1} parent=5 // pred_check_branch
      %2996 = sbr.rel (%p2994) target = $region84
    $region83: #{spresnet_forward.1} parent=5 // pred_region
      %s2997 = ssub.s32 %s20, 2
      // Predicated region
      $region85: #{spresnet_forward.1} parent=83 // pred_check
        %p2998 = pneg %p348
      $region86: #{spresnet_forward.1} parent=83 // pred_check_branch
        %3000 = sbr.rel (%p2998) target = $region88
      $region87: #{spresnet_forward.1} parent=83 // pred_region
        %p3001 = scmp.lt.s32.totalorder %s26, 1
        %s3002 = scalar_select %p3001, %s26, 1
        %s3003 = smul.addr %s3002, 4
        %s3004 = smul.addr %s3003, 8
        %s3005 = scalar_lea.vmem %s14, %s3004
      $region88: #{spresnet_forward.1} parent=83 // pred_fallthru
        _
    $region84: #{spresnet_forward.1} parent=5 // pred_fallthru
      _
  $region6: #{spresnet_forward.1} parent=0 // loop_footer
    %s24 = sadd.s32 1, %s20
  $region7: #{spresnet_forward.1} parent=0 // loop_footer_branch
    %19 = sbr.rel target = $region3
  $region8: #{spresnet_forward.1} parent=0 // loop_exit
    _

</llo_original>
